<compile_context>
chip_gen: v7x
topology: tpu7x:2x2x1
jax: 0.10.0
libtpu: 0.0.40
codegen_flags: <defaults>
</compile_context>

<pallas_src>
import functools
import math

import jax
import jax.numpy as jnp
from jax.experimental import pallas as pl
from jax.experimental.pallas import tpu as pltpu


LN_EPS = 1e-5
_BUFFERED_WEIGHTS = True  # flipped off once if this jax rejects pl.Buffered(1)


# ----------------------------------------------------------------------------
# Small helpers
# ----------------------------------------------------------------------------
def _ln_f32(x, g, b):
    # x: (N, D) f32, g/b: (1, D) f32
    mu = jnp.mean(x, axis=-1, keepdims=True)
    var = jnp.mean((x - mu) ** 2, axis=-1, keepdims=True)
    return (x - mu) * jax.lax.rsqrt(var + LN_EPS) * g + b


def _const_spec(shape, single_buffer):
    """Constant block index -> operand stays resident in VMEM across grid steps.
    single_buffer=True additionally drops the (useless) second pipeline buffer."""
    idx = lambda *_: (0,) * len(shape)
    if single_buffer:
        try:
            return pl.BlockSpec(shape, idx, pipeline_mode=pl.Buffered(1))
        except (TypeError, AttributeError):   # jax without BlockSpec(pipeline_mode=...)
            pass
    return pl.BlockSpec(shape, idx)


def _call_resident(build):
    """build(single_buffer) -> result.  Retries without single-buffered weights if
    this jax rejects pl.Buffered(1) at lowering time."""
    global _BUFFERED_WEIGHTS
    if _BUFFERED_WEIGHTS:
        try:
            return build(True)
        except Exception:
            _BUFFERED_WEIGHTS = False
    return build(False)


def _compiler_params(semantics, vmem_need_bytes):
    # Floor at 32 MiB (>= default scoped limit everywhere), 2x headroom, cap below
    # v5e/v6e physical VMEM; shapes exceeding v7x's 64 MiB need further tiling anyway.
    limit = int(min(max(2 * vmem_need_bytes, 32 * 1024 * 1024), 100 * 1024 * 1024))
    return pltpu.CompilerParams(dimension_semantics=semantics,
                                vmem_limit_bytes=limit)


def _pick_batch_block(B, T, S):
    """Number of batch elements stacked per attention grid step.

    Stack batches so the projection GEMMs see ~128-256 M rows, keep the block's
    second-to-last dim 8-aligned (BlockSpec constraint), and prefer >=2 grid
    programs (v7x megacore) when that does not starve the MXU of M rows."""
    valid = [d for d in range(1, B + 1)
             if B % d == 0 and (d == B or ((d * T) % 8 == 0 and (d * S) % 8 == 0))]
    fitting = [d for d in valid if d * max(T, S) <= 256]
    bb = max(fitting) if fitting else min(valid)
    if B // bb < 2:
        alt = [d for d in fitting if B // d >= 2 and d * T >= 128]
        if alt:
            bb = max(alt)
    return bb


def _pick_row_tile(n):
    # Prefer 512/256-row tiles (v6e/v7x MXU is 256-wide; 512 rows ~ HBM roofline).
    for c in (512, 256, 128, 64, 32, 16, 8):
        if n % c == 0:
            return c
    return n


def _pick_hidden_tile(f):
    if f <= 512:
        return f
    for c in (512, 256, 128):
        if f % c == 0:
            return c
    return f


# ----------------------------------------------------------------------------
# Fused attention block kernel:
#   LN -> (+pos) -> QKV proj -> per-(batch,head) SDPA -> out-proj -> +residual
# One stacked-batch block (B_blk*T rows) per grid step.
# ----------------------------------------------------------------------------
def _attn_block_kernel(*refs, nhead, n_batch, t_len, s_len, cross):
    if cross:
        (x_ref, qpos_ref, mem_ref, mpos_ref,
         lng_ref, lnb_ref,
         wq_ref, bq_ref, wk_ref, bk_ref, wv_ref, bv_ref, wo_ref, bo_ref,
         o_ref, slab_ref) = refs
    else:
        (x_ref, qpos_ref,
         lng_ref, lnb_ref,
         wqk_ref, bqk_ref, wv_ref, bv_ref, wo_ref, bo_ref,
         o_ref, slab_ref) = refs

    x = x_ref[...].astype(jnp.float32)                       # (B_blk*T, D) residual
    D = x.shape[-1]
    hd = D // nhead
    scale = 1.0 / math.sqrt(hd)
    mxu = wv_ref.dtype                                       # bf16 MXU operand dtype

    ln = _ln_f32(x, lng_ref[...].astype(jnp.float32), lnb_ref[...].astype(jnp.float32))
    q_in = ln + qpos_ref[...].astype(jnp.float32)            # with_pos_embed(tgt2, qpos)

    if cross:
        mem = mem_ref[...].astype(jnp.float32)                # (B_blk*S, D)
        k_in = mem + mpos_ref[...].astype(jnp.float32)        # with_pos_embed(mem, pos)
        q = (jnp.dot(q_in.astype(mxu), wq_ref[...],
                     preferred_element_type=jnp.float32)
             + bq_ref[...].astype(jnp.float32)) * scale
        k = (jnp.dot(k_in.astype(mxu), wk_ref[...],
                     preferred_element_type=jnp.float32)
             + bk_ref[...].astype(jnp.float32))
        v = (jnp.dot(mem.astype(mxu), wv_ref[...],
                     preferred_element_type=jnp.float32)
             + bv_ref[...].astype(jnp.float32))
    else:
        # q_in == k_in for self-attention: one fused [Wq|Wk] projection GEMM.
        qk = (jnp.dot(q_in.astype(mxu), wqk_ref[...],
                      preferred_element_type=jnp.float32)
              + bqk_ref[...].astype(jnp.float32))
        q = qk[:, :D] * scale
        k = qk[:, D:]
        v = (jnp.dot(ln.astype(mxu), wv_ref[...],
                     preferred_element_type=jnp.float32)
             + bv_ref[...].astype(jnp.float32))

    # Per-(batch, head) SDPA; softmax math in f32, MXU operands bf16.
    # Head outputs land in a VMEM slab so the out-projection is ONE full-K GEMM.
    # TODO(synk): for large T*S tile the query axis with online softmax; for nhead>=8
    # switch to a head-major fori_loop(unroll=True) to bound vreg live ranges.
    dims = (((1,), (1,)), ((), ()))                           # q @ k^T, no batch dims
    for b in range(n_batch):
        qs = slice(b * t_len, (b + 1) * t_len)
        ks = slice(b * s_len, (b + 1) * s_len)
        for h in range(nhead):
            cs = slice(h * hd, (h + 1) * hd)
            s = jax.lax.dot_general(q[qs, cs].astype(mxu), k[ks, cs].astype(mxu),
                                    dims, preferred_element_type=jnp.float32)  # (T, S)
            m = jnp.max(s, axis=-1, keepdims=True)
            p = jnp.exp(s - m)
            p = p * pl.reciprocal(jnp.sum(p, axis=-1, keepdims=True), approx=True)
            slab_ref[qs, cs] = jnp.dot(p.astype(mxu), v[ks, cs].astype(mxu),
                                       preferred_element_type=jnp.float32)      # (T, hd)

    attn = slab_ref[...].astype(mxu)                          # (B_blk*T, D)
    out = (jnp.dot(attn, wo_ref[...], preferred_element_type=jnp.float32)
           + bo_ref[...].astype(jnp.float32) + x)             # out-proj + bias + residual
    o_ref[...] = out.astype(o_ref.dtype)


# ----------------------------------------------------------------------------
# Fused FFN block kernel: LN -> linear1 + ReLU -> linear2 -> +residual
# Hidden dim F tiled on grid axis 1 ("arbitrary") with a VMEM f32 accumulator.
# ----------------------------------------------------------------------------
def _ffn_block_kernel(x_ref, lng_ref, lnb_ref, w1_ref, b1_ref, w2_ref, b2_ref,
                      o_ref, ln_sc, acc_sc):
    k = pl.program_id(1)

    @pl.when(k == 0)
    def _():
        x = x_ref[...].astype(jnp.float32)                    # (tm, D)
        ln = _ln_f32(x, lng_ref[...].astype(jnp.float32),
                     lnb_ref[...].astype(jnp.float32))
        ln_sc[...] = ln.astype(ln_sc.dtype)                   # bf16 stash (MXU operand)
        acc_sc[...] = x + b2_ref[...].astype(jnp.float32)     # residual + linear2 bias

    h = (jnp.dot(ln_sc[...], w1_ref[...], preferred_element_type=jnp.float32)
         + b1_ref[...].astype(jnp.float32))                   # (tm, tf)
    h = jnp.maximum(h, 0.0)                                   # ReLU
    acc_sc[...] += jnp.dot(h.astype(w2_ref.dtype), w2_ref[...],
                           preferred_element_type=jnp.float32)

    @pl.when(k == pl.num_programs(1) - 1)
    def _():
        o_ref[...] = acc_sc[...].astype(o_ref.dtype)


# ----------------------------------------------------------------------------
# pallas_call wrappers (inputs are batch-first row slabs: (B*L, D))
# ----------------------------------------------------------------------------
def self_attention_block(x2d, qpos2d, ap, ln_g, ln_b, nhead, n_batch, t_len, b_blk):
    N, D = x2d.shape
    R = b_blk * t_len
    wqk = jnp.concatenate([ap["wq"], ap["wk"]], axis=1)       # (D, 2D) bf16
    bqk = jnp.concatenate([ap["bq"], ap["bk"]], axis=1)       # (1, 2D) f32
    rows = pl.BlockSpec((R, D), lambda i: (i, 0))
    kernel = functools.partial(_attn_block_kernel, nhead=nhead,
                               n_batch=b_blk, t_len=t_len, s_len=t_len, cross=False)
    # Coarse per-step working set: ~10 f32 (R,D) slabs + bf16 weights.
    vmem_need = 10 * R * D * 4 + (4 * D * D) * 2

    def build(single_buffer):
        return pl.pallas_call(
            kernel,
            grid=(n_batch // b_blk,),
            in_specs=[
                rows, rows,                                   # x, query_pos
                _const_spec((1, D), single_buffer),           # LN gamma
                _const_spec((1, D), single_buffer),           # LN beta
                _const_spec((D, 2 * D), single_buffer),       # [Wq | Wk]
                _const_spec((1, 2 * D), single_buffer),       # [bq | bk]
                _const_spec((D, D), single_buffer),           # Wv
                _const_spec((1, D), single_buffer),           # bv
                _const_spec((D, D), single_buffer),           # Wo
                _const_spec((1, D), single_buffer),           # bo
            ],
            out_specs=rows,
            out_shape=jax.ShapeDtypeStruct((N, D), x2d.dtype),
            scratch_shapes=[pltpu.VMEM((R, D), jnp.float32)],  # head-output slab
            compiler_params=_compiler_params(("parallel",), vmem_need),
        )(x2d, qpos2d, ln_g, ln_b, wqk, bqk,
          ap["wv"], ap["bv"], ap["wo"], ap["bo"])

    return _call_resident(build)


def cross_attention_block(x2d, qpos2d, mem2d, pos2d, ap, ln_g, ln_b, nhead,
                          n_batch, t_len, s_len, b_blk):
    N, D = x2d.shape
    Rq = b_blk * t_len
    Rk = b_blk * s_len
    qrows = pl.BlockSpec((Rq, D), lambda i: (i, 0))
    krows = pl.BlockSpec((Rk, D), lambda i: (i, 0))
    kernel = functools.partial(_attn_block_kernel, nhead=nhead,
                               n_batch=b_blk, t_len=t_len, s_len=s_len, cross=True)
    vmem_need = (7 * Rq + 6 * Rk) * D * 4 + (4 * D * D) * 2

    def build(single_buffer):
        return pl.pallas_call(
            kernel,
            grid=(n_batch // b_blk,),
            in_specs=[
                qrows, qrows,                                 # x, query_pos
                krows, krows,                                 # memory, pos
                _const_spec((1, D), single_buffer),           # LN gamma
                _const_spec((1, D), single_buffer),           # LN beta
                _const_spec((D, D), single_buffer),           # Wq
                _const_spec((1, D), single_buffer),           # bq
                _const_spec((D, D), single_buffer),           # Wk
                _const_spec((1, D), single_buffer),           # bk
                _const_spec((D, D), single_buffer),           # Wv
                _const_spec((1, D), single_buffer),           # bv
                _const_spec((D, D), single_buffer),           # Wo
                _const_spec((1, D), single_buffer),           # bo
            ],
            out_specs=qrows,
            out_shape=jax.ShapeDtypeStruct((N, D), x2d.dtype),
            scratch_shapes=[pltpu.VMEM((Rq, D), jnp.float32)],
            compiler_params=_compiler_params(("parallel",), vmem_need),
        )(x2d, qpos2d, mem2d, pos2d, ln_g, ln_b,
          ap["wq"], ap["bq"], ap["wk"], ap["bk"],
          ap["wv"], ap["bv"], ap["wo"], ap["bo"])

    return _call_resident(build)


def ffn_block(x2d, ln_g, ln_b, w1, b1, w2, b2):
    N, D = x2d.shape
    F = w1.shape[1]
    tm = _pick_row_tile(N)
    tf = _pick_hidden_tile(F)
    vmem_need = (6 * tm * D + 2 * tm * tf) * 4 + 2 * (D * tf + tf * D) * 2 * 2

    def build(single_buffer):
        return pl.pallas_call(
            _ffn_block_kernel,
            grid=(N // tm, F // tf),
            in_specs=[
                pl.BlockSpec((tm, D), lambda i, k: (i, 0)),   # x rows (resident over k)
                _const_spec((1, D), single_buffer),           # LN gamma
                _const_spec((1, D), single_buffer),           # LN beta
                pl.BlockSpec((D, tf), lambda i, k: (0, k)),   # W1 column block
                pl.BlockSpec((1, tf), lambda i, k: (0, k)),   # b1 block
                pl.BlockSpec((tf, D), lambda i, k: (k, 0)),   # W2 row block
                _const_spec((1, D), single_buffer),           # b2
            ],
            out_specs=pl.BlockSpec((tm, D), lambda i, k: (i, 0)),
            out_shape=jax.ShapeDtypeStruct((N, D), x2d.dtype),
            scratch_shapes=[pltpu.VMEM((tm, D), jnp.bfloat16),  # LN(x) stash
                            pltpu.VMEM((tm, D), jnp.float32)],  # residual+FFN accumulator
            compiler_params=_compiler_params(("parallel", "arbitrary"), vmem_need),
        )(x2d, ln_g, ln_b, w1, b1, w2, b2)

    return _call_resident(build)


# ----------------------------------------------------------------------------
# Decoder layer forward (pre-norm variant from the reference module)
# ----------------------------------------------------------------------------
def decoder_layer_forward(tgt, memory, params, pos=None, query_pos=None):
    nhead = params["nhead"]
    T, B, D = tgt.shape
    S = memory.shape[0]
    if query_pos is None:
        query_pos = jnp.zeros_like(tgt)
    if pos is None:
        pos = jnp.zeros_like(memory)

    # Single boundary transpose to batch-first + flatten: every Pallas block below is
    # a contiguous, lane-dense (rows, D) slab.
    def rows(a):
        L = a.shape[0]
        return jnp.transpose(a, (1, 0, 2)).reshape(B * L, D)

    x = rows(tgt)
    qp = rows(query_pos)
    mem = rows(memory)
    mp = rows(pos)

    b_blk = _pick_batch_block(B, T, S)

    # self-attention block (dropout1 = identity)
    x = self_attention_block(x, qp, params["self_attn"],
                             params["norm1_w"], params["norm1_b"],
                             nhead, B, T, b_blk)
    # cross-attention block (dropout2 = identity)
    x = cross_attention_block(x, qp, mem, mp, params["cross_attn"],
                              params["norm2_w"], params["norm2_b"],
                              nhead, B, T, S, b_blk)
    # feed-forward block (dropout / dropout3 = identity)
    x = ffn_block(x, params["norm3_w"], params["norm3_b"],
                  params["ffn_w1"], params["ffn_b1"],
                  params["ffn_w2"], params["ffn_b2"])
    return jnp.transpose(x.reshape(B, T, D), (1, 0, 2))


# ----------------------------------------------------------------------------
# Pure-JAX reference (f32 math, bf16 weights upcast) for a sanity check
# ----------------------------------------------------------------------------
def _ref_mha(query, key, value, p, nhead):
    T, B, D = query.shape
    S = key.shape[0]
    hd = D // nhead
    scale = 1.0 / math.sqrt(hd)
    wq = p["wq"].astype(jnp.float32); wk = p["wk"].astype(jnp.float32)
    wv = p["wv"].astype(jnp.float32); wo = p["wo"].astype(jnp.float32)
    q = query.reshape(T * B, D) @ wq + p["bq"]
    k = key.reshape(S * B, D) @ wk + p["bk"]
    v = value.reshape(S * B, D) @ wv + p["bv"]
    q = q.reshape(T, B * nhead, hd).transpose(1, 0, 2)
    k = k.reshape(S, B * nhead, hd).transpose(1, 0, 2)
    v = v.reshape(S, B * nhead, hd).transpose(1, 0, 2)
    s = jnp.einsum("bth,bsh->bts", q, k) * scale
    a = jax.nn.softmax(s, axis=-1)
    o = jnp.einsum("bts,bsh->bth", a, v)
    o = o.transpose(1, 0, 2).reshape(T * B, D) @ wo + p["bo"]
    return o.reshape(T, B, D)


def _ref_forward(tgt, memory, params, pos, query_pos):
    T, B, D = tgt.shape

    def ln(x, g, b):
        mu = jnp.mean(x, axis=-1, keepdims=True)
        var = jnp.mean((x - mu) ** 2, axis=-1, keepdims=True)
        return (x - mu) * jax.lax.rsqrt(var + LN_EPS) * g + b

    tgt2 = ln(tgt.reshape(T * B, D), params["norm1_w"], params["norm1_b"]).reshape(T, B, D)
    qk = tgt2 + query_pos
    tgt = tgt + _ref_mha(qk, qk, tgt2, params["self_attn"], params["nhead"])
    tgt2 = ln(tgt.reshape(T * B, D), params["norm2_w"], params["norm2_b"]).reshape(T, B, D)
    tgt = tgt + _ref_mha(tgt2 + query_pos, memory + pos, memory,
                         params["cross_attn"], params["nhead"])
    tgt2 = ln(tgt.reshape(T * B, D), params["norm3_w"], params["norm3_b"])
    w1 = params["ffn_w1"].astype(jnp.float32)
    w2 = params["ffn_w2"].astype(jnp.float32)
    h = jnp.maximum(tgt2 @ w1 + params["ffn_b1"], 0.0)
    ff = h @ w2 + params["ffn_b2"]
    return tgt + ff.reshape(T, B, D)


# ----------------------------------------------------------------------------
# Deterministic parameter init (weight matrices bf16 = MXU operands, biases/LN f32)
# ----------------------------------------------------------------------------
def make_params(key, d_model, nhead, dim_ff):
    keys = jax.random.split(key, 8)

    def attn_params(k0, k1):
        w_in = jax.random.normal(k0, (3 * d_model, d_model), jnp.float32) * 0.02
        wo = jax.random.normal(k1, (d_model, d_model), jnp.float32) * 0.02
        wq, wk, wv = jnp.split(w_in, 3, axis=0)
        bf16 = jnp.bfloat16
        return {
            "wq": wq.T.astype(bf16), "wk": wk.T.astype(bf16), "wv": wv.T.astype(bf16),
            "wo": wo.T.astype(bf16),                          # (D_in, D_out) layout
            "bq": jnp.zeros((1, d_model), jnp.float32),
            "bk": jnp.zeros((1, d_model), jnp.float32),
            "bv": jnp.zeros((1, d_model), jnp.float32),
            "bo": jnp.zeros((1, d_model), jnp.float32),
        }

    return {
        "nhead": nhead,
        "self_attn": attn_params(keys[0], keys[1]),
        "cross_attn": attn_params(keys[2], keys[3]),
        "norm1_w": jnp.ones((1, d_model), jnp.float32),
        "norm1_b": jnp.zeros((1, d_model), jnp.float32),
        "norm2_w": jnp.ones((1, d_model), jnp.float32),
        "norm2_b": jnp.zeros((1, d_model), jnp.float32),
        "norm3_w": jnp.ones((1, d_model), jnp.float32),
        "norm3_b": jnp.zeros((1, d_model), jnp.float32),
        "ffn_w1": (jax.random.normal(keys[4], (d_model, dim_ff), jnp.float32) * 0.02
                   ).astype(jnp.bfloat16),
        "ffn_b1": jnp.zeros((1, dim_ff), jnp.float32),
        "ffn_w2": (jax.random.normal(keys[5], (dim_ff, d_model), jnp.float32) * 0.02
                   ).astype(jnp.bfloat16),
        "ffn_b2": jnp.zeros((1, d_model), jnp.float32),
    }


if __name__ == "__main__":
    d_model, nhead, dim_ff = 32, 4, 64
    T, S, B = 8, 8, 2

    key = jax.random.PRNGKey(0)
    k_tgt, k_mem, k_pos, k_qpos, k_params = jax.random.split(key, 5)

    tgt = jax.random.normal(k_tgt, (T, B, d_model), jnp.float32)
    memory = jax.random.normal(k_mem, (S, B, d_model), jnp.float32)
    pos = jax.random.normal(k_pos, (S, B, d_model), jnp.float32)
    query_pos = jax.random.normal(k_qpos, (T, B, d_model), jnp.float32)
    params = make_params(k_params, d_model, nhead, dim_ff)

    out = decoder_layer_forward(tgt, memory, params, pos=pos, query_pos=query_pos)
    out = jax.block_until_ready(out)

    ref = _ref_forward(tgt, memory, params, pos, query_pos)
    assert out.shape == (T, B, d_model)
    assert jnp.allclose(out, ref, rtol=2e-2, atol=2e-2), "mismatch vs reference"

    print("KERNEL_OK")
</pallas_src>

<mosaic_0001>
module attributes {stable_mosaic.version = 11 : i64} {
  func.func @_attn_block_kernel(%arg0: i32, %arg1: memref<16x32xf32, #tpu.memory_space<vmem>>, %arg2: memref<16x32xf32, #tpu.memory_space<vmem>>, %arg3: memref<1x32xf32, #tpu.memory_space<vmem>>, %arg4: memref<1x32xf32, #tpu.memory_space<vmem>>, %arg5: memref<32x64xbf16, #tpu.memory_space<vmem>>, %arg6: memref<1x64xf32, #tpu.memory_space<vmem>>, %arg7: memref<32x32xbf16, #tpu.memory_space<vmem>>, %arg8: memref<1x32xf32, #tpu.memory_space<vmem>>, %arg9: memref<32x32xbf16, #tpu.memory_space<vmem>>, %arg10: memref<1x32xf32, #tpu.memory_space<vmem>>, %arg11: memref<16x32xf32, #tpu.memory_space<vmem>>, %arg12: memref<16x32xf32, #tpu.memory_space<vmem>>) attributes {dimension_semantics = [#tpu.dimension_semantics<parallel>], iteration_bounds = array<i64: 1>, scalar_prefetch = 0 : i64, scratch_operands = 1 : i64, tpu.core_type = #tpu.core_type<tc>, window_params = [{transform_indices = @transform_0, window_bounds = array<i64: 16, 32>}, {transform_indices = @transform_1, window_bounds = array<i64: 16, 32>}, {pipeline_mode = #tpu.pipeline_mode<synchronous>, transform_indices = @transform_2, window_bounds = array<i64: 1, 32>}, {pipeline_mode = #tpu.pipeline_mode<synchronous>, transform_indices = @transform_3, window_bounds = array<i64: 1, 32>}, {pipeline_mode = #tpu.pipeline_mode<synchronous>, transform_indices = @transform_4, window_bounds = array<i64: 32, 64>}, {pipeline_mode = #tpu.pipeline_mode<synchronous>, transform_indices = @transform_5, window_bounds = array<i64: 1, 64>}, {pipeline_mode = #tpu.pipeline_mode<synchronous>, transform_indices = @transform_6, window_bounds = array<i64: 32, 32>}, {pipeline_mode = #tpu.pipeline_mode<synchronous>, transform_indices = @transform_7, window_bounds = array<i64: 1, 32>}, {pipeline_mode = #tpu.pipeline_mode<synchronous>, transform_indices = @transform_8, window_bounds = array<i64: 32, 32>}, {pipeline_mode = #tpu.pipeline_mode<synchronous>, transform_indices = @transform_9, window_bounds = array<i64: 1, 32>}, {transform_indices = @transform_10, window_bounds = array<i64: 16, 32>}]} {
    %c0 = arith.constant 0 : index
    %c0_0 = arith.constant 0 : index
    %0 = vector.load %arg1[%c0, %c0_0] : memref<16x32xf32, #tpu.memory_space<vmem>>, vector<16x32xf32>
    %c0_1 = arith.constant 0 : index
    %c0_2 = arith.constant 0 : index
    %1 = vector.load %arg3[%c0_1, %c0_2] : memref<1x32xf32, #tpu.memory_space<vmem>>, vector<1x32xf32>
    %c0_3 = arith.constant 0 : index
    %c0_4 = arith.constant 0 : index
    %2 = vector.load %arg4[%c0_3, %c0_4] : memref<1x32xf32, #tpu.memory_space<vmem>>, vector<1x32xf32>
    %cst = arith.constant dense<0.000000e+00> : vector<16xf32>
    %3 = vector.multi_reduction <add>, %0, %cst [1] : vector<16x32xf32> to vector<16xf32>
    %4 = vector.shape_cast %3 : vector<16xf32> to vector<16x1xf32>
    %cst_5 = arith.constant 3.200000e+01 : f32
    %5 = vector.broadcast %cst_5 : f32 to vector<16x1xf32>
    %6 = arith.divf %4, %5 : vector<16x1xf32>
    %7 = vector.broadcast %6 : vector<16x1xf32> to vector<16x32xf32>
    %8 = arith.subf %0, %7 : vector<16x32xf32>
    %9 = arith.mulf %8, %8 : vector<16x32xf32>
    %cst_6 = arith.constant dense<0.000000e+00> : vector<16xf32>
    %10 = vector.multi_reduction <add>, %9, %cst_6 [1] : vector<16x32xf32> to vector<16xf32>
    %11 = vector.shape_cast %10 : vector<16xf32> to vector<16x1xf32>
    %cst_7 = arith.constant 3.200000e+01 : f32
    %12 = vector.broadcast %cst_7 : f32 to vector<16x1xf32>
    %13 = arith.divf %11, %12 : vector<16x1xf32>
    %14 = vector.broadcast %6 : vector<16x1xf32> to vector<16x32xf32>
    %15 = arith.subf %0, %14 : vector<16x32xf32>
    %cst_8 = arith.constant 9.99999974E-6 : f32
    %16 = vector.broadcast %cst_8 : f32 to vector<16x1xf32>
    %17 = arith.addf %13, %16 : vector<16x1xf32>
    %18 = math.rsqrt %17 : vector<16x1xf32>
    %19 = vector.broadcast %18 : vector<16x1xf32> to vector<16x32xf32>
    %20 = arith.mulf %15, %19 : vector<16x32xf32>
    %21 = vector.broadcast %1 : vector<1x32xf32> to vector<16x32xf32>
    %22 = arith.mulf %20, %21 : vector<16x32xf32>
    %23 = vector.broadcast %2 : vector<1x32xf32> to vector<16x32xf32>
    %24 = arith.addf %22, %23 : vector<16x32xf32>
    %c0_9 = arith.constant 0 : index
    %c0_10 = arith.constant 0 : index
    %25 = vector.load %arg2[%c0_9, %c0_10] : memref<16x32xf32, #tpu.memory_space<vmem>>, vector<16x32xf32>
    %26 = arith.addf %24, %25 : vector<16x32xf32>
    %27 = arith.truncf %26 : vector<16x32xf32> to vector<16x32xbf16>
    %c0_11 = arith.constant 0 : index
    %c0_12 = arith.constant 0 : index
    %28 = vector.load %arg5[%c0_11, %c0_12] : memref<32x64xbf16, #tpu.memory_space<vmem>>, vector<32x64xbf16>
    %cst_13 = arith.constant dense<0.000000e+00> : vector<16x64xf32>
    %29 = tpu.matmul %27, %28, %cst_13 {dimension_numbers = #tpu.dot_dimension_numbers<[1], [0], [0], [1], [0, 0, 1, 1], [], []>} : vector<16x32xbf16>, vector<32x64xbf16>, vector<16x64xf32> -> vector<16x64xf32>
    %c0_14 = arith.constant 0 : index
    %c0_15 = arith.constant 0 : index
    %30 = vector.load %arg6[%c0_14, %c0_15] : memref<1x64xf32, #tpu.memory_space<vmem>>, vector<1x64xf32>
    %31 = vector.broadcast %30 : vector<1x64xf32> to vector<16x64xf32>
    %32 = arith.addf %29, %31 : vector<16x64xf32>
    %33 = vector.extract_strided_slice %32 {offsets = [0, 0], sizes = [16, 32], strides = [1, 1]} : vector<16x64xf32> to vector<16x32xf32>
    %cst_16 = arith.constant 0.353553385 : f32
    %34 = vector.broadcast %cst_16 : f32 to vector<16x32xf32>
    %35 = arith.mulf %33, %34 : vector<16x32xf32>
    %36 = vector.extract_strided_slice %32 {offsets = [0, 32], sizes = [16, 32], strides = [1, 1]} : vector<16x64xf32> to vector<16x32xf32>
    %37 = arith.truncf %24 : vector<16x32xf32> to vector<16x32xbf16>
    %c0_17 = arith.constant 0 : index
    %c0_18 = arith.constant 0 : index
    %38 = vector.load %arg7[%c0_17, %c0_18] : memref<32x32xbf16, #tpu.memory_space<vmem>>, vector<32x32xbf16>
    %cst_19 = arith.constant dense<0.000000e+00> : vector<16x32xf32>
    %39 = tpu.matmul %37, %38, %cst_19 {dimension_numbers = #tpu.dot_dimension_numbers<[1], [0], [0], [1], [0, 0, 1, 1], [], []>} : vector<16x32xbf16>, vector<32x32xbf16>, vector<16x32xf32> -> vector<16x32xf32>
    %c0_20 = arith.constant 0 : index
    %c0_21 = arith.constant 0 : index
    %40 = vector.load %arg8[%c0_20, %c0_21] : memref<1x32xf32, #tpu.memory_space<vmem>>, vector<1x32xf32>
    %41 = vector.broadcast %40 : vector<1x32xf32> to vector<16x32xf32>
    %42 = arith.addf %39, %41 : vector<16x32xf32>
    %43 = vector.extract_strided_slice %35 {offsets = [0, 0], sizes = [8, 8], strides = [1, 1]} : vector<16x32xf32> to vector<8x8xf32>
    %44 = arith.truncf %43 : vector<8x8xf32> to vector<8x8xbf16>
    %45 = vector.extract_strided_slice %36 {offsets = [0, 0], sizes = [8, 8], strides = [1, 1]} : vector<16x32xf32> to vector<8x8xf32>
    %46 = arith.truncf %45 : vector<8x8xf32> to vector<8x8xbf16>
    %cst_22 = arith.constant dense<0.000000e+00> : vector<8x8xf32>
    %47 = tpu.matmul %44, %46, %cst_22 {dimension_numbers = #tpu.dot_dimension_numbers<[1], [1], [0], [0], [0, 0, 1, 0], [], []>} : vector<8x8xbf16>, vector<8x8xbf16>, vector<8x8xf32> -> vector<8x8xf32>
    %cst_23 = arith.constant dense<0xFF800000> : vector<8xf32>
    %48 = vector.multi_reduction <maximumf>, %47, %cst_23 [1] : vector<8x8xf32> to vector<8xf32>
    %49 = vector.shape_cast %48 : vector<8xf32> to vector<8x1xf32>
    %50 = vector.broadcast %49 : vector<8x1xf32> to vector<8x8xf32>
    %51 = arith.subf %47, %50 : vector<8x8xf32>
    %52 = math.exp %51 : vector<8x8xf32>
    %cst_24 = arith.constant dense<0.000000e+00> : vector<8xf32>
    %53 = vector.multi_reduction <add>, %52, %cst_24 [1] : vector<8x8xf32> to vector<8xf32>
    %54 = vector.shape_cast %53 : vector<8xf32> to vector<8x1xf32>
    %55 = tpu.reciprocal %54 {approx = true} : vector<8x1xf32> -> vector<8x1xf32>
    %56 = vector.broadcast %55 : vector<8x1xf32> to vector<8x8xf32>
    %57 = arith.mulf %52, %56 : vector<8x8xf32>
    %58 = arith.truncf %57 : vector<8x8xf32> to vector<8x8xbf16>
    %59 = vector.extract_strided_slice %42 {offsets = [0, 0], sizes = [8, 8], strides = [1, 1]} : vector<16x32xf32> to vector<8x8xf32>
    %60 = arith.truncf %59 : vector<8x8xf32> to vector<8x8xbf16>
    %cst_25 = arith.constant dense<0.000000e+00> : vector<8x8xf32>
    %61 = tpu.matmul %58, %60, %cst_25 {dimension_numbers = #tpu.dot_dimension_numbers<[1], [0], [0], [1], [0, 0, 1, 1], [], []>} : vector<8x8xbf16>, vector<8x8xbf16>, vector<8x8xf32> -> vector<8x8xf32>
    %c0_26 = arith.constant 0 : index
    %c0_27 = arith.constant 0 : index
    %62 = vector.load %arg12[%c0_26, %c0_27] : memref<16x32xf32, #tpu.memory_space<vmem>>, vector<8x8xf32>
    tpu.vector_store %arg12[%c0_26, %c0_27], %61 {strides = array<i32>} : memref<16x32xf32, #tpu.memory_space<vmem>>, vector<8x8xf32>,
    %63 = vector.extract_strided_slice %35 {offsets = [0, 8], sizes = [8, 8], strides = [1, 1]} : vector<16x32xf32> to vector<8x8xf32>
    %64 = arith.truncf %63 : vector<8x8xf32> to vector<8x8xbf16>
    %65 = vector.extract_strided_slice %36 {offsets = [0, 8], sizes = [8, 8], strides = [1, 1]} : vector<16x32xf32> to vector<8x8xf32>
    %66 = arith.truncf %65 : vector<8x8xf32> to vector<8x8xbf16>
    %cst_28 = arith.constant dense<0.000000e+00> : vector<8x8xf32>
    %67 = tpu.matmul %64, %66, %cst_28 {dimension_numbers = #tpu.dot_dimension_numbers<[1], [1], [0], [0], [0, 0, 1, 0], [], []>} : vector<8x8xbf16>, vector<8x8xbf16>, vector<8x8xf32> -> vector<8x8xf32>
    %cst_29 = arith.constant dense<0xFF800000> : vector<8xf32>
    %68 = vector.multi_reduction <maximumf>, %67, %cst_29 [1] : vector<8x8xf32> to vector<8xf32>
    %69 = vector.shape_cast %68 : vector<8xf32> to vector<8x1xf32>
    %70 = vector.broadcast %69 : vector<8x1xf32> to vector<8x8xf32>
    %71 = arith.subf %67, %70 : vector<8x8xf32>
    %72 = math.exp %71 : vector<8x8xf32>
    %cst_30 = arith.constant dense<0.000000e+00> : vector<8xf32>
    %73 = vector.multi_reduction <add>, %72, %cst_30 [1] : vector<8x8xf32> to vector<8xf32>
    %74 = vector.shape_cast %73 : vector<8xf32> to vector<8x1xf32>
    %75 = tpu.reciprocal %74 {approx = true} : vector<8x1xf32> -> vector<8x1xf32>
    %76 = vector.broadcast %75 : vector<8x1xf32> to vector<8x8xf32>
    %77 = arith.mulf %72, %76 : vector<8x8xf32>
    %78 = arith.truncf %77 : vector<8x8xf32> to vector<8x8xbf16>
    %79 = vector.extract_strided_slice %42 {offsets = [0, 8], sizes = [8, 8], strides = [1, 1]} : vector<16x32xf32> to vector<8x8xf32>
    %80 = arith.truncf %79 : vector<8x8xf32> to vector<8x8xbf16>
    %cst_31 = arith.constant dense<0.000000e+00> : vector<8x8xf32>
    %81 = tpu.matmul %78, %80, %cst_31 {dimension_numbers = #tpu.dot_dimension_numbers<[1], [0], [0], [1], [0, 0, 1, 1], [], []>} : vector<8x8xbf16>, vector<8x8xbf16>, vector<8x8xf32> -> vector<8x8xf32>
    %c0_32 = arith.constant 0 : index
    %c8 = arith.constant 8 : index
    %82 = vector.load %arg12[%c0_32, %c8] : memref<16x32xf32, #tpu.memory_space<vmem>>, vector<8x8xf32>
    tpu.vector_store %arg12[%c0_32, %c8], %81 {strides = array<i32>} : memref<16x32xf32, #tpu.memory_space<vmem>>, vector<8x8xf32>,
    %83 = vector.extract_strided_slice %35 {offsets = [0, 16], sizes = [8, 8], strides = [1, 1]} : vector<16x32xf32> to vector<8x8xf32>
    %84 = arith.truncf %83 : vector<8x8xf32> to vector<8x8xbf16>
    %85 = vector.extract_strided_slice %36 {offsets = [0, 16], sizes = [8, 8], strides = [1, 1]} : vector<16x32xf32> to vector<8x8xf32>
    %86 = arith.truncf %85 : vector<8x8xf32> to vector<8x8xbf16>
    %cst_33 = arith.constant dense<0.000000e+00> : vector<8x8xf32>
    %87 = tpu.matmul %84, %86, %cst_33 {dimension_numbers = #tpu.dot_dimension_numbers<[1], [1], [0], [0], [0, 0, 1, 0], [], []>} : vector<8x8xbf16>, vector<8x8xbf16>, vector<8x8xf32> -> vector<8x8xf32>
    %cst_34 = arith.constant dense<0xFF800000> : vector<8xf32>
    %88 = vector.multi_reduction <maximumf>, %87, %cst_34 [1] : vector<8x8xf32> to vector<8xf32>
    %89 = vector.shape_cast %88 : vector<8xf32> to vector<8x1xf32>
    %90 = vector.broadcast %89 : vector<8x1xf32> to vector<8x8xf32>
    %91 = arith.subf %87, %90 : vector<8x8xf32>
    %92 = math.exp %91 : vector<8x8xf32>
    %cst_35 = arith.constant dense<0.000000e+00> : vector<8xf32>
    %93 = vector.multi_reduction <add>, %92, %cst_35 [1] : vector<8x8xf32> to vector<8xf32>
    %94 = vector.shape_cast %93 : vector<8xf32> to vector<8x1xf32>
    %95 = tpu.reciprocal %94 {approx = true} : vector<8x1xf32> -> vector<8x1xf32>
    %96 = vector.broadcast %95 : vector<8x1xf32> to vector<8x8xf32>
    %97 = arith.mulf %92, %96 : vector<8x8xf32>
    %98 = arith.truncf %97 : vector<8x8xf32> to vector<8x8xbf16>
    %99 = vector.extract_strided_slice %42 {offsets = [0, 16], sizes = [8, 8], strides = [1, 1]} : vector<16x32xf32> to vector<8x8xf32>
    %100 = arith.truncf %99 : vector<8x8xf32> to vector<8x8xbf16>
    %cst_36 = arith.constant dense<0.000000e+00> : vector<8x8xf32>
    %101 = tpu.matmul %98, %100, %cst_36 {dimension_numbers = #tpu.dot_dimension_numbers<[1], [0], [0], [1], [0, 0, 1, 1], [], []>} : vector<8x8xbf16>, vector<8x8xbf16>, vector<8x8xf32> -> vector<8x8xf32>
    %c0_37 = arith.constant 0 : index
    %c16 = arith.constant 16 : index
    %102 = vector.load %arg12[%c0_37, %c16] : memref<16x32xf32, #tpu.memory_space<vmem>>, vector<8x8xf32>
    tpu.vector_store %arg12[%c0_37, %c16], %101 {strides = array<i32>} : memref<16x32xf32, #tpu.memory_space<vmem>>, vector<8x8xf32>,
    %103 = vector.extract_strided_slice %35 {offsets = [0, 24], sizes = [8, 8], strides = [1, 1]} : vector<16x32xf32> to vector<8x8xf32>
    %104 = arith.truncf %103 : vector<8x8xf32> to vector<8x8xbf16>
    %105 = vector.extract_strided_slice %36 {offsets = [0, 24], sizes = [8, 8], strides = [1, 1]} : vector<16x32xf32> to vector<8x8xf32>
    %106 = arith.truncf %105 : vector<8x8xf32> to vector<8x8xbf16>
    %cst_38 = arith.constant dense<0.000000e+00> : vector<8x8xf32>
    %107 = tpu.matmul %104, %106, %cst_38 {dimension_numbers = #tpu.dot_dimension_numbers<[1], [1], [0], [0], [0, 0, 1, 0], [], []>} : vector<8x8xbf16>, vector<8x8xbf16>, vector<8x8xf32> -> vector<8x8xf32>
    %cst_39 = arith.constant dense<0xFF800000> : vector<8xf32>
    %108 = vector.multi_reduction <maximumf>, %107, %cst_39 [1] : vector<8x8xf32> to vector<8xf32>
    %109 = vector.shape_cast %108 : vector<8xf32> to vector<8x1xf32>
    %110 = vector.broadcast %109 : vector<8x1xf32> to vector<8x8xf32>
    %111 = arith.subf %107, %110 : vector<8x8xf32>
    %112 = math.exp %111 : vector<8x8xf32>
    %cst_40 = arith.constant dense<0.000000e+00> : vector<8xf32>
    %113 = vector.multi_reduction <add>, %112, %cst_40 [1] : vector<8x8xf32> to vector<8xf32>
    %114 = vector.shape_cast %113 : vector<8xf32> to vector<8x1xf32>
    %115 = tpu.reciprocal %114 {approx = true} : vector<8x1xf32> -> vector<8x1xf32>
    %116 = vector.broadcast %115 : vector<8x1xf32> to vector<8x8xf32>
    %117 = arith.mulf %112, %116 : vector<8x8xf32>
    %118 = arith.truncf %117 : vector<8x8xf32> to vector<8x8xbf16>
    %119 = vector.extract_strided_slice %42 {offsets = [0, 24], sizes = [8, 8], strides = [1, 1]} : vector<16x32xf32> to vector<8x8xf32>
    %120 = arith.truncf %119 : vector<8x8xf32> to vector<8x8xbf16>
    %cst_41 = arith.constant dense<0.000000e+00> : vector<8x8xf32>
    %121 = tpu.matmul %118, %120, %cst_41 {dimension_numbers = #tpu.dot_dimension_numbers<[1], [0], [0], [1], [0, 0, 1, 1], [], []>} : vector<8x8xbf16>, vector<8x8xbf16>, vector<8x8xf32> -> vector<8x8xf32>
    %c0_42 = arith.constant 0 : index
    %c24 = arith.constant 24 : index
    %122 = vector.load %arg12[%c0_42, %c24] : memref<16x32xf32, #tpu.memory_space<vmem>>, vector<8x8xf32>
    tpu.vector_store %arg12[%c0_42, %c24], %121 {strides = array<i32>} : memref<16x32xf32, #tpu.memory_space<vmem>>, vector<8x8xf32>,
    %123 = vector.extract_strided_slice %35 {offsets = [8, 0], sizes = [8, 8], strides = [1, 1]} : vector<16x32xf32> to vector<8x8xf32>
    %124 = arith.truncf %123 : vector<8x8xf32> to vector<8x8xbf16>
    %125 = vector.extract_strided_slice %36 {offsets = [8, 0], sizes = [8, 8], strides = [1, 1]} : vector<16x32xf32> to vector<8x8xf32>
    %126 = arith.truncf %125 : vector<8x8xf32> to vector<8x8xbf16>
    %cst_43 = arith.constant dense<0.000000e+00> : vector<8x8xf32>
    %127 = tpu.matmul %124, %126, %cst_43 {dimension_numbers = #tpu.dot_dimension_numbers<[1], [1], [0], [0], [0, 0, 1, 0], [], []>} : vector<8x8xbf16>, vector<8x8xbf16>, vector<8x8xf32> -> vector<8x8xf32>
    %cst_44 = arith.constant dense<0xFF800000> : vector<8xf32>
    %128 = vector.multi_reduction <maximumf>, %127, %cst_44 [1] : vector<8x8xf32> to vector<8xf32>
    %129 = vector.shape_cast %128 : vector<8xf32> to vector<8x1xf32>
    %130 = vector.broadcast %129 : vector<8x1xf32> to vector<8x8xf32>
    %131 = arith.subf %127, %130 : vector<8x8xf32>
    %132 = math.exp %131 : vector<8x8xf32>
    %cst_45 = arith.constant dense<0.000000e+00> : vector<8xf32>
    %133 = vector.multi_reduction <add>, %132, %cst_45 [1] : vector<8x8xf32> to vector<8xf32>
    %134 = vector.shape_cast %133 : vector<8xf32> to vector<8x1xf32>
    %135 = tpu.reciprocal %134 {approx = true} : vector<8x1xf32> -> vector<8x1xf32>
    %136 = vector.broadcast %135 : vector<8x1xf32> to vector<8x8xf32>
    %137 = arith.mulf %132, %136 : vector<8x8xf32>
    %138 = arith.truncf %137 : vector<8x8xf32> to vector<8x8xbf16>
    %139 = vector.extract_strided_slice %42 {offsets = [8, 0], sizes = [8, 8], strides = [1, 1]} : vector<16x32xf32> to vector<8x8xf32>
    %140 = arith.truncf %139 : vector<8x8xf32> to vector<8x8xbf16>
    %cst_46 = arith.constant dense<0.000000e+00> : vector<8x8xf32>
    %141 = tpu.matmul %138, %140, %cst_46 {dimension_numbers = #tpu.dot_dimension_numbers<[1], [0], [0], [1], [0, 0, 1, 1], [], []>} : vector<8x8xbf16>, vector<8x8xbf16>, vector<8x8xf32> -> vector<8x8xf32>
    %c8_47 = arith.constant 8 : index
    %c0_48 = arith.constant 0 : index
    %142 = vector.load %arg12[%c8_47, %c0_48] : memref<16x32xf32, #tpu.memory_space<vmem>>, vector<8x8xf32>
    tpu.vector_store %arg12[%c8_47, %c0_48], %141 {strides = array<i32>} : memref<16x32xf32, #tpu.memory_space<vmem>>, vector<8x8xf32>,
    %143 = vector.extract_strided_slice %35 {offsets = [8, 8], sizes = [8, 8], strides = [1, 1]} : vector<16x32xf32> to vector<8x8xf32>
    %144 = arith.truncf %143 : vector<8x8xf32> to vector<8x8xbf16>
    %145 = vector.extract_strided_slice %36 {offsets = [8, 8], sizes = [8, 8], strides = [1, 1]} : vector<16x32xf32> to vector<8x8xf32>
    %146 = arith.truncf %145 : vector<8x8xf32> to vector<8x8xbf16>
    %cst_49 = arith.constant dense<0.000000e+00> : vector<8x8xf32>
    %147 = tpu.matmul %144, %146, %cst_49 {dimension_numbers = #tpu.dot_dimension_numbers<[1], [1], [0], [0], [0, 0, 1, 0], [], []>} : vector<8x8xbf16>, vector<8x8xbf16>, vector<8x8xf32> -> vector<8x8xf32>
    %cst_50 = arith.constant dense<0xFF800000> : vector<8xf32>
    %148 = vector.multi_reduction <maximumf>, %147, %cst_50 [1] : vector<8x8xf32> to vector<8xf32>
    %149 = vector.shape_cast %148 : vector<8xf32> to vector<8x1xf32>
    %150 = vector.broadcast %149 : vector<8x1xf32> to vector<8x8xf32>
    %151 = arith.subf %147, %150 : vector<8x8xf32>
    %152 = math.exp %151 : vector<8x8xf32>
    %cst_51 = arith.constant dense<0.000000e+00> : vector<8xf32>
    %153 = vector.multi_reduction <add>, %152, %cst_51 [1] : vector<8x8xf32> to vector<8xf32>
    %154 = vector.shape_cast %153 : vector<8xf32> to vector<8x1xf32>
    %155 = tpu.reciprocal %154 {approx = true} : vector<8x1xf32> -> vector<8x1xf32>
    %156 = vector.broadcast %155 : vector<8x1xf32> to vector<8x8xf32>
    %157 = arith.mulf %152, %156 : vector<8x8xf32>
    %158 = arith.truncf %157 : vector<8x8xf32> to vector<8x8xbf16>
    %159 = vector.extract_strided_slice %42 {offsets = [8, 8], sizes = [8, 8], strides = [1, 1]} : vector<16x32xf32> to vector<8x8xf32>
    %160 = arith.truncf %159 : vector<8x8xf32> to vector<8x8xbf16>
    %cst_52 = arith.constant dense<0.000000e+00> : vector<8x8xf32>
    %161 = tpu.matmul %158, %160, %cst_52 {dimension_numbers = #tpu.dot_dimension_numbers<[1], [0], [0], [1], [0, 0, 1, 1], [], []>} : vector<8x8xbf16>, vector<8x8xbf16>, vector<8x8xf32> -> vector<8x8xf32>
    %c8_53 = arith.constant 8 : index
    %c8_54 = arith.constant 8 : index
    %162 = vector.load %arg12[%c8_53, %c8_54] : memref<16x32xf32, #tpu.memory_space<vmem>>, vector<8x8xf32>
    tpu.vector_store %arg12[%c8_53, %c8_54], %161 {strides = array<i32>} : memref<16x32xf32, #tpu.memory_space<vmem>>, vector<8x8xf32>,
    %163 = vector.extract_strided_slice %35 {offsets = [8, 16], sizes = [8, 8], strides = [1, 1]} : vector<16x32xf32> to vector<8x8xf32>
    %164 = arith.truncf %163 : vector<8x8xf32> to vector<8x8xbf16>
    %165 = vector.extract_strided_slice %36 {offsets = [8, 16], sizes = [8, 8], strides = [1, 1]} : vector<16x32xf32> to vector<8x8xf32>
    %166 = arith.truncf %165 : vector<8x8xf32> to vector<8x8xbf16>
    %cst_55 = arith.constant dense<0.000000e+00> : vector<8x8xf32>
    %167 = tpu.matmul %164, %166, %cst_55 {dimension_numbers = #tpu.dot_dimension_numbers<[1], [1], [0], [0], [0, 0, 1, 0], [], []>} : vector<8x8xbf16>, vector<8x8xbf16>, vector<8x8xf32> -> vector<8x8xf32>
    %cst_56 = arith.constant dense<0xFF800000> : vector<8xf32>
    %168 = vector.multi_reduction <maximumf>, %167, %cst_56 [1] : vector<8x8xf32> to vector<8xf32>
    %169 = vector.shape_cast %168 : vector<8xf32> to vector<8x1xf32>
    %170 = vector.broadcast %169 : vector<8x1xf32> to vector<8x8xf32>
    %171 = arith.subf %167, %170 : vector<8x8xf32>
    %172 = math.exp %171 : vector<8x8xf32>
    %cst_57 = arith.constant dense<0.000000e+00> : vector<8xf32>
    %173 = vector.multi_reduction <add>, %172, %cst_57 [1] : vector<8x8xf32> to vector<8xf32>
    %174 = vector.shape_cast %173 : vector<8xf32> to vector<8x1xf32>
    %175 = tpu.reciprocal %174 {approx = true} : vector<8x1xf32> -> vector<8x1xf32>
    %176 = vector.broadcast %175 : vector<8x1xf32> to vector<8x8xf32>
    %177 = arith.mulf %172, %176 : vector<8x8xf32>
    %178 = arith.truncf %177 : vector<8x8xf32> to vector<8x8xbf16>
    %179 = vector.extract_strided_slice %42 {offsets = [8, 16], sizes = [8, 8], strides = [1, 1]} : vector<16x32xf32> to vector<8x8xf32>
    %180 = arith.truncf %179 : vector<8x8xf32> to vector<8x8xbf16>
    %cst_58 = arith.constant dense<0.000000e+00> : vector<8x8xf32>
    %181 = tpu.matmul %178, %180, %cst_58 {dimension_numbers = #tpu.dot_dimension_numbers<[1], [0], [0], [1], [0, 0, 1, 1], [], []>} : vector<8x8xbf16>, vector<8x8xbf16>, vector<8x8xf32> -> vector<8x8xf32>
    %c8_59 = arith.constant 8 : index
    %c16_60 = arith.constant 16 : index
    %182 = vector.load %arg12[%c8_59, %c16_60] : memref<16x32xf32, #tpu.memory_space<vmem>>, vector<8x8xf32>
    tpu.vector_store %arg12[%c8_59, %c16_60], %181 {strides = array<i32>} : memref<16x32xf32, #tpu.memory_space<vmem>>, vector<8x8xf32>,
    %183 = vector.extract_strided_slice %35 {offsets = [8, 24], sizes = [8, 8], strides = [1, 1]} : vector<16x32xf32> to vector<8x8xf32>
    %184 = arith.truncf %183 : vector<8x8xf32> to vector<8x8xbf16>
    %185 = vector.extract_strided_slice %36 {offsets = [8, 24], sizes = [8, 8], strides = [1, 1]} : vector<16x32xf32> to vector<8x8xf32>
    %186 = arith.truncf %185 : vector<8x8xf32> to vector<8x8xbf16>
    %cst_61 = arith.constant dense<0.000000e+00> : vector<8x8xf32>
    %187 = tpu.matmul %184, %186, %cst_61 {dimension_numbers = #tpu.dot_dimension_numbers<[1], [1], [0], [0], [0, 0, 1, 0], [], []>} : vector<8x8xbf16>, vector<8x8xbf16>, vector<8x8xf32> -> vector<8x8xf32>
    %cst_62 = arith.constant dense<0xFF800000> : vector<8xf32>
    %188 = vector.multi_reduction <maximumf>, %187, %cst_62 [1] : vector<8x8xf32> to vector<8xf32>
    %189 = vector.shape_cast %188 : vector<8xf32> to vector<8x1xf32>
    %190 = vector.broadcast %189 : vector<8x1xf32> to vector<8x8xf32>
    %191 = arith.subf %187, %190 : vector<8x8xf32>
    %192 = math.exp %191 : vector<8x8xf32>
    %cst_63 = arith.constant dense<0.000000e+00> : vector<8xf32>
    %193 = vector.multi_reduction <add>, %192, %cst_63 [1] : vector<8x8xf32> to vector<8xf32>
    %194 = vector.shape_cast %193 : vector<8xf32> to vector<8x1xf32>
    %195 = tpu.reciprocal %194 {approx = true} : vector<8x1xf32> -> vector<8x1xf32>
    %196 = vector.broadcast %195 : vector<8x1xf32> to vector<8x8xf32>
    %197 = arith.mulf %192, %196 : vector<8x8xf32>
    %198 = arith.truncf %197 : vector<8x8xf32> to vector<8x8xbf16>
    %199 = vector.extract_strided_slice %42 {offsets = [8, 24], sizes = [8, 8], strides = [1, 1]} : vector<16x32xf32> to vector<8x8xf32>
    %200 = arith.truncf %199 : vector<8x8xf32> to vector<8x8xbf16>
    %cst_64 = arith.constant dense<0.000000e+00> : vector<8x8xf32>
    %201 = tpu.matmul %198, %200, %cst_64 {dimension_numbers = #tpu.dot_dimension_numbers<[1], [0], [0], [1], [0, 0, 1, 1], [], []>} : vector<8x8xbf16>, vector<8x8xbf16>, vector<8x8xf32> -> vector<8x8xf32>
    %c8_65 = arith.constant 8 : index
    %c24_66 = arith.constant 24 : index
    %202 = vector.load %arg12[%c8_65, %c24_66] : memref<16x32xf32, #tpu.memory_space<vmem>>, vector<8x8xf32>
    tpu.vector_store %arg12[%c8_65, %c24_66], %201 {strides = array<i32>} : memref<16x32xf32, #tpu.memory_space<vmem>>, vector<8x8xf32>,
    %c0_67 = arith.constant 0 : index
    %c0_68 = arith.constant 0 : index
    %203 = vector.load %arg12[%c0_67, %c0_68] : memref<16x32xf32, #tpu.memory_space<vmem>>, vector<16x32xf32>
    %204 = arith.truncf %203 : vector<16x32xf32> to vector<16x32xbf16>
    %c0_69 = arith.constant 0 : index
    %c0_70 = arith.constant 0 : index
    %205 = vector.load %arg9[%c0_69, %c0_70] : memref<32x32xbf16, #tpu.memory_space<vmem>>, vector<32x32xbf16>
    %cst_71 = arith.constant dense<0.000000e+00> : vector<16x32xf32>
    %206 = tpu.matmul %204, %205, %cst_71 {dimension_numbers = #tpu.dot_dimension_numbers<[1], [0], [0], [1], [0, 0, 1, 1], [], []>} : vector<16x32xbf16>, vector<32x32xbf16>, vector<16x32xf32> -> vector<16x32xf32>
    %c0_72 = arith.constant 0 : index
    %c0_73 = arith.constant 0 : index
    %207 = vector.load %arg10[%c0_72, %c0_73] : memref<1x32xf32, #tpu.memory_space<vmem>>, vector<1x32xf32>
    %208 = vector.broadcast %207 : vector<1x32xf32> to vector<16x32xf32>
    %209 = arith.addf %206, %208 : vector<16x32xf32>
    %210 = arith.addf %209, %0 : vector<16x32xf32>
    %c0_74 = arith.constant 0 : index
    %c0_75 = arith.constant 0 : index
    %211 = vector.load %arg11[%c0_74, %c0_75] : memref<16x32xf32, #tpu.memory_space<vmem>>, vector<16x32xf32>
    tpu.vector_store %arg11[%c0_74, %c0_75], %210 {strides = array<i32>} : memref<16x32xf32, #tpu.memory_space<vmem>>, vector<16x32xf32>,
    return
  }
  func.func @transform_0(%arg0: i32) -> (i32, i32) {
    %c0_i32 = arith.constant 0 : i32
    %c0_i32_0 = arith.constant 0 : i32
    return %arg0, %c0_i32 : i32, i32
  }
  func.func @transform_1(%arg0: i32) -> (i32, i32) {
    %c0_i32 = arith.constant 0 : i32
    %c0_i32_0 = arith.constant 0 : i32
    return %arg0, %c0_i32 : i32, i32
  }
  func.func @transform_2(%arg0: i32) -> (i32, i32) {
    %c0_i32 = arith.constant 0 : i32
    %c0_i32_0 = arith.constant 0 : i32
    %c0_i32_1 = arith.constant 0 : i32
    return %c0_i32, %c0_i32_0 : i32, i32
  }
  func.func @transform_3(%arg0: i32) -> (i32, i32) {
    %c0_i32 = arith.constant 0 : i32
    %c0_i32_0 = arith.constant 0 : i32
    %c0_i32_1 = arith.constant 0 : i32
    return %c0_i32, %c0_i32_0 : i32, i32
  }
  func.func @transform_4(%arg0: i32) -> (i32, i32) {
    %c0_i32 = arith.constant 0 : i32
    %c0_i32_0 = arith.constant 0 : i32
    %c0_i32_1 = arith.constant 0 : i32
    return %c0_i32, %c0_i32_0 : i32, i32
  }
  func.func @transform_5(%arg0: i32) -> (i32, i32) {
    %c0_i32 = arith.constant 0 : i32
    %c0_i32_0 = arith.constant 0 : i32
    %c0_i32_1 = arith.constant 0 : i32
    return %c0_i32, %c0_i32_0 : i32, i32
  }
  func.func @transform_6(%arg0: i32) -> (i32, i32) {
    %c0_i32 = arith.constant 0 : i32
    %c0_i32_0 = arith.constant 0 : i32
    %c0_i32_1 = arith.constant 0 : i32
    return %c0_i32, %c0_i32_0 : i32, i32
  }
  func.func @transform_7(%arg0: i32) -> (i32, i32) {
    %c0_i32 = arith.constant 0 : i32
    %c0_i32_0 = arith.constant 0 : i32
    %c0_i32_1 = arith.constant 0 : i32
    return %c0_i32, %c0_i32_0 : i32, i32
  }
  func.func @transform_8(%arg0: i32) -> (i32, i32) {
    %c0_i32 = arith.constant 0 : i32
    %c0_i32_0 = arith.constant 0 : i32
    %c0_i32_1 = arith.constant 0 : i32
    return %c0_i32, %c0_i32_0 : i32, i32
  }
  func.func @transform_9(%arg0: i32) -> (i32, i32) {
    %c0_i32 = arith.constant 0 : i32
    %c0_i32_0 = arith.constant 0 : i32
    %c0_i32_1 = arith.constant 0 : i32
    return %c0_i32, %c0_i32_0 : i32, i32
  }
  func.func @transform_10(%arg0: i32) -> (i32, i32) {
    %c0_i32 = arith.constant 0 : i32
    %c0_i32_0 = arith.constant 0 : i32
    return %arg0, %c0_i32 : i32, i32
  }
}

module attributes {stable_mosaic.version = 11 : i64} {
  func.func @_attn_block_kernel(%arg0: i32, %arg1: memref<16x32xf32, #tpu.memory_space<vmem>>, %arg2: memref<16x32xf32, #tpu.memory_space<vmem>>, %arg3: memref<1x32xf32, #tpu.memory_space<vmem>>, %arg4: memref<1x32xf32, #tpu.memory_space<vmem>>, %arg5: memref<32x64xbf16, #tpu.memory_space<vmem>>, %arg6: memref<1x64xf32, #tpu.memory_space<vmem>>, %arg7: memref<32x32xbf16, #tpu.memory_space<vmem>>, %arg8: memref<1x32xf32, #tpu.memory_space<vmem>>, %arg9: memref<32x32xbf16, #tpu.memory_space<vmem>>, %arg10: memref<1x32xf32, #tpu.memory_space<vmem>>, %arg11: memref<16x32xf32, #tpu.memory_space<vmem>>, %arg12: memref<16x32xf32, #tpu.memory_space<vmem>>) attributes {dimension_semantics = [#tpu.dimension_semantics<parallel>], iteration_bounds = array<i64: 1>, scalar_prefetch = 0 : i64, scratch_operands = 1 : i64, tpu.core_type = #tpu.core_type<tc>, window_params = [{transform_indices = @transform_0, window_bounds = array<i64: 16, 32>}, {transform_indices = @transform_1, window_bounds = array<i64: 16, 32>}, {pipeline_mode = #tpu.pipeline_mode<synchronous>, transform_indices = @transform_2, window_bounds = array<i64: 1, 32>}, {pipeline_mode = #tpu.pipeline_mode<synchronous>, transform_indices = @transform_3, window_bounds = array<i64: 1, 32>}, {pipeline_mode = #tpu.pipeline_mode<synchronous>, transform_indices = @transform_4, window_bounds = array<i64: 32, 64>}, {pipeline_mode = #tpu.pipeline_mode<synchronous>, transform_indices = @transform_5, window_bounds = array<i64: 1, 64>}, {pipeline_mode = #tpu.pipeline_mode<synchronous>, transform_indices = @transform_6, window_bounds = array<i64: 32, 32>}, {pipeline_mode = #tpu.pipeline_mode<synchronous>, transform_indices = @transform_7, window_bounds = array<i64: 1, 32>}, {pipeline_mode = #tpu.pipeline_mode<synchronous>, transform_indices = @transform_8, window_bounds = array<i64: 32, 32>}, {pipeline_mode = #tpu.pipeline_mode<synchronous>, transform_indices = @transform_9, window_bounds = array<i64: 1, 32>}, {transform_indices = @transform_10, window_bounds = array<i64: 16, 32>}]} {
    %c0 = arith.constant 0 : index
    %c0_0 = arith.constant 0 : index
    %0 = vector.load %arg1[%c0, %c0_0] : memref<16x32xf32, #tpu.memory_space<vmem>>, vector<16x32xf32>
    %c0_1 = arith.constant 0 : index
    %c0_2 = arith.constant 0 : index
    %1 = vector.load %arg3[%c0_1, %c0_2] : memref<1x32xf32, #tpu.memory_space<vmem>>, vector<1x32xf32>
    %c0_3 = arith.constant 0 : index
    %c0_4 = arith.constant 0 : index
    %2 = vector.load %arg4[%c0_3, %c0_4] : memref<1x32xf32, #tpu.memory_space<vmem>>, vector<1x32xf32>
    %cst = arith.constant dense<0.000000e+00> : vector<16xf32>
    %3 = vector.multi_reduction <add>, %0, %cst [1] : vector<16x32xf32> to vector<16xf32>
    %4 = vector.shape_cast %3 : vector<16xf32> to vector<16x1xf32>
    %cst_5 = arith.constant 3.200000e+01 : f32
    %5 = vector.broadcast %cst_5 : f32 to vector<16x1xf32>
    %6 = arith.divf %4, %5 : vector<16x1xf32>
    %7 = vector.broadcast %6 : vector<16x1xf32> to vector<16x32xf32>
    %8 = arith.subf %0, %7 : vector<16x32xf32>
    %9 = arith.mulf %8, %8 : vector<16x32xf32>
    %cst_6 = arith.constant dense<0.000000e+00> : vector<16xf32>
    %10 = vector.multi_reduction <add>, %9, %cst_6 [1] : vector<16x32xf32> to vector<16xf32>
    %11 = vector.shape_cast %10 : vector<16xf32> to vector<16x1xf32>
    %cst_7 = arith.constant 3.200000e+01 : f32
    %12 = vector.broadcast %cst_7 : f32 to vector<16x1xf32>
    %13 = arith.divf %11, %12 : vector<16x1xf32>
    %14 = vector.broadcast %6 : vector<16x1xf32> to vector<16x32xf32>
    %15 = arith.subf %0, %14 : vector<16x32xf32>
    %cst_8 = arith.constant 9.99999974E-6 : f32
    %16 = vector.broadcast %cst_8 : f32 to vector<16x1xf32>
    %17 = arith.addf %13, %16 : vector<16x1xf32>
    %18 = math.rsqrt %17 : vector<16x1xf32>
    %19 = vector.broadcast %18 : vector<16x1xf32> to vector<16x32xf32>
    %20 = arith.mulf %15, %19 : vector<16x32xf32>
    %21 = vector.broadcast %1 : vector<1x32xf32> to vector<16x32xf32>
    %22 = arith.mulf %20, %21 : vector<16x32xf32>
    %23 = vector.broadcast %2 : vector<1x32xf32> to vector<16x32xf32>
    %24 = arith.addf %22, %23 : vector<16x32xf32>
    %c0_9 = arith.constant 0 : index
    %c0_10 = arith.constant 0 : index
    %25 = vector.load %arg2[%c0_9, %c0_10] : memref<16x32xf32, #tpu.memory_space<vmem>>, vector<16x32xf32>
    %26 = arith.addf %24, %25 : vector<16x32xf32>
    %27 = arith.truncf %26 : vector<16x32xf32> to vector<16x32xbf16>
    %c0_11 = arith.constant 0 : index
    %c0_12 = arith.constant 0 : index
    %28 = vector.load %arg5[%c0_11, %c0_12] : memref<32x64xbf16, #tpu.memory_space<vmem>>, vector<32x64xbf16>
    %cst_13 = arith.constant dense<0.000000e+00> : vector<16x64xf32>
    %29 = tpu.matmul %27, %28, %cst_13 {dimension_numbers = #tpu.dot_dimension_numbers<[1], [0], [0], [1], [0, 0, 1, 1], [], []>} : vector<16x32xbf16>, vector<32x64xbf16>, vector<16x64xf32> -> vector<16x64xf32>
    %c0_14 = arith.constant 0 : index
    %c0_15 = arith.constant 0 : index
    %30 = vector.load %arg6[%c0_14, %c0_15] : memref<1x64xf32, #tpu.memory_space<vmem>>, vector<1x64xf32>
    %31 = vector.broadcast %30 : vector<1x64xf32> to vector<16x64xf32>
    %32 = arith.addf %29, %31 : vector<16x64xf32>
    %33 = vector.extract_strided_slice %32 {offsets = [0, 0], sizes = [16, 32], strides = [1, 1]} : vector<16x64xf32> to vector<16x32xf32>
    %cst_16 = arith.constant 0.353553385 : f32
    %34 = vector.broadcast %cst_16 : f32 to vector<16x32xf32>
    %35 = arith.mulf %33, %34 : vector<16x32xf32>
    %36 = vector.extract_strided_slice %32 {offsets = [0, 32], sizes = [16, 32], strides = [1, 1]} : vector<16x64xf32> to vector<16x32xf32>
    %37 = arith.truncf %24 : vector<16x32xf32> to vector<16x32xbf16>
    %c0_17 = arith.constant 0 : index
    %c0_18 = arith.constant 0 : index
    %38 = vector.load %arg7[%c0_17, %c0_18] : memref<32x32xbf16, #tpu.memory_space<vmem>>, vector<32x32xbf16>
    %cst_19 = arith.constant dense<0.000000e+00> : vector<16x32xf32>
    %39 = tpu.matmul %37, %38, %cst_19 {dimension_numbers = #tpu.dot_dimension_numbers<[1], [0], [0], [1], [0, 0, 1, 1], [], []>} : vector<16x32xbf16>, vector<32x32xbf16>, vector<16x32xf32> -> vector<16x32xf32>
    %c0_20 = arith.constant 0 : index
    %c0_21 = arith.constant 0 : index
    %40 = vector.load %arg8[%c0_20, %c0_21] : memref<1x32xf32, #tpu.memory_space<vmem>>, vector<1x32xf32>
    %41 = vector.broadcast %40 : vector<1x32xf32> to vector<16x32xf32>
    %42 = arith.addf %39, %41 : vector<16x32xf32>
    %43 = vector.extract_strided_slice %35 {offsets = [0, 0], sizes = [8, 8], strides = [1, 1]} : vector<16x32xf32> to vector<8x8xf32>
    %44 = arith.truncf %43 : vector<8x8xf32> to vector<8x8xbf16>
    %45 = vector.extract_strided_slice %36 {offsets = [0, 0], sizes = [8, 8], strides = [1, 1]} : vector<16x32xf32> to vector<8x8xf32>
    %46 = arith.truncf %45 : vector<8x8xf32> to vector<8x8xbf16>
    %cst_22 = arith.constant dense<0.000000e+00> : vector<8x8xf32>
    %47 = tpu.matmul %44, %46, %cst_22 {dimension_numbers = #tpu.dot_dimension_numbers<[1], [1], [0], [0], [0, 0, 1, 0], [], []>} : vector<8x8xbf16>, vector<8x8xbf16>, vector<8x8xf32> -> vector<8x8xf32>
    %cst_23 = arith.constant dense<0xFF800000> : vector<8xf32>
    %48 = vector.multi_reduction <maximumf>, %47, %cst_23 [1] : vector<8x8xf32> to vector<8xf32>
    %49 = vector.shape_cast %48 : vector<8xf32> to vector<8x1xf32>
    %50 = vector.broadcast %49 : vector<8x1xf32> to vector<8x8xf32>
    %51 = arith.subf %47, %50 : vector<8x8xf32>
    %52 = math.exp %51 : vector<8x8xf32>
    %cst_24 = arith.constant dense<0.000000e+00> : vector<8xf32>
    %53 = vector.multi_reduction <add>, %52, %cst_24 [1] : vector<8x8xf32> to vector<8xf32>
    %54 = vector.shape_cast %53 : vector<8xf32> to vector<8x1xf32>
    %55 = tpu.reciprocal %54 {approx = true} : vector<8x1xf32> -> vector<8x1xf32>
    %56 = vector.broadcast %55 : vector<8x1xf32> to vector<8x8xf32>
    %57 = arith.mulf %52, %56 : vector<8x8xf32>
    %58 = arith.truncf %57 : vector<8x8xf32> to vector<8x8xbf16>
    %59 = vector.extract_strided_slice %42 {offsets = [0, 0], sizes = [8, 8], strides = [1, 1]} : vector<16x32xf32> to vector<8x8xf32>
    %60 = arith.truncf %59 : vector<8x8xf32> to vector<8x8xbf16>
    %cst_25 = arith.constant dense<0.000000e+00> : vector<8x8xf32>
    %61 = tpu.matmul %58, %60, %cst_25 {dimension_numbers = #tpu.dot_dimension_numbers<[1], [0], [0], [1], [0, 0, 1, 1], [], []>} : vector<8x8xbf16>, vector<8x8xbf16>, vector<8x8xf32> -> vector<8x8xf32>
    %c0_26 = arith.constant 0 : index
    %c0_27 = arith.constant 0 : index
    %62 = vector.load %arg12[%c0_26, %c0_27] : memref<16x32xf32, #tpu.memory_space<vmem>>, vector<8x8xf32>
    tpu.vector_store %arg12[%c0_26, %c0_27], %61 {strides = array<i32>} : memref<16x32xf32, #tpu.memory_space<vmem>>, vector<8x8xf32>,
    %63 = vector.extract_strided_slice %35 {offsets = [0, 8], sizes = [8, 8], strides = [1, 1]} : vector<16x32xf32> to vector<8x8xf32>
    %64 = arith.truncf %63 : vector<8x8xf32> to vector<8x8xbf16>
    %65 = vector.extract_strided_slice %36 {offsets = [0, 8], sizes = [8, 8], strides = [1, 1]} : vector<16x32xf32> to vector<8x8xf32>
    %66 = arith.truncf %65 : vector<8x8xf32> to vector<8x8xbf16>
    %cst_28 = arith.constant dense<0.000000e+00> : vector<8x8xf32>
    %67 = tpu.matmul %64, %66, %cst_28 {dimension_numbers = #tpu.dot_dimension_numbers<[1], [1], [0], [0], [0, 0, 1, 0], [], []>} : vector<8x8xbf16>, vector<8x8xbf16>, vector<8x8xf32> -> vector<8x8xf32>
    %cst_29 = arith.constant dense<0xFF800000> : vector<8xf32>
    %68 = vector.multi_reduction <maximumf>, %67, %cst_29 [1] : vector<8x8xf32> to vector<8xf32>
    %69 = vector.shape_cast %68 : vector<8xf32> to vector<8x1xf32>
    %70 = vector.broadcast %69 : vector<8x1xf32> to vector<8x8xf32>
    %71 = arith.subf %67, %70 : vector<8x8xf32>
    %72 = math.exp %71 : vector<8x8xf32>
    %cst_30 = arith.constant dense<0.000000e+00> : vector<8xf32>
    %73 = vector.multi_reduction <add>, %72, %cst_30 [1] : vector<8x8xf32> to vector<8xf32>
    %74 = vector.shape_cast %73 : vector<8xf32> to vector<8x1xf32>
    %75 = tpu.reciprocal %74 {approx = true} : vector<8x1xf32> -> vector<8x1xf32>
    %76 = vector.broadcast %75 : vector<8x1xf32> to vector<8x8xf32>
    %77 = arith.mulf %72, %76 : vector<8x8xf32>
    %78 = arith.truncf %77 : vector<8x8xf32> to vector<8x8xbf16>
    %79 = vector.extract_strided_slice %42 {offsets = [0, 8], sizes = [8, 8], strides = [1, 1]} : vector<16x32xf32> to vector<8x8xf32>
    %80 = arith.truncf %79 : vector<8x8xf32> to vector<8x8xbf16>
    %cst_31 = arith.constant dense<0.000000e+00> : vector<8x8xf32>
    %81 = tpu.matmul %78, %80, %cst_31 {dimension_numbers = #tpu.dot_dimension_numbers<[1], [0], [0], [1], [0, 0, 1, 1], [], []>} : vector<8x8xbf16>, vector<8x8xbf16>, vector<8x8xf32> -> vector<8x8xf32>
    %c0_32 = arith.constant 0 : index
    %c8 = arith.constant 8 : index
    %82 = vector.load %arg12[%c0_32, %c8] : memref<16x32xf32, #tpu.memory_space<vmem>>, vector<8x8xf32>
    tpu.vector_store %arg12[%c0_32, %c8], %81 {strides = array<i32>} : memref<16x32xf32, #tpu.memory_space<vmem>>, vector<8x8xf32>,
    %83 = vector.extract_strided_slice %35 {offsets = [0, 16], sizes = [8, 8], strides = [1, 1]} : vector<16x32xf32> to vector<8x8xf32>
    %84 = arith.truncf %83 : vector<8x8xf32> to vector<8x8xbf16>
    %85 = vector.extract_strided_slice %36 {offsets = [0, 16], sizes = [8, 8], strides = [1, 1]} : vector<16x32xf32> to vector<8x8xf32>
    %86 = arith.truncf %85 : vector<8x8xf32> to vector<8x8xbf16>
    %cst_33 = arith.constant dense<0.000000e+00> : vector<8x8xf32>
    %87 = tpu.matmul %84, %86, %cst_33 {dimension_numbers = #tpu.dot_dimension_numbers<[1], [1], [0], [0], [0, 0, 1, 0], [], []>} : vector<8x8xbf16>, vector<8x8xbf16>, vector<8x8xf32> -> vector<8x8xf32>
    %cst_34 = arith.constant dense<0xFF800000> : vector<8xf32>
    %88 = vector.multi_reduction <maximumf>, %87, %cst_34 [1] : vector<8x8xf32> to vector<8xf32>
    %89 = vector.shape_cast %88 : vector<8xf32> to vector<8x1xf32>
    %90 = vector.broadcast %89 : vector<8x1xf32> to vector<8x8xf32>
    %91 = arith.subf %87, %90 : vector<8x8xf32>
    %92 = math.exp %91 : vector<8x8xf32>
    %cst_35 = arith.constant dense<0.000000e+00> : vector<8xf32>
    %93 = vector.multi_reduction <add>, %92, %cst_35 [1] : vector<8x8xf32> to vector<8xf32>
    %94 = vector.shape_cast %93 : vector<8xf32> to vector<8x1xf32>
    %95 = tpu.reciprocal %94 {approx = true} : vector<8x1xf32> -> vector<8x1xf32>
    %96 = vector.broadcast %95 : vector<8x1xf32> to vector<8x8xf32>
    %97 = arith.mulf %92, %96 : vector<8x8xf32>
    %98 = arith.truncf %97 : vector<8x8xf32> to vector<8x8xbf16>
    %99 = vector.extract_strided_slice %42 {offsets = [0, 16], sizes = [8, 8], strides = [1, 1]} : vector<16x32xf32> to vector<8x8xf32>
    %100 = arith.truncf %99 : vector<8x8xf32> to vector<8x8xbf16>
    %cst_36 = arith.constant dense<0.000000e+00> : vector<8x8xf32>
    %101 = tpu.matmul %98, %100, %cst_36 {dimension_numbers = #tpu.dot_dimension_numbers<[1], [0], [0], [1], [0, 0, 1, 1], [], []>} : vector<8x8xbf16>, vector<8x8xbf16>, vector<8x8xf32> -> vector<8x8xf32>
    %c0_37 = arith.constant 0 : index
    %c16 = arith.constant 16 : index
    %102 = vector.load %arg12[%c0_37, %c16] : memref<16x32xf32, #tpu.memory_space<vmem>>, vector<8x8xf32>
    tpu.vector_store %arg12[%c0_37, %c16], %101 {strides = array<i32>} : memref<16x32xf32, #tpu.memory_space<vmem>>, vector<8x8xf32>,
    %103 = vector.extract_strided_slice %35 {offsets = [0, 24], sizes = [8, 8], strides = [1, 1]} : vector<16x32xf32> to vector<8x8xf32>
    %104 = arith.truncf %103 : vector<8x8xf32> to vector<8x8xbf16>
    %105 = vector.extract_strided_slice %36 {offsets = [0, 24], sizes = [8, 8], strides = [1, 1]} : vector<16x32xf32> to vector<8x8xf32>
    %106 = arith.truncf %105 : vector<8x8xf32> to vector<8x8xbf16>
    %cst_38 = arith.constant dense<0.000000e+00> : vector<8x8xf32>
    %107 = tpu.matmul %104, %106, %cst_38 {dimension_numbers = #tpu.dot_dimension_numbers<[1], [1], [0], [0], [0, 0, 1, 0], [], []>} : vector<8x8xbf16>, vector<8x8xbf16>, vector<8x8xf32> -> vector<8x8xf32>
    %cst_39 = arith.constant dense<0xFF800000> : vector<8xf32>
    %108 = vector.multi_reduction <maximumf>, %107, %cst_39 [1] : vector<8x8xf32> to vector<8xf32>
    %109 = vector.shape_cast %108 : vector<8xf32> to vector<8x1xf32>
    %110 = vector.broadcast %109 : vector<8x1xf32> to vector<8x8xf32>
    %111 = arith.subf %107, %110 : vector<8x8xf32>
    %112 = math.exp %111 : vector<8x8xf32>
    %cst_40 = arith.constant dense<0.000000e+00> : vector<8xf32>
    %113 = vector.multi_reduction <add>, %112, %cst_40 [1] : vector<8x8xf32> to vector<8xf32>
    %114 = vector.shape_cast %113 : vector<8xf32> to vector<8x1xf32>
    %115 = tpu.reciprocal %114 {approx = true} : vector<8x1xf32> -> vector<8x1xf32>
    %116 = vector.broadcast %115 : vector<8x1xf32> to vector<8x8xf32>
    %117 = arith.mulf %112, %116 : vector<8x8xf32>
    %118 = arith.truncf %117 : vector<8x8xf32> to vector<8x8xbf16>
    %119 = vector.extract_strided_slice %42 {offsets = [0, 24], sizes = [8, 8], strides = [1, 1]} : vector<16x32xf32> to vector<8x8xf32>
    %120 = arith.truncf %119 : vector<8x8xf32> to vector<8x8xbf16>
    %cst_41 = arith.constant dense<0.000000e+00> : vector<8x8xf32>
    %121 = tpu.matmul %118, %120, %cst_41 {dimension_numbers = #tpu.dot_dimension_numbers<[1], [0], [0], [1], [0, 0, 1, 1], [], []>} : vector<8x8xbf16>, vector<8x8xbf16>, vector<8x8xf32> -> vector<8x8xf32>
    %c0_42 = arith.constant 0 : index
    %c24 = arith.constant 24 : index
    %122 = vector.load %arg12[%c0_42, %c24] : memref<16x32xf32, #tpu.memory_space<vmem>>, vector<8x8xf32>
    tpu.vector_store %arg12[%c0_42, %c24], %121 {strides = array<i32>} : memref<16x32xf32, #tpu.memory_space<vmem>>, vector<8x8xf32>,
    %123 = vector.extract_strided_slice %35 {offsets = [8, 0], sizes = [8, 8], strides = [1, 1]} : vector<16x32xf32> to vector<8x8xf32>
    %124 = arith.truncf %123 : vector<8x8xf32> to vector<8x8xbf16>
    %125 = vector.extract_strided_slice %36 {offsets = [8, 0], sizes = [8, 8], strides = [1, 1]} : vector<16x32xf32> to vector<8x8xf32>
    %126 = arith.truncf %125 : vector<8x8xf32> to vector<8x8xbf16>
    %cst_43 = arith.constant dense<0.000000e+00> : vector<8x8xf32>
    %127 = tpu.matmul %124, %126, %cst_43 {dimension_numbers = #tpu.dot_dimension_numbers<[1], [1], [0], [0], [0, 0, 1, 0], [], []>} : vector<8x8xbf16>, vector<8x8xbf16>, vector<8x8xf32> -> vector<8x8xf32>
    %cst_44 = arith.constant dense<0xFF800000> : vector<8xf32>
    %128 = vector.multi_reduction <maximumf>, %127, %cst_44 [1] : vector<8x8xf32> to vector<8xf32>
    %129 = vector.shape_cast %128 : vector<8xf32> to vector<8x1xf32>
    %130 = vector.broadcast %129 : vector<8x1xf32> to vector<8x8xf32>
    %131 = arith.subf %127, %130 : vector<8x8xf32>
    %132 = math.exp %131 : vector<8x8xf32>
    %cst_45 = arith.constant dense<0.000000e+00> : vector<8xf32>
    %133 = vector.multi_reduction <add>, %132, %cst_45 [1] : vector<8x8xf32> to vector<8xf32>
    %134 = vector.shape_cast %133 : vector<8xf32> to vector<8x1xf32>
    %135 = tpu.reciprocal %134 {approx = true} : vector<8x1xf32> -> vector<8x1xf32>
    %136 = vector.broadcast %135 : vector<8x1xf32> to vector<8x8xf32>
    %137 = arith.mulf %132, %136 : vector<8x8xf32>
    %138 = arith.truncf %137 : vector<8x8xf32> to vector<8x8xbf16>
    %139 = vector.extract_strided_slice %42 {offsets = [8, 0], sizes = [8, 8], strides = [1, 1]} : vector<16x32xf32> to vector<8x8xf32>
    %140 = arith.truncf %139 : vector<8x8xf32> to vector<8x8xbf16>
    %cst_46 = arith.constant dense<0.000000e+00> : vector<8x8xf32>
    %141 = tpu.matmul %138, %140, %cst_46 {dimension_numbers = #tpu.dot_dimension_numbers<[1], [0], [0], [1], [0, 0, 1, 1], [], []>} : vector<8x8xbf16>, vector<8x8xbf16>, vector<8x8xf32> -> vector<8x8xf32>
    %c8_47 = arith.constant 8 : index
    %c0_48 = arith.constant 0 : index
    %142 = vector.load %arg12[%c8_47, %c0_48] : memref<16x32xf32, #tpu.memory_space<vmem>>, vector<8x8xf32>
    tpu.vector_store %arg12[%c8_47, %c0_48], %141 {strides = array<i32>} : memref<16x32xf32, #tpu.memory_space<vmem>>, vector<8x8xf32>,
    %143 = vector.extract_strided_slice %35 {offsets = [8, 8], sizes = [8, 8], strides = [1, 1]} : vector<16x32xf32> to vector<8x8xf32>
    %144 = arith.truncf %143 : vector<8x8xf32> to vector<8x8xbf16>
    %145 = vector.extract_strided_slice %36 {offsets = [8, 8], sizes = [8, 8], strides = [1, 1]} : vector<16x32xf32> to vector<8x8xf32>
    %146 = arith.truncf %145 : vector<8x8xf32> to vector<8x8xbf16>
    %cst_49 = arith.constant dense<0.000000e+00> : vector<8x8xf32>
    %147 = tpu.matmul %144, %146, %cst_49 {dimension_numbers = #tpu.dot_dimension_numbers<[1], [1], [0], [0], [0, 0, 1, 0], [], []>} : vector<8x8xbf16>, vector<8x8xbf16>, vector<8x8xf32> -> vector<8x8xf32>
    %cst_50 = arith.constant dense<0xFF800000> : vector<8xf32>
    %148 = vector.multi_reduction <maximumf>, %147, %cst_50 [1] : vector<8x8xf32> to vector<8xf32>
    %149 = vector.shape_cast %148 : vector<8xf32> to vector<8x1xf32>
    %150 = vector.broadcast %149 : vector<8x1xf32> to vector<8x8xf32>
    %151 = arith.subf %147, %150 : vector<8x8xf32>
    %152 = math.exp %151 : vector<8x8xf32>
    %cst_51 = arith.constant dense<0.000000e+00> : vector<8xf32>
    %153 = vector.multi_reduction <add>, %152, %cst_51 [1] : vector<8x8xf32> to vector<8xf32>
    %154 = vector.shape_cast %153 : vector<8xf32> to vector<8x1xf32>
    %155 = tpu.reciprocal %154 {approx = true} : vector<8x1xf32> -> vector<8x1xf32>
    %156 = vector.broadcast %155 : vector<8x1xf32> to vector<8x8xf32>
    %157 = arith.mulf %152, %156 : vector<8x8xf32>
    %158 = arith.truncf %157 : vector<8x8xf32> to vector<8x8xbf16>
    %159 = vector.extract_strided_slice %42 {offsets = [8, 8], sizes = [8, 8], strides = [1, 1]} : vector<16x32xf32> to vector<8x8xf32>
    %160 = arith.truncf %159 : vector<8x8xf32> to vector<8x8xbf16>
    %cst_52 = arith.constant dense<0.000000e+00> : vector<8x8xf32>
    %161 = tpu.matmul %158, %160, %cst_52 {dimension_numbers = #tpu.dot_dimension_numbers<[1], [0], [0], [1], [0, 0, 1, 1], [], []>} : vector<8x8xbf16>, vector<8x8xbf16>, vector<8x8xf32> -> vector<8x8xf32>
    %c8_53 = arith.constant 8 : index
    %c8_54 = arith.constant 8 : index
    %162 = vector.load %arg12[%c8_53, %c8_54] : memref<16x32xf32, #tpu.memory_space<vmem>>, vector<8x8xf32>
    tpu.vector_store %arg12[%c8_53, %c8_54], %161 {strides = array<i32>} : memref<16x32xf32, #tpu.memory_space<vmem>>, vector<8x8xf32>,
    %163 = vector.extract_strided_slice %35 {offsets = [8, 16], sizes = [8, 8], strides = [1, 1]} : vector<16x32xf32> to vector<8x8xf32>
    %164 = arith.truncf %163 : vector<8x8xf32> to vector<8x8xbf16>
    %165 = vector.extract_strided_slice %36 {offsets = [8, 16], sizes = [8, 8], strides = [1, 1]} : vector<16x32xf32> to vector<8x8xf32>
    %166 = arith.truncf %165 : vector<8x8xf32> to vector<8x8xbf16>
    %cst_55 = arith.constant dense<0.000000e+00> : vector<8x8xf32>
    %167 = tpu.matmul %164, %166, %cst_55 {dimension_numbers = #tpu.dot_dimension_numbers<[1], [1], [0], [0], [0, 0, 1, 0], [], []>} : vector<8x8xbf16>, vector<8x8xbf16>, vector<8x8xf32> -> vector<8x8xf32>
    %cst_56 = arith.constant dense<0xFF800000> : vector<8xf32>
    %168 = vector.multi_reduction <maximumf>, %167, %cst_56 [1] : vector<8x8xf32> to vector<8xf32>
    %169 = vector.shape_cast %168 : vector<8xf32> to vector<8x1xf32>
    %170 = vector.broadcast %169 : vector<8x1xf32> to vector<8x8xf32>
    %171 = arith.subf %167, %170 : vector<8x8xf32>
    %172 = math.exp %171 : vector<8x8xf32>
    %cst_57 = arith.constant dense<0.000000e+00> : vector<8xf32>
    %173 = vector.multi_reduction <add>, %172, %cst_57 [1] : vector<8x8xf32> to vector<8xf32>
    %174 = vector.shape_cast %173 : vector<8xf32> to vector<8x1xf32>
    %175 = tpu.reciprocal %174 {approx = true} : vector<8x1xf32> -> vector<8x1xf32>
    %176 = vector.broadcast %175 : vector<8x1xf32> to vector<8x8xf32>
    %177 = arith.mulf %172, %176 : vector<8x8xf32>
    %178 = arith.truncf %177 : vector<8x8xf32> to vector<8x8xbf16>
    %179 = vector.extract_strided_slice %42 {offsets = [8, 16], sizes = [8, 8], strides = [1, 1]} : vector<16x32xf32> to vector<8x8xf32>
    %180 = arith.truncf %179 : vector<8x8xf32> to vector<8x8xbf16>
    %cst_58 = arith.constant dense<0.000000e+00> : vector<8x8xf32>
    %181 = tpu.matmul %178, %180, %cst_58 {dimension_numbers = #tpu.dot_dimension_numbers<[1], [0], [0], [1], [0, 0, 1, 1], [], []>} : vector<8x8xbf16>, vector<8x8xbf16>, vector<8x8xf32> -> vector<8x8xf32>
    %c8_59 = arith.constant 8 : index
    %c16_60 = arith.constant 16 : index
    %182 = vector.load %arg12[%c8_59, %c16_60] : memref<16x32xf32, #tpu.memory_space<vmem>>, vector<8x8xf32>
    tpu.vector_store %arg12[%c8_59, %c16_60], %181 {strides = array<i32>} : memref<16x32xf32, #tpu.memory_space<vmem>>, vector<8x8xf32>,
    %183 = vector.extract_strided_slice %35 {offsets = [8, 24], sizes = [8, 8], strides = [1, 1]} : vector<16x32xf32> to vector<8x8xf32>
    %184 = arith.truncf %183 : vector<8x8xf32> to vector<8x8xbf16>
    %185 = vector.extract_strided_slice %36 {offsets = [8, 24], sizes = [8, 8], strides = [1, 1]} : vector<16x32xf32> to vector<8x8xf32>
    %186 = arith.truncf %185 : vector<8x8xf32> to vector<8x8xbf16>
    %cst_61 = arith.constant dense<0.000000e+00> : vector<8x8xf32>
    %187 = tpu.matmul %184, %186, %cst_61 {dimension_numbers = #tpu.dot_dimension_numbers<[1], [1], [0], [0], [0, 0, 1, 0], [], []>} : vector<8x8xbf16>, vector<8x8xbf16>, vector<8x8xf32> -> vector<8x8xf32>
    %cst_62 = arith.constant dense<0xFF800000> : vector<8xf32>
    %188 = vector.multi_reduction <maximumf>, %187, %cst_62 [1] : vector<8x8xf32> to vector<8xf32>
    %189 = vector.shape_cast %188 : vector<8xf32> to vector<8x1xf32>
    %190 = vector.broadcast %189 : vector<8x1xf32> to vector<8x8xf32>
    %191 = arith.subf %187, %190 : vector<8x8xf32>
    %192 = math.exp %191 : vector<8x8xf32>
    %cst_63 = arith.constant dense<0.000000e+00> : vector<8xf32>
    %193 = vector.multi_reduction <add>, %192, %cst_63 [1] : vector<8x8xf32> to vector<8xf32>
    %194 = vector.shape_cast %193 : vector<8xf32> to vector<8x1xf32>
    %195 = tpu.reciprocal %194 {approx = true} : vector<8x1xf32> -> vector<8x1xf32>
    %196 = vector.broadcast %195 : vector<8x1xf32> to vector<8x8xf32>
    %197 = arith.mulf %192, %196 : vector<8x8xf32>
    %198 = arith.truncf %197 : vector<8x8xf32> to vector<8x8xbf16>
    %199 = vector.extract_strided_slice %42 {offsets = [8, 24], sizes = [8, 8], strides = [1, 1]} : vector<16x32xf32> to vector<8x8xf32>
    %200 = arith.truncf %199 : vector<8x8xf32> to vector<8x8xbf16>
    %cst_64 = arith.constant dense<0.000000e+00> : vector<8x8xf32>
    %201 = tpu.matmul %198, %200, %cst_64 {dimension_numbers = #tpu.dot_dimension_numbers<[1], [0], [0], [1], [0, 0, 1, 1], [], []>} : vector<8x8xbf16>, vector<8x8xbf16>, vector<8x8xf32> -> vector<8x8xf32>
    %c8_65 = arith.constant 8 : index
    %c24_66 = arith.constant 24 : index
    %202 = vector.load %arg12[%c8_65, %c24_66] : memref<16x32xf32, #tpu.memory_space<vmem>>, vector<8x8xf32>
    tpu.vector_store %arg12[%c8_65, %c24_66], %201 {strides = array<i32>} : memref<16x32xf32, #tpu.memory_space<vmem>>, vector<8x8xf32>,
    %c0_67 = arith.constant 0 : index
    %c0_68 = arith.constant 0 : index
    %203 = vector.load %arg12[%c0_67, %c0_68] : memref<16x32xf32, #tpu.memory_space<vmem>>, vector<16x32xf32>
    %204 = arith.truncf %203 : vector<16x32xf32> to vector<16x32xbf16>
    %c0_69 = arith.constant 0 : index
    %c0_70 = arith.constant 0 : index
    %205 = vector.load %arg9[%c0_69, %c0_70] : memref<32x32xbf16, #tpu.memory_space<vmem>>, vector<32x32xbf16>
    %cst_71 = arith.constant dense<0.000000e+00> : vector<16x32xf32>
    %206 = tpu.matmul %204, %205, %cst_71 {dimension_numbers = #tpu.dot_dimension_numbers<[1], [0], [0], [1], [0, 0, 1, 1], [], []>} : vector<16x32xbf16>, vector<32x32xbf16>, vector<16x32xf32> -> vector<16x32xf32>
    %c0_72 = arith.constant 0 : index
    %c0_73 = arith.constant 0 : index
    %207 = vector.load %arg10[%c0_72, %c0_73] : memref<1x32xf32, #tpu.memory_space<vmem>>, vector<1x32xf32>
    %208 = vector.broadcast %207 : vector<1x32xf32> to vector<16x32xf32>
    %209 = arith.addf %206, %208 : vector<16x32xf32>
    %210 = arith.addf %209, %0 : vector<16x32xf32>
    %c0_74 = arith.constant 0 : index
    %c0_75 = arith.constant 0 : index
    %211 = vector.load %arg11[%c0_74, %c0_75] : memref<16x32xf32, #tpu.memory_space<vmem>>, vector<16x32xf32>
    tpu.vector_store %arg11[%c0_74, %c0_75], %210 {strides = array<i32>} : memref<16x32xf32, #tpu.memory_space<vmem>>, vector<16x32xf32>,
    return
  }
  func.func @transform_0(%arg0: i32) -> (i32, i32) {
    %c0_i32 = arith.constant 0 : i32
    %c0_i32_0 = arith.constant 0 : i32
    return %arg0, %c0_i32 : i32, i32
  }
  func.func @transform_1(%arg0: i32) -> (i32, i32) {
    %c0_i32 = arith.constant 0 : i32
    %c0_i32_0 = arith.constant 0 : i32
    return %arg0, %c0_i32 : i32, i32
  }
  func.func @transform_2(%arg0: i32) -> (i32, i32) {
    %c0_i32 = arith.constant 0 : i32
    %c0_i32_0 = arith.constant 0 : i32
    %c0_i32_1 = arith.constant 0 : i32
    return %c0_i32, %c0_i32_0 : i32, i32
  }
  func.func @transform_3(%arg0: i32) -> (i32, i32) {
    %c0_i32 = arith.constant 0 : i32
    %c0_i32_0 = arith.constant 0 : i32
    %c0_i32_1 = arith.constant 0 : i32
    return %c0_i32, %c0_i32_0 : i32, i32
  }
  func.func @transform_4(%arg0: i32) -> (i32, i32) {
    %c0_i32 = arith.constant 0 : i32
    %c0_i32_0 = arith.constant 0 : i32
    %c0_i32_1 = arith.constant 0 : i32
    return %c0_i32, %c0_i32_0 : i32, i32
  }
  func.func @transform_5(%arg0: i32) -> (i32, i32) {
    %c0_i32 = arith.constant 0 : i32
    %c0_i32_0 = arith.constant 0 : i32
    %c0_i32_1 = arith.constant 0 : i32
    return %c0_i32, %c0_i32_0 : i32, i32
  }
  func.func @transform_6(%arg0: i32) -> (i32, i32) {
    %c0_i32 = arith.constant 0 : i32
    %c0_i32_0 = arith.constant 0 : i32
    %c0_i32_1 = arith.constant 0 : i32
    return %c0_i32, %c0_i32_0 : i32, i32
  }
  func.func @transform_7(%arg0: i32) -> (i32, i32) {
    %c0_i32 = arith.constant 0 : i32
    %c0_i32_0 = arith.constant 0 : i32
    %c0_i32_1 = arith.constant 0 : i32
    return %c0_i32, %c0_i32_0 : i32, i32
  }
  func.func @transform_8(%arg0: i32) -> (i32, i32) {
    %c0_i32 = arith.constant 0 : i32
    %c0_i32_0 = arith.constant 0 : i32
    %c0_i32_1 = arith.constant 0 : i32
    return %c0_i32, %c0_i32_0 : i32, i32
  }
  func.func @transform_9(%arg0: i32) -> (i32, i32) {
    %c0_i32 = arith.constant 0 : i32
    %c0_i32_0 = arith.constant 0 : i32
    %c0_i32_1 = arith.constant 0 : i32
    return %c0_i32, %c0_i32_0 : i32, i32
  }
  func.func @transform_10(%arg0: i32) -> (i32, i32) {
    %c0_i32 = arith.constant 0 : i32
    %c0_i32_0 = arith.constant 0 : i32
    return %arg0, %c0_i32 : i32, i32
  }
}

</mosaic_0001>

<llo_original>
// kernel: tpu_custom_call.1
$region0: #{tpu_custom_call.1}
  #allocation0 [shape = 'u32[]', space=smem, size = 0x4, offset = 0x4, fixed_abs, tag = 'smem constant byte address 0x4 - core index']
  #allocation1 [shape = 'u32[144,128]{1,0:T(1,128)}', space=vmem, size = 0x12000, scoped, tag = 'internal scratch']
  #allocation2 [shape = 'f32[16,32]{1,0:T(8,128)}', space=vmem, size = 0x2000, scoped, tag = 'scratch operand']
  %s0 = inlined_call_operand.hbm [shape: f32[16,32], index: 0, kind: input, shape index: {}]
  %s1 = inlined_call_operand.hbm [shape: f32[16,32], index: 1, kind: input, shape index: {}]
  %s2 = inlined_call_operand.vmem [shape: f32[1,32], index: 2, kind: input, shape index: {}]
  %s3 = inlined_call_operand.vmem [shape: f32[1,32], index: 3, kind: input, shape index: {}]
  %s4 = inlined_call_operand.hbm [shape: bf16[32,64], index: 4, kind: input, shape index: {}]
  %s5 = inlined_call_operand.vmem [shape: f32[1,64], index: 5, kind: input, shape index: {}]
  %s6 = inlined_call_operand.vmem [shape: bf16[32,32], index: 6, kind: input, shape index: {}]
  %s7 = inlined_call_operand.vmem [shape: f32[1,32], index: 7, kind: input, shape index: {}]
  %s8 = inlined_call_operand.hbm [shape: bf16[32,32], index: 8, kind: input, shape index: {}]
  %s9 = inlined_call_operand.vmem [shape: f32[1,32], index: 9, kind: input, shape index: {}]
  %s10 = inlined_call_operand.hbm [shape: f32[16,32], index: 10, kind: output, shape index: {}]
  %s11 = sld [smem:[#allocation0]]
  $region66: #{tpu_custom_call.1} parent=0
    _
  %s13 = ssub.s32 1, %s11
  %s14 = scalar_select 0, %s13, %s11
  $region1: #{tpu_custom_call.1} parent=0
    #allocation3 [shape = 'u8[8192]{0}', space=vmem, size = 0x2000, scoped, tag = 'input window, operand 0, single buffered']
    #allocation4 [shape = 's32[1]{0}', space=sflag, size = 0x4, scoped, tag = 'scoped memory for tpu_custom_call.1']
    #allocation5 [shape = 's32[1]{0}', space=sflag, size = 0x4, scoped, tag = 'scoped memory for tpu_custom_call.1']
    #allocation6 [shape = 'u8[8192]{0}', space=vmem, size = 0x2000, scoped, tag = 'input window, operand 1, single buffered']
    #allocation7 [shape = 's32[1]{0}', space=sflag, size = 0x4, scoped, tag = 'scoped memory for tpu_custom_call.1']
    #allocation8 [shape = 'u8[8192]{0}', space=vmem, size = 0x2000, scoped, tag = 'input window, operand 4, single buffered']
    #allocation9 [shape = 'u8[8192]{0}', space=vmem, size = 0x2000, scoped, tag = 'input window, operand 8, single buffered']
    #allocation10 [shape = 's32[1]{0}', space=sflag, size = 0x4, scoped, tag = 'scoped memory for tpu_custom_call.1']
    #allocation11 [shape = 'u8[8192]{0}', space=vmem, size = 0x2000, scoped, tag = 'output window, operand 0, single buffered']
    %15 = vsyncpa [#allocation4], 0
    %16 = vsyncpa [#allocation7], 0
    %17 = vsyncpa [#allocation10], 0
    %18 = vsyncpa [#allocation5], 0
    // Predicated region
    $region2: #{tpu_custom_call.1} parent=1 // pred_check
      _
    $region3: #{tpu_custom_call.1} parent=1 // pred_check_branch
      %20 = sbr.rel (0) target = $region5
    $region4: #{tpu_custom_call.1} parent=1 // pred_region
      %s22 = ssub.s32 256, 256
      %23 = vsyncadd [#allocation4], %s22
      %s24 = sshll.u32 [#allocation3], 4
      %s25 = int_to_ptr.vmem [resolvable:$true] %s24
      %30 = dma.hbm_to_vmem [thread:$0]  %s0, 256, %s25, [#allocation4], 128, 128, 8
    $region5: #{tpu_custom_call.1} parent=1 // pred_fallthru
      _
    // Predicated region
    $region6: #{tpu_custom_call.1} parent=1 // pred_check
      _
    $region7: #{tpu_custom_call.1} parent=1 // pred_check_branch
      %32 = sbr.rel (0) target = $region9
    $region8: #{tpu_custom_call.1} parent=1 // pred_region
      %s34 = ssub.s32 256, 256
      %35 = vsyncadd [#allocation7], %s34
      %s36 = sshll.u32 [#allocation6], 4
      %s37 = int_to_ptr.vmem [resolvable:$true] %s36
      %42 = dma.hbm_to_vmem [thread:$0]  %s1, 256, %s37, [#allocation7], 128, 128, 8
    $region9: #{tpu_custom_call.1} parent=1 // pred_fallthru
      _
    // Predicated region
    $region10: #{tpu_custom_call.1} parent=1 // pred_check
      _
    $region11: #{tpu_custom_call.1} parent=1 // pred_check_branch
      %44 = sbr.rel (0) target = $region13
    $region12: #{tpu_custom_call.1} parent=1 // pred_region
      _
    $region13: #{tpu_custom_call.1} parent=1 // pred_fallthru
      _
    // Predicated region
    $region14: #{tpu_custom_call.1} parent=1 // pred_check
      _
    $region15: #{tpu_custom_call.1} parent=1 // pred_check_branch
      %46 = sbr.rel (0) target = $region17
    $region16: #{tpu_custom_call.1} parent=1 // pred_region
      _
    $region17: #{tpu_custom_call.1} parent=1 // pred_fallthru
      _
    // Predicated region
    $region18: #{tpu_custom_call.1} parent=1 // pred_check
      _
    $region19: #{tpu_custom_call.1} parent=1 // pred_check_branch
      %48 = sbr.rel (0) target = $region21
    $region20: #{tpu_custom_call.1} parent=1 // pred_region
      %s50 = ssub.s32 256, 256
      %51 = vsyncadd [#allocation7], %s50
      %s52 = sshll.u32 [#allocation8], 4
      %s53 = int_to_ptr.vmem [resolvable:$true] %s52
      %58 = dma.hbm_to_vmem [thread:$0]  %s4, 256, %s53, [#allocation7], 64, 64, 4
    $region21: #{tpu_custom_call.1} parent=1 // pred_fallthru
      _
    // Predicated region
    $region22: #{tpu_custom_call.1} parent=1 // pred_check
      _
    $region23: #{tpu_custom_call.1} parent=1 // pred_check_branch
      %60 = sbr.rel (0) target = $region25
    $region24: #{tpu_custom_call.1} parent=1 // pred_region
      _
    $region25: #{tpu_custom_call.1} parent=1 // pred_fallthru
      _
    // Predicated region
    $region26: #{tpu_custom_call.1} parent=1 // pred_check
      _
    $region27: #{tpu_custom_call.1} parent=1 // pred_check_branch
      %62 = sbr.rel (0) target = $region29
    $region28: #{tpu_custom_call.1} parent=1 // pred_region
      _
    $region29: #{tpu_custom_call.1} parent=1 // pred_fallthru
      _
    // Predicated region
    $region30: #{tpu_custom_call.1} parent=1 // pred_check
      _
    $region31: #{tpu_custom_call.1} parent=1 // pred_check_branch
      %64 = sbr.rel (0) target = $region33
    $region32: #{tpu_custom_call.1} parent=1 // pred_region
      _
    $region33: #{tpu_custom_call.1} parent=1 // pred_fallthru
      _
    // Predicated region
    $region34: #{tpu_custom_call.1} parent=1 // pred_check
      _
    $region35: #{tpu_custom_call.1} parent=1 // pred_check_branch
      %66 = sbr.rel (0) target = $region37
    $region36: #{tpu_custom_call.1} parent=1 // pred_region
      %s68 = ssub.s32 256, 256
      %69 = vsyncadd [#allocation10], %s68
      %s70 = sshll.u32 [#allocation9], 4
      %s71 = int_to_ptr.vmem [resolvable:$true] %s70
      %76 = dma.hbm_to_vmem [thread:$0]  %s8, 256, %s71, [#allocation10], 64, 64, 4
    $region37: #{tpu_custom_call.1} parent=1 // pred_fallthru
      _
    // Predicated region
    $region38: #{tpu_custom_call.1} parent=1 // pred_check
      _
    $region39: #{tpu_custom_call.1} parent=1 // pred_check_branch
      %78 = sbr.rel (0) target = $region41
    $region40: #{tpu_custom_call.1} parent=1 // pred_region
      _
    $region41: #{tpu_custom_call.1} parent=1 // pred_fallthru
      _
    // Predicated region
    $region42: #{tpu_custom_call.1} parent=1 // pred_check
      _
    $region43: #{tpu_custom_call.1} parent=1 // pred_check_branch
      %80 = sbr.rel (0) target = $region45
    $region44: #{tpu_custom_call.1} parent=1 // pred_region
      %81 = dma.done [#allocation4], 256
    $region45: #{tpu_custom_call.1} parent=1 // pred_fallthru
      _
    // Predicated region
    $region46: #{tpu_custom_call.1} parent=1 // pred_check
      _
    $region47: #{tpu_custom_call.1} parent=1 // pred_check_branch
      %83 = sbr.rel (0) target = $region49
    $region48: #{tpu_custom_call.1} parent=1 // pred_region
      %84 = dma.done [#allocation7], 256
    $region49: #{tpu_custom_call.1} parent=1 // pred_fallthru
      _
    // Predicated region
    $region50: #{tpu_custom_call.1} parent=1 // pred_check
      _
    $region51: #{tpu_custom_call.1} parent=1 // pred_check_branch
      %86 = sbr.rel (0) target = $region53
    $region52: #{tpu_custom_call.1} parent=1 // pred_region
      %87 = dma.done [#allocation7], 256
    $region53: #{tpu_custom_call.1} parent=1 // pred_fallthru
      _
    // Predicated region
    $region54: #{tpu_custom_call.1} parent=1 // pred_check
      _
    $region55: #{tpu_custom_call.1} parent=1 // pred_check_branch
      %89 = sbr.rel (0) target = $region57
    $region56: #{tpu_custom_call.1} parent=1 // pred_region
      %90 = dma.done [#allocation10], 256
    $region57: #{tpu_custom_call.1} parent=1 // pred_fallthru
      _
    %v92 = vld [vmem:[#allocation3] sm:$0xff]
    %v93 = vld [vmem:[#allocation3 + $0x8] sm:$0xff]
    %v94 = vld [vmem:[%s2] sm:$0x1]
    %v95 = vld [vmem:[%s3] sm:$0x1]
    %vm96 = vcmask 261120
    %v97 = vsel %vm96, %v92, 0.0
    %98 = vadd.xlane.f32.xlu0 %v97
    %v99 = vpop.xlane.xlu0 %98
    %v100 = vsel %vm96, %v93, 0.0
    %101 = vadd.xlane.f32.xlu0 %v100
    %v102 = vpop.xlane.xlu0 %101
    %v103 = vrcp.pop 32.0
    %v104 = vmul.f32 %v99, %v103
    %v105 = vmul.f32 %v102, %v103
    %v106 = vsub.f32 %v92, %v104
    %v107 = vsub.f32 %v93, %v105
    %v108 = vmul.f32 %v106, %v106
    %v109 = vmul.f32 %v107, %v107
    %v110 = vsel %vm96, %v108, 0.0
    %111 = vadd.xlane.f32.xlu0 %v110
    %v112 = vpop.xlane.xlu0 %111
    %v113 = vsel %vm96, %v109, 0.0
    %114 = vadd.xlane.f32.xlu0 %v113
    %v115 = vpop.xlane.xlu0 %114
    %v116 = vmul.f32 %v112, %v103
    %v117 = vmul.f32 %v115, %v103
    %v118 = vadd.f32 %v116, 1e-05
    %v119 = vadd.f32 %v117, 1e-05
    %v120 = vrsqrt.pop %v118
    %v121 = vrsqrt.pop %v119
    %v122 = vmul.f32 %v106, %v120
    %v123 = vmul.f32 %v107, %v121
    %v125 = vlaneseq
    %v126 = vshrl.u32 %v125, 7
    %v127 = vsub.s32 0, %v126
    %v128 = vrot.slane %v94, %v127
    %v130 = vmul.f32 %v122, %v128
    %v131 = vmul.f32 %v123, %v128
    %v133 = vlaneseq
    %v134 = vshrl.u32 %v133, 7
    %v135 = vsub.s32 0, %v134
    %v136 = vrot.slane %v95, %v135
    %v138 = vadd.f32 %v130, %v136
    %v139 = vadd.f32 %v131, %v136
    %v140 = vld [vmem:[#allocation6] sm:$0xff]
    %v141 = vld [vmem:[#allocation6 + $0x8] sm:$0xff]
    %v142 = vadd.f32 %v138, %v140
    %v143 = vadd.f32 %v139, %v141
    %v144 = vpack.c.bf16 %v143, %v142
    %v145 = vld [vmem:[#allocation8] sm:$0xf]
    %v146 = vld [vmem:[#allocation8 + $0x4] sm:$0xf]
    %v147 = vld [vmem:[#allocation8 + $0x8] sm:$0xf]
    %v148 = vld [vmem:[#allocation8 + $0xc] sm:$0xf]
    %v149 = vld [vmem:[%s5] sm:$0x1]
    %v151 = vlaneseq
    %v152 = vshrl.u32 %v151, 7
    %v153 = vsub.s32 0, %v152
    %v154 = vrot.slane %v149, %v153
    %v160 = vunpack.c.l.b16 %v145
    %v161 = vunpack.c.l.b16 %v146
    %v162 = vunpack.c.l.b16 %v147
    %v163 = vunpack.c.l.b16 %v148
    %v164 = vpack.c.b16 %v161, %v160
    %v165 = vpack.c.b16 %v163, %v162
    %v169 = vsel %vm96, %v144, 0
    %171 = vmatprep.subr.bf16.mxu0 0
    %172 = vmatpush1.bf16.msra.mxu0 %v164
    %173 = vmatprep.subr.bf16.mxu0 0
    %174 = vmatpush1.bf16.msra.mxu0 %v165
    %175 = vmatprep.subr.bf16.mxu0 0
    %176 = vmatpush1.bf16.msra.mxu0 0
    %177 = vmatprep.subr.bf16.mxu0 0
    %178 = vmatpush1.bf16.msra.mxu0 0
    %179 = vmatprep.subr.bf16.mxu0 0
    %180 = vmatpush1.bf16.msra.mxu0 0
    %181 = vmatprep.subr.bf16.mxu0 0
    %182 = vmatpush1.bf16.msra.mxu0 0
    %183 = vmatprep.subr.bf16.mxu0 0
    %184 = vmatpush1.bf16.msra.mxu0 0
    %185 = vmatprep.subr.bf16.mxu0 0
    %186 = vmatpush1.bf16.msra.mxu0 0
    %187 = vmatprep.subr.bf16.mxu0 0
    %188 = vmatpush1.bf16.msra.mxu0 0
    %189 = vmatprep.subr.bf16.mxu0 0
    %190 = vmatpush1.bf16.msra.mxu0 0
    %191 = vmatprep.subr.bf16.mxu0 0
    %192 = vmatpush1.bf16.msra.mxu0 0
    %193 = vmatprep.subr.bf16.mxu0 0
    %194 = vmatpush1.bf16.msra.mxu0 0
    %195 = vmatprep.subr.bf16.mxu0 0
    %196 = vmatpush1.bf16.msra.mxu0 0
    %197 = vmatprep.subr.bf16.mxu0 0
    %198 = vmatpush1.bf16.msra.mxu0 0
    %199 = vmatprep.subr.bf16.mxu0 0
    %200 = vmatpush1.bf16.msra.mxu0 0
    %201 = vmatprep.subr.bf16.mxu0 0
    %202 = vmatpush1.bf16.msra.mxu0 0
    %203 = vmatprep.mubr.bf16.mxu0 0
    %204 = vmatmul.mubr.bf16.gmra.mrb[0].mxu0 %v169
    %v205 = vpop.f32.mrb[0].mxu0
    %v206 = vadd.f32 %v154, %v205
    %v207 = vpop.f32.mrb[0].mxu0
    %v208 = vpop.f32.mrb[0].mxu0
    %v209 = vadd.f32 %v154, %v208
    %v210 = vpop.f32.mrb[0].mxu0
    %211 = vdwg.mxu0
    %v212 = vmul.f32 %v206, 0.35355338
    %v213 = vmul.f32 %v209, 0.35355338
    %v214 = vpack.c.bf16 %v139, %v138
    %v215 = vld [vmem:[%s6] sm:$0xf]
    %v216 = vld [vmem:[%s6 + $0x4] sm:$0xf]
    %v217 = vld [vmem:[%s6 + $0x8] sm:$0xf]
    %v218 = vld [vmem:[%s6 + $0xc] sm:$0xf]
    %v219 = vld [vmem:[%s7] sm:$0x1]
    %v221 = vlaneseq
    %v222 = vshrl.u32 %v221, 7
    %v223 = vsub.s32 0, %v222
    %v224 = vrot.slane %v219, %v223
    %v230 = vunpack.c.l.b16 %v215
    %v231 = vunpack.c.l.b16 %v216
    %v232 = vunpack.c.l.b16 %v217
    %v233 = vunpack.c.l.b16 %v218
    %v234 = vpack.c.b16 %v231, %v230
    %v235 = vpack.c.b16 %v233, %v232
    %v239 = vsel %vm96, %v214, 0
    %241 = vmatprep.subr.bf16.mxu0 0
    %242 = vmatpush1.bf16.msra.mxu0 %v234
    %243 = vmatprep.subr.bf16.mxu0 0
    %244 = vmatpush1.bf16.msra.mxu0 %v235
    %245 = vmatprep.subr.bf16.mxu0 0
    %246 = vmatpush1.bf16.msra.mxu0 0
    %247 = vmatprep.subr.bf16.mxu0 0
    %248 = vmatpush1.bf16.msra.mxu0 0
    %249 = vmatprep.subr.bf16.mxu0 0
    %250 = vmatpush1.bf16.msra.mxu0 0
    %251 = vmatprep.subr.bf16.mxu0 0
    %252 = vmatpush1.bf16.msra.mxu0 0
    %253 = vmatprep.subr.bf16.mxu0 0
    %254 = vmatpush1.bf16.msra.mxu0 0
    %255 = vmatprep.subr.bf16.mxu0 0
    %256 = vmatpush1.bf16.msra.mxu0 0
    %257 = vmatprep.subr.bf16.mxu0 0
    %258 = vmatpush1.bf16.msra.mxu0 0
    %259 = vmatprep.subr.bf16.mxu0 0
    %260 = vmatpush1.bf16.msra.mxu0 0
    %261 = vmatprep.subr.bf16.mxu0 0
    %262 = vmatpush1.bf16.msra.mxu0 0
    %263 = vmatprep.subr.bf16.mxu0 0
    %264 = vmatpush1.bf16.msra.mxu0 0
    %265 = vmatprep.subr.bf16.mxu0 0
    %266 = vmatpush1.bf16.msra.mxu0 0
    %267 = vmatprep.subr.bf16.mxu0 0
    %268 = vmatpush1.bf16.msra.mxu0 0
    %269 = vmatprep.subr.bf16.mxu0 0
    %270 = vmatpush1.bf16.msra.mxu0 0
    %271 = vmatprep.subr.bf16.mxu0 0
    %272 = vmatpush1.bf16.msra.mxu0 0
    %273 = vmatprep.mubr.bf16.mxu0 0
    %274 = vmatmul.mubr.bf16.gmra.mrb[0].mxu0 %v239
    %v275 = vpop.f32.mrb[0].mxu0
    %v276 = vadd.f32 %v224, %v275
    %v277 = vpop.f32.mrb[0].mxu0
    %v278 = vpop.f32.mrb[0].mxu0
    %v279 = vadd.f32 %v224, %v278
    %v280 = vpop.f32.mrb[0].mxu0
    %281 = vdwg.mxu0
    %v282 = vpack.c.bf16 %v212, %v212
    %v283 = vpack.c.bf16 %v206, %v206
    %285 = vrot.lane.b32.xlu0 %v283, 96
    %v286 = vpop.permute.xlu0 %285
    %vm287 = vcmask 64512
    %v289 = vsel %vm287, %v282, 0
    %v292 = vsel %vm287, %v286, 0
    %294 = vmatprep.subr.bf16.mxu0 0
    %295 = vmatpush1.bf16.xpose.msra.mxu0 %v292
    %296 = vmatprep.subr.bf16.mxu0 0
    %297 = vmatpush1.bf16.xpose.msra.mxu0 0
    %298 = vmatprep.subr.bf16.mxu0 0
    %299 = vmatpush1.bf16.xpose.msra.mxu0 0
    %300 = vmatprep.subr.bf16.mxu0 0
    %301 = vmatpush1.bf16.xpose.msra.mxu0 0
    %302 = vmatprep.subr.bf16.mxu0 0
    %303 = vmatpush1.bf16.xpose.msra.mxu0 0
    %304 = vmatprep.subr.bf16.mxu0 0
    %305 = vmatpush1.bf16.xpose.msra.mxu0 0
    %306 = vmatprep.subr.bf16.mxu0 0
    %307 = vmatpush1.bf16.xpose.msra.mxu0 0
    %308 = vmatprep.subr.bf16.mxu0 0
    %309 = vmatpush1.bf16.xpose.msra.mxu0 0
    %310 = vmatprep.subr.bf16.mxu0 0
    %311 = vmatpush1.bf16.xpose.msra.mxu0 0
    %312 = vmatprep.subr.bf16.mxu0 0
    %313 = vmatpush1.bf16.xpose.msra.mxu0 0
    %314 = vmatprep.subr.bf16.mxu0 0
    %315 = vmatpush1.bf16.xpose.msra.mxu0 0
    %316 = vmatprep.subr.bf16.mxu0 0
    %317 = vmatpush1.bf16.xpose.msra.mxu0 0
    %318 = vmatprep.subr.bf16.mxu0 0
    %319 = vmatpush1.bf16.xpose.msra.mxu0 0
    %320 = vmatprep.subr.bf16.mxu0 0
    %321 = vmatpush1.bf16.xpose.msra.mxu0 0
    %322 = vmatprep.subr.bf16.mxu0 0
    %323 = vmatpush1.bf16.xpose.msra.mxu0 0
    %324 = vmatprep.subr.bf16.mxu0 0
    %325 = vmatpush1.bf16.xpose.msra.mxu0 0
    %326 = vmatprep.mubr.bf16.mxu0 0
    %327 = vmatmul.mubr.bf16.gmra.mrb[0].mxu0 %v289
    %v328 = vpop.f32.mrb[0].mxu0
    %v329 = vadd.f32 0.0, %v328
    %v330 = vpop.f32.mrb[0].mxu0
    %v331 = vpop.f32.mrb[0].mxu0
    %v332 = vpop.f32.mrb[0].mxu0
    %333 = vdwg.mxu0
    %v334 = vsel %vm287, %v329, -inf
    %335 = vmax.xlane.f32.xlu0 %v334
    %v336 = vpop.xlane.xlu0 %335
    %v337 = vsub.f32 %v329, %v336
    %v338 = vmul.f32 %v337, 1.442695
    %v339 = vpow.pop %v338
    %v340 = vsel %vm287, %v339, 0.0
    %341 = vadd.xlane.f32.xlu0 %v340
    %v342 = vpop.xlane.xlu0 %341
    %v343 = vrcp.pop %v342
    %v344 = vmul.f32 %v339, %v343
    %v345 = vpack.c.bf16 %v344, %v344
    %v346 = vpack.c.bf16 %v276, %v276
    %v348 = vsel %vm287, %v345, 0
    %vm350 = vcmask 1043456
    %v352 = vsel %vm350, %v346, 0
    %354 = vmatprep.subr.bf16.mxu0 0
    %355 = vmatpush1.bf16.msra.mxu0 %v352
    %356 = vmatprep.subr.bf16.mxu0 0
    %357 = vmatpush1.bf16.msra.mxu0 0
    %358 = vmatprep.subr.bf16.mxu0 0
    %359 = vmatpush1.bf16.msra.mxu0 0
    %360 = vmatprep.subr.bf16.mxu0 0
    %361 = vmatpush1.bf16.msra.mxu0 0
    %362 = vmatprep.subr.bf16.mxu0 0
    %363 = vmatpush1.bf16.msra.mxu0 0
    %364 = vmatprep.subr.bf16.mxu0 0
    %365 = vmatpush1.bf16.msra.mxu0 0
    %366 = vmatprep.subr.bf16.mxu0 0
    %367 = vmatpush1.bf16.msra.mxu0 0
    %368 = vmatprep.subr.bf16.mxu0 0
    %369 = vmatpush1.bf16.msra.mxu0 0
    %370 = vmatprep.subr.bf16.mxu0 0
    %371 = vmatpush1.bf16.msra.mxu0 0
    %372 = vmatprep.subr.bf16.mxu0 0
    %373 = vmatpush1.bf16.msra.mxu0 0
    %374 = vmatprep.subr.bf16.mxu0 0
    %375 = vmatpush1.bf16.msra.mxu0 0
    %376 = vmatprep.subr.bf16.mxu0 0
    %377 = vmatpush1.bf16.msra.mxu0 0
    %378 = vmatprep.subr.bf16.mxu0 0
    %379 = vmatpush1.bf16.msra.mxu0 0
    %380 = vmatprep.subr.bf16.mxu0 0
    %381 = vmatpush1.bf16.msra.mxu0 0
    %382 = vmatprep.subr.bf16.mxu0 0
    %383 = vmatpush1.bf16.msra.mxu0 0
    %384 = vmatprep.subr.bf16.mxu0 0
    %385 = vmatpush1.bf16.msra.mxu0 0
    %386 = vmatprep.mubr.bf16.mxu0 0
    %387 = vmatmul.mubr.bf16.gmra.mrb[0].mxu0 %v348
    %v388 = vpop.f32.mrb[0].mxu0
    %v389 = vadd.f32 0.0, %v388
    %v390 = vpop.f32.mrb[0].mxu0
    %v391 = vpop.f32.mrb[0].mxu0
    %v392 = vpop.f32.mrb[0].mxu0
    %393 = vdwg.mxu0
    %394 = vst.msk [vmem:[#allocation2] sm:$0xff] %vm287, %v389
    %396 = vrot.lane.b32.xlu0 %v282, 120
    %v397 = vpop.permute.xlu0 %396
    %398 = vrot.lane.b32.xlu0 %v283, 88
    %v399 = vpop.permute.xlu0 %398
    %v401 = vsel %vm287, %v397, 0
    %v404 = vsel %vm287, %v399, 0
    %406 = vmatprep.subr.bf16.mxu0 0
    %407 = vmatpush1.bf16.xpose.msra.mxu0 %v404
    %408 = vmatprep.subr.bf16.mxu0 0
    %409 = vmatpush1.bf16.xpose.msra.mxu0 0
    %410 = vmatprep.subr.bf16.mxu0 0
    %411 = vmatpush1.bf16.xpose.msra.mxu0 0
    %412 = vmatprep.subr.bf16.mxu0 0
    %413 = vmatpush1.bf16.xpose.msra.mxu0 0
    %414 = vmatprep.subr.bf16.mxu0 0
    %415 = vmatpush1.bf16.xpose.msra.mxu0 0
    %416 = vmatprep.subr.bf16.mxu0 0
    %417 = vmatpush1.bf16.xpose.msra.mxu0 0
    %418 = vmatprep.subr.bf16.mxu0 0
    %419 = vmatpush1.bf16.xpose.msra.mxu0 0
    %420 = vmatprep.subr.bf16.mxu0 0
    %421 = vmatpush1.bf16.xpose.msra.mxu0 0
    %422 = vmatprep.subr.bf16.mxu0 0
    %423 = vmatpush1.bf16.xpose.msra.mxu0 0
    %424 = vmatprep.subr.bf16.mxu0 0
    %425 = vmatpush1.bf16.xpose.msra.mxu0 0
    %426 = vmatprep.subr.bf16.mxu0 0
    %427 = vmatpush1.bf16.xpose.msra.mxu0 0
    %428 = vmatprep.subr.bf16.mxu0 0
    %429 = vmatpush1.bf16.xpose.msra.mxu0 0
    %430 = vmatprep.subr.bf16.mxu0 0
    %431 = vmatpush1.bf16.xpose.msra.mxu0 0
    %432 = vmatprep.subr.bf16.mxu0 0
    %433 = vmatpush1.bf16.xpose.msra.mxu0 0
    %434 = vmatprep.subr.bf16.mxu0 0
    %435 = vmatpush1.bf16.xpose.msra.mxu0 0
    %436 = vmatprep.subr.bf16.mxu0 0
    %437 = vmatpush1.bf16.xpose.msra.mxu0 0
    %438 = vmatprep.mubr.bf16.mxu0 0
    %439 = vmatmul.mubr.bf16.gmra.mrb[0].mxu0 %v401
    %v440 = vpop.f32.mrb[0].mxu0
    %v441 = vadd.f32 0.0, %v440
    %v442 = vpop.f32.mrb[0].mxu0
    %v443 = vpop.f32.mrb[0].mxu0
    %v444 = vpop.f32.mrb[0].mxu0
    %445 = vdwg.mxu0
    %v446 = vsel %vm287, %v441, -inf
    %447 = vmax.xlane.f32.xlu0 %v446
    %v448 = vpop.xlane.xlu0 %447
    %v449 = vsub.f32 %v441, %v448
    %v450 = vmul.f32 %v449, 1.442695
    %v451 = vpow.pop %v450
    %v452 = vsel %vm287, %v451, 0.0
    %453 = vadd.xlane.f32.xlu0 %v452
    %v454 = vpop.xlane.xlu0 %453
    %v455 = vrcp.pop %v454
    %v456 = vmul.f32 %v451, %v455
    %v457 = vpack.c.bf16 %v456, %v456
    %459 = vrot.lane.b32.xlu0 %v346, 120
    %v460 = vpop.permute.xlu0 %459
    %v462 = vsel %vm287, %v457, 0
    %v465 = vsel %vm350, %v460, 0
    %467 = vmatprep.subr.bf16.mxu0 0
    %468 = vmatpush1.bf16.msra.mxu0 %v465
    %469 = vmatprep.subr.bf16.mxu0 0
    %470 = vmatpush1.bf16.msra.mxu0 0
    %471 = vmatprep.subr.bf16.mxu0 0
    %472 = vmatpush1.bf16.msra.mxu0 0
    %473 = vmatprep.subr.bf16.mxu0 0
    %474 = vmatpush1.bf16.msra.mxu0 0
    %475 = vmatprep.subr.bf16.mxu0 0
    %476 = vmatpush1.bf16.msra.mxu0 0
    %477 = vmatprep.subr.bf16.mxu0 0
    %478 = vmatpush1.bf16.msra.mxu0 0
    %479 = vmatprep.subr.bf16.mxu0 0
    %480 = vmatpush1.bf16.msra.mxu0 0
    %481 = vmatprep.subr.bf16.mxu0 0
    %482 = vmatpush1.bf16.msra.mxu0 0
    %483 = vmatprep.subr.bf16.mxu0 0
    %484 = vmatpush1.bf16.msra.mxu0 0
    %485 = vmatprep.subr.bf16.mxu0 0
    %486 = vmatpush1.bf16.msra.mxu0 0
    %487 = vmatprep.subr.bf16.mxu0 0
    %488 = vmatpush1.bf16.msra.mxu0 0
    %489 = vmatprep.subr.bf16.mxu0 0
    %490 = vmatpush1.bf16.msra.mxu0 0
    %491 = vmatprep.subr.bf16.mxu0 0
    %492 = vmatpush1.bf16.msra.mxu0 0
    %493 = vmatprep.subr.bf16.mxu0 0
    %494 = vmatpush1.bf16.msra.mxu0 0
    %495 = vmatprep.subr.bf16.mxu0 0
    %496 = vmatpush1.bf16.msra.mxu0 0
    %497 = vmatprep.subr.bf16.mxu0 0
    %498 = vmatpush1.bf16.msra.mxu0 0
    %499 = vmatprep.mubr.bf16.mxu0 0
    %500 = vmatmul.mubr.bf16.gmra.mrb[0].mxu0 %v462
    %v501 = vpop.f32.mrb[0].mxu0
    %v502 = vadd.f32 0.0, %v501
    %v503 = vpop.f32.mrb[0].mxu0
    %v504 = vpop.f32.mrb[0].mxu0
    %v505 = vpop.f32.mrb[0].mxu0
    %506 = vdwg.mxu0
    %508 = vrot.lane.b32.xlu0 %v502, 8
    %v509 = vpop.permute.xlu0 %508
    %vm511 = vcmask 130112
    %512 = vst.msk [vmem:[#allocation2] sm:$0xff] %vm511, %v509
    %513 = vrot.lane.b32.xlu0 %v282, 112
    %v514 = vpop.permute.xlu0 %513
    %515 = vrot.lane.b32.xlu0 %v283, 80
    %v516 = vpop.permute.xlu0 %515
    %v518 = vsel %vm287, %v514, 0
    %v521 = vsel %vm287, %v516, 0
    %523 = vmatprep.subr.bf16.mxu0 0
    %524 = vmatpush1.bf16.xpose.msra.mxu0 %v521
    %525 = vmatprep.subr.bf16.mxu0 0
    %526 = vmatpush1.bf16.xpose.msra.mxu0 0
    %527 = vmatprep.subr.bf16.mxu0 0
    %528 = vmatpush1.bf16.xpose.msra.mxu0 0
    %529 = vmatprep.subr.bf16.mxu0 0
    %530 = vmatpush1.bf16.xpose.msra.mxu0 0
    %531 = vmatprep.subr.bf16.mxu0 0
    %532 = vmatpush1.bf16.xpose.msra.mxu0 0
    %533 = vmatprep.subr.bf16.mxu0 0
    %534 = vmatpush1.bf16.xpose.msra.mxu0 0
    %535 = vmatprep.subr.bf16.mxu0 0
    %536 = vmatpush1.bf16.xpose.msra.mxu0 0
    %537 = vmatprep.subr.bf16.mxu0 0
    %538 = vmatpush1.bf16.xpose.msra.mxu0 0
    %539 = vmatprep.subr.bf16.mxu0 0
    %540 = vmatpush1.bf16.xpose.msra.mxu0 0
    %541 = vmatprep.subr.bf16.mxu0 0
    %542 = vmatpush1.bf16.xpose.msra.mxu0 0
    %543 = vmatprep.subr.bf16.mxu0 0
    %544 = vmatpush1.bf16.xpose.msra.mxu0 0
    %545 = vmatprep.subr.bf16.mxu0 0
    %546 = vmatpush1.bf16.xpose.msra.mxu0 0
    %547 = vmatprep.subr.bf16.mxu0 0
    %548 = vmatpush1.bf16.xpose.msra.mxu0 0
    %549 = vmatprep.subr.bf16.mxu0 0
    %550 = vmatpush1.bf16.xpose.msra.mxu0 0
    %551 = vmatprep.subr.bf16.mxu0 0
    %552 = vmatpush1.bf16.xpose.msra.mxu0 0
    %553 = vmatprep.subr.bf16.mxu0 0
    %554 = vmatpush1.bf16.xpose.msra.mxu0 0
    %555 = vmatprep.mubr.bf16.mxu0 0
    %556 = vmatmul.mubr.bf16.gmra.mrb[0].mxu0 %v518
    %v557 = vpop.f32.mrb[0].mxu0
    %v558 = vadd.f32 0.0, %v557
    %v559 = vpop.f32.mrb[0].mxu0
    %v560 = vpop.f32.mrb[0].mxu0
    %v561 = vpop.f32.mrb[0].mxu0
    %562 = vdwg.mxu0
    %v563 = vsel %vm287, %v558, -inf
    %564 = vmax.xlane.f32.xlu0 %v563
    %v565 = vpop.xlane.xlu0 %564
    %v566 = vsub.f32 %v558, %v565
    %v567 = vmul.f32 %v566, 1.442695
    %v568 = vpow.pop %v567
    %v569 = vsel %vm287, %v568, 0.0
    %570 = vadd.xlane.f32.xlu0 %v569
    %v571 = vpop.xlane.xlu0 %570
    %v572 = vrcp.pop %v571
    %v573 = vmul.f32 %v568, %v572
    %v574 = vpack.c.bf16 %v573, %v573
    %575 = vrot.lane.b32.xlu0 %v346, 112
    %v576 = vpop.permute.xlu0 %575
    %v578 = vsel %vm287, %v574, 0
    %v581 = vsel %vm350, %v576, 0
    %583 = vmatprep.subr.bf16.mxu0 0
    %584 = vmatpush1.bf16.msra.mxu0 %v581
    %585 = vmatprep.subr.bf16.mxu0 0
    %586 = vmatpush1.bf16.msra.mxu0 0
    %587 = vmatprep.subr.bf16.mxu0 0
    %588 = vmatpush1.bf16.msra.mxu0 0
    %589 = vmatprep.subr.bf16.mxu0 0
    %590 = vmatpush1.bf16.msra.mxu0 0
    %591 = vmatprep.subr.bf16.mxu0 0
    %592 = vmatpush1.bf16.msra.mxu0 0
    %593 = vmatprep.subr.bf16.mxu0 0
    %594 = vmatpush1.bf16.msra.mxu0 0
    %595 = vmatprep.subr.bf16.mxu0 0
    %596 = vmatpush1.bf16.msra.mxu0 0
    %597 = vmatprep.subr.bf16.mxu0 0
    %598 = vmatpush1.bf16.msra.mxu0 0
    %599 = vmatprep.subr.bf16.mxu0 0
    %600 = vmatpush1.bf16.msra.mxu0 0
    %601 = vmatprep.subr.bf16.mxu0 0
    %602 = vmatpush1.bf16.msra.mxu0 0
    %603 = vmatprep.subr.bf16.mxu0 0
    %604 = vmatpush1.bf16.msra.mxu0 0
    %605 = vmatprep.subr.bf16.mxu0 0
    %606 = vmatpush1.bf16.msra.mxu0 0
    %607 = vmatprep.subr.bf16.mxu0 0
    %608 = vmatpush1.bf16.msra.mxu0 0
    %609 = vmatprep.subr.bf16.mxu0 0
    %610 = vmatpush1.bf16.msra.mxu0 0
    %611 = vmatprep.subr.bf16.mxu0 0
    %612 = vmatpush1.bf16.msra.mxu0 0
    %613 = vmatprep.subr.bf16.mxu0 0
    %614 = vmatpush1.bf16.msra.mxu0 0
    %615 = vmatprep.mubr.bf16.mxu0 0
    %616 = vmatmul.mubr.bf16.gmra.mrb[0].mxu0 %v578
    %v617 = vpop.f32.mrb[0].mxu0
    %v618 = vadd.f32 0.0, %v617
    %v619 = vpop.f32.mrb[0].mxu0
    %v620 = vpop.f32.mrb[0].mxu0
    %v621 = vpop.f32.mrb[0].mxu0
    %622 = vdwg.mxu0
    %624 = vrot.lane.b32.xlu0 %v618, 16
    %v625 = vpop.permute.xlu0 %624
    %vm627 = vcmask 195712
    %628 = vst.msk [vmem:[#allocation2] sm:$0xff] %vm627, %v625
    %629 = vrot.lane.b32.xlu0 %v282, 104
    %v630 = vpop.permute.xlu0 %629
    %631 = vrot.lane.b32.xlu0 %v283, 72
    %v632 = vpop.permute.xlu0 %631
    %v634 = vsel %vm287, %v630, 0
    %v637 = vsel %vm287, %v632, 0
    %639 = vmatprep.subr.bf16.mxu0 0
    %640 = vmatpush1.bf16.xpose.msra.mxu0 %v637
    %641 = vmatprep.subr.bf16.mxu0 0
    %642 = vmatpush1.bf16.xpose.msra.mxu0 0
    %643 = vmatprep.subr.bf16.mxu0 0
    %644 = vmatpush1.bf16.xpose.msra.mxu0 0
    %645 = vmatprep.subr.bf16.mxu0 0
    %646 = vmatpush1.bf16.xpose.msra.mxu0 0
    %647 = vmatprep.subr.bf16.mxu0 0
    %648 = vmatpush1.bf16.xpose.msra.mxu0 0
    %649 = vmatprep.subr.bf16.mxu0 0
    %650 = vmatpush1.bf16.xpose.msra.mxu0 0
    %651 = vmatprep.subr.bf16.mxu0 0
    %652 = vmatpush1.bf16.xpose.msra.mxu0 0
    %653 = vmatprep.subr.bf16.mxu0 0
    %654 = vmatpush1.bf16.xpose.msra.mxu0 0
    %655 = vmatprep.subr.bf16.mxu0 0
    %656 = vmatpush1.bf16.xpose.msra.mxu0 0
    %657 = vmatprep.subr.bf16.mxu0 0
    %658 = vmatpush1.bf16.xpose.msra.mxu0 0
    %659 = vmatprep.subr.bf16.mxu0 0
    %660 = vmatpush1.bf16.xpose.msra.mxu0 0
    %661 = vmatprep.subr.bf16.mxu0 0
    %662 = vmatpush1.bf16.xpose.msra.mxu0 0
    %663 = vmatprep.subr.bf16.mxu0 0
    %664 = vmatpush1.bf16.xpose.msra.mxu0 0
    %665 = vmatprep.subr.bf16.mxu0 0
    %666 = vmatpush1.bf16.xpose.msra.mxu0 0
    %667 = vmatprep.subr.bf16.mxu0 0
    %668 = vmatpush1.bf16.xpose.msra.mxu0 0
    %669 = vmatprep.subr.bf16.mxu0 0
    %670 = vmatpush1.bf16.xpose.msra.mxu0 0
    %671 = vmatprep.mubr.bf16.mxu0 0
    %672 = vmatmul.mubr.bf16.gmra.mrb[0].mxu0 %v634
    %v673 = vpop.f32.mrb[0].mxu0
    %v674 = vadd.f32 0.0, %v673
    %v675 = vpop.f32.mrb[0].mxu0
    %v676 = vpop.f32.mrb[0].mxu0
    %v677 = vpop.f32.mrb[0].mxu0
    %678 = vdwg.mxu0
    %v679 = vsel %vm287, %v674, -inf
    %680 = vmax.xlane.f32.xlu0 %v679
    %v681 = vpop.xlane.xlu0 %680
    %v682 = vsub.f32 %v674, %v681
    %v683 = vmul.f32 %v682, 1.442695
    %v684 = vpow.pop %v683
    %v685 = vsel %vm287, %v684, 0.0
    %686 = vadd.xlane.f32.xlu0 %v685
    %v687 = vpop.xlane.xlu0 %686
    %v688 = vrcp.pop %v687
    %v689 = vmul.f32 %v684, %v688
    %v690 = vpack.c.bf16 %v689, %v689
    %691 = vrot.lane.b32.xlu0 %v346, 104
    %v692 = vpop.permute.xlu0 %691
    %v694 = vsel %vm287, %v690, 0
    %v697 = vsel %vm350, %v692, 0
    %699 = vmatprep.subr.bf16.mxu0 0
    %700 = vmatpush1.bf16.msra.mxu0 %v697
    %701 = vmatprep.subr.bf16.mxu0 0
    %702 = vmatpush1.bf16.msra.mxu0 0
    %703 = vmatprep.subr.bf16.mxu0 0
    %704 = vmatpush1.bf16.msra.mxu0 0
    %705 = vmatprep.subr.bf16.mxu0 0
    %706 = vmatpush1.bf16.msra.mxu0 0
    %707 = vmatprep.subr.bf16.mxu0 0
    %708 = vmatpush1.bf16.msra.mxu0 0
    %709 = vmatprep.subr.bf16.mxu0 0
    %710 = vmatpush1.bf16.msra.mxu0 0
    %711 = vmatprep.subr.bf16.mxu0 0
    %712 = vmatpush1.bf16.msra.mxu0 0
    %713 = vmatprep.subr.bf16.mxu0 0
    %714 = vmatpush1.bf16.msra.mxu0 0
    %715 = vmatprep.subr.bf16.mxu0 0
    %716 = vmatpush1.bf16.msra.mxu0 0
    %717 = vmatprep.subr.bf16.mxu0 0
    %718 = vmatpush1.bf16.msra.mxu0 0
    %719 = vmatprep.subr.bf16.mxu0 0
    %720 = vmatpush1.bf16.msra.mxu0 0
    %721 = vmatprep.subr.bf16.mxu0 0
    %722 = vmatpush1.bf16.msra.mxu0 0
    %723 = vmatprep.subr.bf16.mxu0 0
    %724 = vmatpush1.bf16.msra.mxu0 0
    %725 = vmatprep.subr.bf16.mxu0 0
    %726 = vmatpush1.bf16.msra.mxu0 0
    %727 = vmatprep.subr.bf16.mxu0 0
    %728 = vmatpush1.bf16.msra.mxu0 0
    %729 = vmatprep.subr.bf16.mxu0 0
    %730 = vmatpush1.bf16.msra.mxu0 0
    %731 = vmatprep.mubr.bf16.mxu0 0
    %732 = vmatmul.mubr.bf16.gmra.mrb[0].mxu0 %v694
    %v733 = vpop.f32.mrb[0].mxu0
    %v734 = vadd.f32 0.0, %v733
    %v735 = vpop.f32.mrb[0].mxu0
    %v736 = vpop.f32.mrb[0].mxu0
    %v737 = vpop.f32.mrb[0].mxu0
    %738 = vdwg.mxu0
    %740 = vrot.lane.b32.xlu0 %v734, 24
    %v741 = vpop.permute.xlu0 %740
    %vm743 = vcmask 261312
    %744 = vst.msk [vmem:[#allocation2] sm:$0xff] %vm743, %v741
    %v745 = vpack.c.bf16 %v213, %v213
    %v746 = vpack.c.bf16 %v209, %v209
    %748 = vrot.lane.b32.xlu0 %v746, 96
    %v749 = vpop.permute.xlu0 %748
    %v751 = vsel %vm287, %v745, 0
    %v754 = vsel %vm287, %v749, 0
    %756 = vmatprep.subr.bf16.mxu0 0
    %757 = vmatpush1.bf16.xpose.msra.mxu0 %v754
    %758 = vmatprep.subr.bf16.mxu0 0
    %759 = vmatpush1.bf16.xpose.msra.mxu0 0
    %760 = vmatprep.subr.bf16.mxu0 0
    %761 = vmatpush1.bf16.xpose.msra.mxu0 0
    %762 = vmatprep.subr.bf16.mxu0 0
    %763 = vmatpush1.bf16.xpose.msra.mxu0 0
    %764 = vmatprep.subr.bf16.mxu0 0
    %765 = vmatpush1.bf16.xpose.msra.mxu0 0
    %766 = vmatprep.subr.bf16.mxu0 0
    %767 = vmatpush1.bf16.xpose.msra.mxu0 0
    %768 = vmatprep.subr.bf16.mxu0 0
    %769 = vmatpush1.bf16.xpose.msra.mxu0 0
    %770 = vmatprep.subr.bf16.mxu0 0
    %771 = vmatpush1.bf16.xpose.msra.mxu0 0
    %772 = vmatprep.subr.bf16.mxu0 0
    %773 = vmatpush1.bf16.xpose.msra.mxu0 0
    %774 = vmatprep.subr.bf16.mxu0 0
    %775 = vmatpush1.bf16.xpose.msra.mxu0 0
    %776 = vmatprep.subr.bf16.mxu0 0
    %777 = vmatpush1.bf16.xpose.msra.mxu0 0
    %778 = vmatprep.subr.bf16.mxu0 0
    %779 = vmatpush1.bf16.xpose.msra.mxu0 0
    %780 = vmatprep.subr.bf16.mxu0 0
    %781 = vmatpush1.bf16.xpose.msra.mxu0 0
    %782 = vmatprep.subr.bf16.mxu0 0
    %783 = vmatpush1.bf16.xpose.msra.mxu0 0
    %784 = vmatprep.subr.bf16.mxu0 0
    %785 = vmatpush1.bf16.xpose.msra.mxu0 0
    %786 = vmatprep.subr.bf16.mxu0 0
    %787 = vmatpush1.bf16.xpose.msra.mxu0 0
    %788 = vmatprep.mubr.bf16.mxu0 0
    %789 = vmatmul.mubr.bf16.gmra.mrb[0].mxu0 %v751
    %v790 = vpop.f32.mrb[0].mxu0
    %v791 = vadd.f32 0.0, %v790
    %v792 = vpop.f32.mrb[0].mxu0
    %v793 = vpop.f32.mrb[0].mxu0
    %v794 = vpop.f32.mrb[0].mxu0
    %795 = vdwg.mxu0
    %v796 = vsel %vm287, %v791, -inf
    %797 = vmax.xlane.f32.xlu0 %v796
    %v798 = vpop.xlane.xlu0 %797
    %v799 = vsub.f32 %v791, %v798
    %v800 = vmul.f32 %v799, 1.442695
    %v801 = vpow.pop %v800
    %v802 = vsel %vm287, %v801, 0.0
    %803 = vadd.xlane.f32.xlu0 %v802
    %v804 = vpop.xlane.xlu0 %803
    %v805 = vrcp.pop %v804
    %v806 = vmul.f32 %v801, %v805
    %v807 = vpack.c.bf16 %v806, %v806
    %v808 = vpack.c.bf16 %v279, %v279
    %v810 = vsel %vm287, %v807, 0
    %v813 = vsel %vm350, %v808, 0
    %815 = vmatprep.subr.bf16.mxu0 0
    %816 = vmatpush1.bf16.msra.mxu0 %v813
    %817 = vmatprep.subr.bf16.mxu0 0
    %818 = vmatpush1.bf16.msra.mxu0 0
    %819 = vmatprep.subr.bf16.mxu0 0
    %820 = vmatpush1.bf16.msra.mxu0 0
    %821 = vmatprep.subr.bf16.mxu0 0
    %822 = vmatpush1.bf16.msra.mxu0 0
    %823 = vmatprep.subr.bf16.mxu0 0
    %824 = vmatpush1.bf16.msra.mxu0 0
    %825 = vmatprep.subr.bf16.mxu0 0
    %826 = vmatpush1.bf16.msra.mxu0 0
    %827 = vmatprep.subr.bf16.mxu0 0
    %828 = vmatpush1.bf16.msra.mxu0 0
    %829 = vmatprep.subr.bf16.mxu0 0
    %830 = vmatpush1.bf16.msra.mxu0 0
    %831 = vmatprep.subr.bf16.mxu0 0
    %832 = vmatpush1.bf16.msra.mxu0 0
    %833 = vmatprep.subr.bf16.mxu0 0
    %834 = vmatpush1.bf16.msra.mxu0 0
    %835 = vmatprep.subr.bf16.mxu0 0
    %836 = vmatpush1.bf16.msra.mxu0 0
    %837 = vmatprep.subr.bf16.mxu0 0
    %838 = vmatpush1.bf16.msra.mxu0 0
    %839 = vmatprep.subr.bf16.mxu0 0
    %840 = vmatpush1.bf16.msra.mxu0 0
    %841 = vmatprep.subr.bf16.mxu0 0
    %842 = vmatpush1.bf16.msra.mxu0 0
    %843 = vmatprep.subr.bf16.mxu0 0
    %844 = vmatpush1.bf16.msra.mxu0 0
    %845 = vmatprep.subr.bf16.mxu0 0
    %846 = vmatpush1.bf16.msra.mxu0 0
    %847 = vmatprep.mubr.bf16.mxu0 0
    %848 = vmatmul.mubr.bf16.gmra.mrb[0].mxu0 %v810
    %v849 = vpop.f32.mrb[0].mxu0
    %v850 = vadd.f32 0.0, %v849
    %v851 = vpop.f32.mrb[0].mxu0
    %v852 = vpop.f32.mrb[0].mxu0
    %v853 = vpop.f32.mrb[0].mxu0
    %854 = vdwg.mxu0
    %855 = vst.msk [vmem:[#allocation2 + $0x8] sm:$0xff] %vm287, %v850
    %857 = vrot.lane.b32.xlu0 %v745, 120
    %v858 = vpop.permute.xlu0 %857
    %859 = vrot.lane.b32.xlu0 %v746, 88
    %v860 = vpop.permute.xlu0 %859
    %v862 = vsel %vm287, %v858, 0
    %v865 = vsel %vm287, %v860, 0
    %867 = vmatprep.subr.bf16.mxu0 0
    %868 = vmatpush1.bf16.xpose.msra.mxu0 %v865
    %869 = vmatprep.subr.bf16.mxu0 0
    %870 = vmatpush1.bf16.xpose.msra.mxu0 0
    %871 = vmatprep.subr.bf16.mxu0 0
    %872 = vmatpush1.bf16.xpose.msra.mxu0 0
    %873 = vmatprep.subr.bf16.mxu0 0
    %874 = vmatpush1.bf16.xpose.msra.mxu0 0
    %875 = vmatprep.subr.bf16.mxu0 0
    %876 = vmatpush1.bf16.xpose.msra.mxu0 0
    %877 = vmatprep.subr.bf16.mxu0 0
    %878 = vmatpush1.bf16.xpose.msra.mxu0 0
    %879 = vmatprep.subr.bf16.mxu0 0
    %880 = vmatpush1.bf16.xpose.msra.mxu0 0
    %881 = vmatprep.subr.bf16.mxu0 0
    %882 = vmatpush1.bf16.xpose.msra.mxu0 0
    %883 = vmatprep.subr.bf16.mxu0 0
    %884 = vmatpush1.bf16.xpose.msra.mxu0 0
    %885 = vmatprep.subr.bf16.mxu0 0
    %886 = vmatpush1.bf16.xpose.msra.mxu0 0
    %887 = vmatprep.subr.bf16.mxu0 0
    %888 = vmatpush1.bf16.xpose.msra.mxu0 0
    %889 = vmatprep.subr.bf16.mxu0 0
    %890 = vmatpush1.bf16.xpose.msra.mxu0 0
    %891 = vmatprep.subr.bf16.mxu0 0
    %892 = vmatpush1.bf16.xpose.msra.mxu0 0
    %893 = vmatprep.subr.bf16.mxu0 0
    %894 = vmatpush1.bf16.xpose.msra.mxu0 0
    %895 = vmatprep.subr.bf16.mxu0 0
    %896 = vmatpush1.bf16.xpose.msra.mxu0 0
    %897 = vmatprep.subr.bf16.mxu0 0
    %898 = vmatpush1.bf16.xpose.msra.mxu0 0
    %899 = vmatprep.mubr.bf16.mxu0 0
    %900 = vmatmul.mubr.bf16.gmra.mrb[0].mxu0 %v862
    %v901 = vpop.f32.mrb[0].mxu0
    %v902 = vadd.f32 0.0, %v901
    %v903 = vpop.f32.mrb[0].mxu0
    %v904 = vpop.f32.mrb[0].mxu0
    %v905 = vpop.f32.mrb[0].mxu0
    %906 = vdwg.mxu0
    %v907 = vsel %vm287, %v902, -inf
    %908 = vmax.xlane.f32.xlu0 %v907
    %v909 = vpop.xlane.xlu0 %908
    %v910 = vsub.f32 %v902, %v909
    %v911 = vmul.f32 %v910, 1.442695
    %v912 = vpow.pop %v911
    %v913 = vsel %vm287, %v912, 0.0
    %914 = vadd.xlane.f32.xlu0 %v913
    %v915 = vpop.xlane.xlu0 %914
    %v916 = vrcp.pop %v915
    %v917 = vmul.f32 %v912, %v916
    %v918 = vpack.c.bf16 %v917, %v917
    %920 = vrot.lane.b32.xlu0 %v808, 120
    %v921 = vpop.permute.xlu0 %920
    %v923 = vsel %vm287, %v918, 0
    %v926 = vsel %vm350, %v921, 0
    %928 = vmatprep.subr.bf16.mxu0 0
    %929 = vmatpush1.bf16.msra.mxu0 %v926
    %930 = vmatprep.subr.bf16.mxu0 0
    %931 = vmatpush1.bf16.msra.mxu0 0
    %932 = vmatprep.subr.bf16.mxu0 0
    %933 = vmatpush1.bf16.msra.mxu0 0
    %934 = vmatprep.subr.bf16.mxu0 0
    %935 = vmatpush1.bf16.msra.mxu0 0
    %936 = vmatprep.subr.bf16.mxu0 0
    %937 = vmatpush1.bf16.msra.mxu0 0
    %938 = vmatprep.subr.bf16.mxu0 0
    %939 = vmatpush1.bf16.msra.mxu0 0
    %940 = vmatprep.subr.bf16.mxu0 0
    %941 = vmatpush1.bf16.msra.mxu0 0
    %942 = vmatprep.subr.bf16.mxu0 0
    %943 = vmatpush1.bf16.msra.mxu0 0
    %944 = vmatprep.subr.bf16.mxu0 0
    %945 = vmatpush1.bf16.msra.mxu0 0
    %946 = vmatprep.subr.bf16.mxu0 0
    %947 = vmatpush1.bf16.msra.mxu0 0
    %948 = vmatprep.subr.bf16.mxu0 0
    %949 = vmatpush1.bf16.msra.mxu0 0
    %950 = vmatprep.subr.bf16.mxu0 0
    %951 = vmatpush1.bf16.msra.mxu0 0
    %952 = vmatprep.subr.bf16.mxu0 0
    %953 = vmatpush1.bf16.msra.mxu0 0
    %954 = vmatprep.subr.bf16.mxu0 0
    %955 = vmatpush1.bf16.msra.mxu0 0
    %956 = vmatprep.subr.bf16.mxu0 0
    %957 = vmatpush1.bf16.msra.mxu0 0
    %958 = vmatprep.subr.bf16.mxu0 0
    %959 = vmatpush1.bf16.msra.mxu0 0
    %960 = vmatprep.mubr.bf16.mxu0 0
    %961 = vmatmul.mubr.bf16.gmra.mrb[0].mxu0 %v923
    %v962 = vpop.f32.mrb[0].mxu0
    %v963 = vadd.f32 0.0, %v962
    %v964 = vpop.f32.mrb[0].mxu0
    %v965 = vpop.f32.mrb[0].mxu0
    %v966 = vpop.f32.mrb[0].mxu0
    %967 = vdwg.mxu0
    %969 = vrot.lane.b32.xlu0 %v963, 8
    %v970 = vpop.permute.xlu0 %969
    %972 = vst.msk [vmem:[#allocation2 + $0x8] sm:$0xff] %vm511, %v970
    %973 = vrot.lane.b32.xlu0 %v745, 112
    %v974 = vpop.permute.xlu0 %973
    %975 = vrot.lane.b32.xlu0 %v746, 80
    %v976 = vpop.permute.xlu0 %975
    %v978 = vsel %vm287, %v974, 0
    %v981 = vsel %vm287, %v976, 0
    %983 = vmatprep.subr.bf16.mxu0 0
    %984 = vmatpush1.bf16.xpose.msra.mxu0 %v981
    %985 = vmatprep.subr.bf16.mxu0 0
    %986 = vmatpush1.bf16.xpose.msra.mxu0 0
    %987 = vmatprep.subr.bf16.mxu0 0
    %988 = vmatpush1.bf16.xpose.msra.mxu0 0
    %989 = vmatprep.subr.bf16.mxu0 0
    %990 = vmatpush1.bf16.xpose.msra.mxu0 0
    %991 = vmatprep.subr.bf16.mxu0 0
    %992 = vmatpush1.bf16.xpose.msra.mxu0 0
    %993 = vmatprep.subr.bf16.mxu0 0
    %994 = vmatpush1.bf16.xpose.msra.mxu0 0
    %995 = vmatprep.subr.bf16.mxu0 0
    %996 = vmatpush1.bf16.xpose.msra.mxu0 0
    %997 = vmatprep.subr.bf16.mxu0 0
    %998 = vmatpush1.bf16.xpose.msra.mxu0 0
    %999 = vmatprep.subr.bf16.mxu0 0
    %1000 = vmatpush1.bf16.xpose.msra.mxu0 0
    %1001 = vmatprep.subr.bf16.mxu0 0
    %1002 = vmatpush1.bf16.xpose.msra.mxu0 0
    %1003 = vmatprep.subr.bf16.mxu0 0
    %1004 = vmatpush1.bf16.xpose.msra.mxu0 0
    %1005 = vmatprep.subr.bf16.mxu0 0
    %1006 = vmatpush1.bf16.xpose.msra.mxu0 0
    %1007 = vmatprep.subr.bf16.mxu0 0
    %1008 = vmatpush1.bf16.xpose.msra.mxu0 0
    %1009 = vmatprep.subr.bf16.mxu0 0
    %1010 = vmatpush1.bf16.xpose.msra.mxu0 0
    %1011 = vmatprep.subr.bf16.mxu0 0
    %1012 = vmatpush1.bf16.xpose.msra.mxu0 0
    %1013 = vmatprep.subr.bf16.mxu0 0
    %1014 = vmatpush1.bf16.xpose.msra.mxu0 0
    %1015 = vmatprep.mubr.bf16.mxu0 0
    %1016 = vmatmul.mubr.bf16.gmra.mrb[0].mxu0 %v978
    %v1017 = vpop.f32.mrb[0].mxu0
    %v1018 = vadd.f32 0.0, %v1017
    %v1019 = vpop.f32.mrb[0].mxu0
    %v1020 = vpop.f32.mrb[0].mxu0
    %v1021 = vpop.f32.mrb[0].mxu0
    %1022 = vdwg.mxu0
    %v1023 = vsel %vm287, %v1018, -inf
    %1024 = vmax.xlane.f32.xlu0 %v1023
    %v1025 = vpop.xlane.xlu0 %1024
    %v1026 = vsub.f32 %v1018, %v1025
    %v1027 = vmul.f32 %v1026, 1.442695
    %v1028 = vpow.pop %v1027
    %v1029 = vsel %vm287, %v1028, 0.0
    %1030 = vadd.xlane.f32.xlu0 %v1029
    %v1031 = vpop.xlane.xlu0 %1030
    %v1032 = vrcp.pop %v1031
    %v1033 = vmul.f32 %v1028, %v1032
    %v1034 = vpack.c.bf16 %v1033, %v1033
    %1035 = vrot.lane.b32.xlu0 %v808, 112
    %v1036 = vpop.permute.xlu0 %1035
    %v1038 = vsel %vm287, %v1034, 0
    %v1041 = vsel %vm350, %v1036, 0
    %1043 = vmatprep.subr.bf16.mxu0 0
    %1044 = vmatpush1.bf16.msra.mxu0 %v1041
    %1045 = vmatprep.subr.bf16.mxu0 0
    %1046 = vmatpush1.bf16.msra.mxu0 0
    %1047 = vmatprep.subr.bf16.mxu0 0
    %1048 = vmatpush1.bf16.msra.mxu0 0
    %1049 = vmatprep.subr.bf16.mxu0 0
    %1050 = vmatpush1.bf16.msra.mxu0 0
    %1051 = vmatprep.subr.bf16.mxu0 0
    %1052 = vmatpush1.bf16.msra.mxu0 0
    %1053 = vmatprep.subr.bf16.mxu0 0
    %1054 = vmatpush1.bf16.msra.mxu0 0
    %1055 = vmatprep.subr.bf16.mxu0 0
    %1056 = vmatpush1.bf16.msra.mxu0 0
    %1057 = vmatprep.subr.bf16.mxu0 0
    %1058 = vmatpush1.bf16.msra.mxu0 0
    %1059 = vmatprep.subr.bf16.mxu0 0
    %1060 = vmatpush1.bf16.msra.mxu0 0
    %1061 = vmatprep.subr.bf16.mxu0 0
    %1062 = vmatpush1.bf16.msra.mxu0 0
    %1063 = vmatprep.subr.bf16.mxu0 0
    %1064 = vmatpush1.bf16.msra.mxu0 0
    %1065 = vmatprep.subr.bf16.mxu0 0
    %1066 = vmatpush1.bf16.msra.mxu0 0
    %1067 = vmatprep.subr.bf16.mxu0 0
    %1068 = vmatpush1.bf16.msra.mxu0 0
    %1069 = vmatprep.subr.bf16.mxu0 0
    %1070 = vmatpush1.bf16.msra.mxu0 0
    %1071 = vmatprep.subr.bf16.mxu0 0
    %1072 = vmatpush1.bf16.msra.mxu0 0
    %1073 = vmatprep.subr.bf16.mxu0 0
    %1074 = vmatpush1.bf16.msra.mxu0 0
    %1075 = vmatprep.mubr.bf16.mxu0 0
    %1076 = vmatmul.mubr.bf16.gmra.mrb[0].mxu0 %v1038
    %v1077 = vpop.f32.mrb[0].mxu0
    %v1078 = vadd.f32 0.0, %v1077
    %v1079 = vpop.f32.mrb[0].mxu0
    %v1080 = vpop.f32.mrb[0].mxu0
    %v1081 = vpop.f32.mrb[0].mxu0
    %1082 = vdwg.mxu0
    %1084 = vrot.lane.b32.xlu0 %v1078, 16
    %v1085 = vpop.permute.xlu0 %1084
    %1087 = vst.msk [vmem:[#allocation2 + $0x8] sm:$0xff] %vm627, %v1085
    %1088 = vrot.lane.b32.xlu0 %v745, 104
    %v1089 = vpop.permute.xlu0 %1088
    %1090 = vrot.lane.b32.xlu0 %v746, 72
    %v1091 = vpop.permute.xlu0 %1090
    %v1093 = vsel %vm287, %v1089, 0
    %v1096 = vsel %vm287, %v1091, 0
    %1098 = vmatprep.subr.bf16.mxu0 0
    %1099 = vmatpush1.bf16.xpose.msra.mxu0 %v1096
    %1100 = vmatprep.subr.bf16.mxu0 0
    %1101 = vmatpush1.bf16.xpose.msra.mxu0 0
    %1102 = vmatprep.subr.bf16.mxu0 0
    %1103 = vmatpush1.bf16.xpose.msra.mxu0 0
    %1104 = vmatprep.subr.bf16.mxu0 0
    %1105 = vmatpush1.bf16.xpose.msra.mxu0 0
    %1106 = vmatprep.subr.bf16.mxu0 0
    %1107 = vmatpush1.bf16.xpose.msra.mxu0 0
    %1108 = vmatprep.subr.bf16.mxu0 0
    %1109 = vmatpush1.bf16.xpose.msra.mxu0 0
    %1110 = vmatprep.subr.bf16.mxu0 0
    %1111 = vmatpush1.bf16.xpose.msra.mxu0 0
    %1112 = vmatprep.subr.bf16.mxu0 0
    %1113 = vmatpush1.bf16.xpose.msra.mxu0 0
    %1114 = vmatprep.subr.bf16.mxu0 0
    %1115 = vmatpush1.bf16.xpose.msra.mxu0 0
    %1116 = vmatprep.subr.bf16.mxu0 0
    %1117 = vmatpush1.bf16.xpose.msra.mxu0 0
    %1118 = vmatprep.subr.bf16.mxu0 0
    %1119 = vmatpush1.bf16.xpose.msra.mxu0 0
    %1120 = vmatprep.subr.bf16.mxu0 0
    %1121 = vmatpush1.bf16.xpose.msra.mxu0 0
    %1122 = vmatprep.subr.bf16.mxu0 0
    %1123 = vmatpush1.bf16.xpose.msra.mxu0 0
    %1124 = vmatprep.subr.bf16.mxu0 0
    %1125 = vmatpush1.bf16.xpose.msra.mxu0 0
    %1126 = vmatprep.subr.bf16.mxu0 0
    %1127 = vmatpush1.bf16.xpose.msra.mxu0 0
    %1128 = vmatprep.subr.bf16.mxu0 0
    %1129 = vmatpush1.bf16.xpose.msra.mxu0 0
    %1130 = vmatprep.mubr.bf16.mxu0 0
    %1131 = vmatmul.mubr.bf16.gmra.mrb[0].mxu0 %v1093
    %v1132 = vpop.f32.mrb[0].mxu0
    %v1133 = vadd.f32 0.0, %v1132
    %v1134 = vpop.f32.mrb[0].mxu0
    %v1135 = vpop.f32.mrb[0].mxu0
    %v1136 = vpop.f32.mrb[0].mxu0
    %1137 = vdwg.mxu0
    %v1138 = vsel %vm287, %v1133, -inf
    %1139 = vmax.xlane.f32.xlu0 %v1138
    %v1140 = vpop.xlane.xlu0 %1139
    %v1141 = vsub.f32 %v1133, %v1140
    %v1142 = vmul.f32 %v1141, 1.442695
    %v1143 = vpow.pop %v1142
    %v1144 = vsel %vm287, %v1143, 0.0
    %1145 = vadd.xlane.f32.xlu0 %v1144
    %v1146 = vpop.xlane.xlu0 %1145
    %v1147 = vrcp.pop %v1146
    %v1148 = vmul.f32 %v1143, %v1147
    %v1149 = vpack.c.bf16 %v1148, %v1148
    %1150 = vrot.lane.b32.xlu0 %v808, 104
    %v1151 = vpop.permute.xlu0 %1150
    %v1153 = vsel %vm287, %v1149, 0
    %v1156 = vsel %vm350, %v1151, 0
    %1158 = vmatprep.subr.bf16.mxu0 0
    %1159 = vmatpush1.bf16.msra.mxu0 %v1156
    %1160 = vmatprep.subr.bf16.mxu0 0
    %1161 = vmatpush1.bf16.msra.mxu0 0
    %1162 = vmatprep.subr.bf16.mxu0 0
    %1163 = vmatpush1.bf16.msra.mxu0 0
    %1164 = vmatprep.subr.bf16.mxu0 0
    %1165 = vmatpush1.bf16.msra.mxu0 0
    %1166 = vmatprep.subr.bf16.mxu0 0
    %1167 = vmatpush1.bf16.msra.mxu0 0
    %1168 = vmatprep.subr.bf16.mxu0 0
    %1169 = vmatpush1.bf16.msra.mxu0 0
    %1170 = vmatprep.subr.bf16.mxu0 0
    %1171 = vmatpush1.bf16.msra.mxu0 0
    %1172 = vmatprep.subr.bf16.mxu0 0
    %1173 = vmatpush1.bf16.msra.mxu0 0
    %1174 = vmatprep.subr.bf16.mxu0 0
    %1175 = vmatpush1.bf16.msra.mxu0 0
    %1176 = vmatprep.subr.bf16.mxu0 0
    %1177 = vmatpush1.bf16.msra.mxu0 0
    %1178 = vmatprep.subr.bf16.mxu0 0
    %1179 = vmatpush1.bf16.msra.mxu0 0
    %1180 = vmatprep.subr.bf16.mxu0 0
    %1181 = vmatpush1.bf16.msra.mxu0 0
    %1182 = vmatprep.subr.bf16.mxu0 0
    %1183 = vmatpush1.bf16.msra.mxu0 0
    %1184 = vmatprep.subr.bf16.mxu0 0
    %1185 = vmatpush1.bf16.msra.mxu0 0
    %1186 = vmatprep.subr.bf16.mxu0 0
    %1187 = vmatpush1.bf16.msra.mxu0 0
    %1188 = vmatprep.subr.bf16.mxu0 0
    %1189 = vmatpush1.bf16.msra.mxu0 0
    %1190 = vmatprep.mubr.bf16.mxu0 0
    %1191 = vmatmul.mubr.bf16.gmra.mrb[0].mxu0 %v1153
    %v1192 = vpop.f32.mrb[0].mxu0
    %v1193 = vadd.f32 0.0, %v1192
    %v1194 = vpop.f32.mrb[0].mxu0
    %v1195 = vpop.f32.mrb[0].mxu0
    %v1196 = vpop.f32.mrb[0].mxu0
    %1197 = vdwg.mxu0
    %1199 = vrot.lane.b32.xlu0 %v1193, 24
    %v1200 = vpop.permute.xlu0 %1199
    %1202 = vst.msk [vmem:[#allocation2 + $0x8] sm:$0xff] %vm743, %v1200
    %v1203 = vld [vmem:[#allocation2] sm:$0xff]
    %v1204 = vld [vmem:[#allocation2 + $0x8] sm:$0xff]
    %v1205 = vpack.c.bf16 %v1204, %v1203
    %v1206 = vld [vmem:[#allocation9] sm:$0xf]
    %v1207 = vld [vmem:[#allocation9 + $0x4] sm:$0xf]
    %v1208 = vld [vmem:[#allocation9 + $0x8] sm:$0xf]
    %v1209 = vld [vmem:[#allocation9 + $0xc] sm:$0xf]
    %v1210 = vld [vmem:[%s9] sm:$0x1]
    %v1212 = vlaneseq
    %v1213 = vshrl.u32 %v1212, 7
    %v1214 = vsub.s32 0, %v1213
    %v1215 = vrot.slane %v1210, %v1214
    %v1221 = vunpack.c.l.b16 %v1206
    %v1222 = vunpack.c.l.b16 %v1207
    %v1223 = vunpack.c.l.b16 %v1208
    %v1224 = vunpack.c.l.b16 %v1209
    %v1225 = vpack.c.b16 %v1222, %v1221
    %v1226 = vpack.c.b16 %v1224, %v1223
    %v1230 = vsel %vm96, %v1205, 0
    %1232 = vmatprep.subr.bf16.mxu0 0
    %1233 = vmatpush1.bf16.msra.mxu0 %v1225
    %1234 = vmatprep.subr.bf16.mxu0 0
    %1235 = vmatpush1.bf16.msra.mxu0 %v1226
    %1236 = vmatprep.subr.bf16.mxu0 0
    %1237 = vmatpush1.bf16.msra.mxu0 0
    %1238 = vmatprep.subr.bf16.mxu0 0
    %1239 = vmatpush1.bf16.msra.mxu0 0
    %1240 = vmatprep.subr.bf16.mxu0 0
    %1241 = vmatpush1.bf16.msra.mxu0 0
    %1242 = vmatprep.subr.bf16.mxu0 0
    %1243 = vmatpush1.bf16.msra.mxu0 0
    %1244 = vmatprep.subr.bf16.mxu0 0
    %1245 = vmatpush1.bf16.msra.mxu0 0
    %1246 = vmatprep.subr.bf16.mxu0 0
    %1247 = vmatpush1.bf16.msra.mxu0 0
    %1248 = vmatprep.subr.bf16.mxu0 0
    %1249 = vmatpush1.bf16.msra.mxu0 0
    %1250 = vmatprep.subr.bf16.mxu0 0
    %1251 = vmatpush1.bf16.msra.mxu0 0
    %1252 = vmatprep.subr.bf16.mxu0 0
    %1253 = vmatpush1.bf16.msra.mxu0 0
    %1254 = vmatprep.subr.bf16.mxu0 0
    %1255 = vmatpush1.bf16.msra.mxu0 0
    %1256 = vmatprep.subr.bf16.mxu0 0
    %1257 = vmatpush1.bf16.msra.mxu0 0
    %1258 = vmatprep.subr.bf16.mxu0 0
    %1259 = vmatpush1.bf16.msra.mxu0 0
    %1260 = vmatprep.subr.bf16.mxu0 0
    %1261 = vmatpush1.bf16.msra.mxu0 0
    %1262 = vmatprep.subr.bf16.mxu0 0
    %1263 = vmatpush1.bf16.msra.mxu0 0
    %1264 = vmatprep.mubr.bf16.mxu0 0
    %1265 = vmatmul.mubr.bf16.gmra.mrb[0].mxu0 %v1230
    %v1266 = vpop.f32.mrb[0].mxu0
    %v1267 = vadd.f32 %v1215, %v1266
    %v1268 = vpop.f32.mrb[0].mxu0
    %v1269 = vpop.f32.mrb[0].mxu0
    %v1270 = vadd.f32 %v1215, %v1269
    %v1271 = vpop.f32.mrb[0].mxu0
    %1272 = vdwg.mxu0
    %v1273 = vadd.f32 %v1267, %v92
    %v1274 = vadd.f32 %v1270, %v93
    %1275 = vst.msk [vmem:[#allocation11] sm:$0xff] %vm96, %v1273
    %1276 = vst.msk [vmem:[#allocation11 + $0x8] sm:$0xff] %vm96, %v1274
    // Predicated region
    $region58: #{tpu_custom_call.1} parent=1 // pred_check
      _
    $region59: #{tpu_custom_call.1} parent=1 // pred_check_branch
      %1278 = sbr.rel (0) target = $region61
    $region60: #{tpu_custom_call.1} parent=1 // pred_region
      %s1280 = ssub.s32 256, 256
      %1281 = vsyncadd [#allocation5], %s1280
      %s1282 = sshll.u32 [#allocation11], 4
      %s1283 = int_to_ptr.vmem [resolvable:$true] %s1282
      %1288 = dma.vmem_to_hbm [thread:$0]  %s1283, 256, %s10, [#allocation5], 128, 128, 8
    $region61: #{tpu_custom_call.1} parent=1 // pred_fallthru
      _
    // Predicated region
    $region62: #{tpu_custom_call.1} parent=1 // pred_check
      _
    $region63: #{tpu_custom_call.1} parent=1 // pred_check_branch
      %1290 = sbr.rel (0) target = $region65
    $region64: #{tpu_custom_call.1} parent=1 // pred_region
      %1291 = dma.done [#allocation5], 256
    $region65: #{tpu_custom_call.1} parent=1 // pred_fallthru
      _
    %1292 = vsyncpa [#allocation4], 1
    %1293 = vsyncpa [#allocation7], 1
    %1294 = vsyncpa [#allocation10], 1
    %1295 = vsyncpa [#allocation5], 1

// kernel: tpu_custom_call.1
$region0: #{tpu_custom_call.1}
  #allocation0 [shape = 'u32[]', space=smem, size = 0x4, offset = 0x4, fixed_abs, tag = 'smem constant byte address 0x4 - core index']
  #allocation1 [shape = 'u32[144,128]{1,0:T(1,128)}', space=vmem, size = 0x12000, scoped, tag = 'internal scratch']
  #allocation2 [shape = 'f32[16,32]{1,0:T(8,128)}', space=vmem, size = 0x2000, scoped, tag = 'scratch operand']
  %s0 = inlined_call_operand.hbm [shape: f32[16,32], index: 0, kind: input, shape index: {}]
  %s1 = inlined_call_operand.hbm [shape: f32[16,32], index: 1, kind: input, shape index: {}]
  %s2 = inlined_call_operand.vmem [shape: f32[1,32], index: 2, kind: input, shape index: {}]
  %s3 = inlined_call_operand.vmem [shape: f32[1,32], index: 3, kind: input, shape index: {}]
  %s4 = inlined_call_operand.hbm [shape: bf16[32,64], index: 4, kind: input, shape index: {}]
  %s5 = inlined_call_operand.vmem [shape: f32[1,64], index: 5, kind: input, shape index: {}]
  %s6 = inlined_call_operand.vmem [shape: bf16[32,32], index: 6, kind: input, shape index: {}]
  %s7 = inlined_call_operand.vmem [shape: f32[1,32], index: 7, kind: input, shape index: {}]
  %s8 = inlined_call_operand.hbm [shape: bf16[32,32], index: 8, kind: input, shape index: {}]
  %s9 = inlined_call_operand.vmem [shape: f32[1,32], index: 9, kind: input, shape index: {}]
  %s10 = inlined_call_operand.hbm [shape: f32[16,32], index: 10, kind: output, shape index: {}]
  %s11 = sld [smem:[#allocation0]]
  $region66: #{tpu_custom_call.1} parent=0
    _
  %s13 = ssub.s32 1, %s11
  %s14 = scalar_select 0, %s13, %s11
  $region1: #{tpu_custom_call.1} parent=0
    #allocation3 [shape = 'u8[8192]{0}', space=vmem, size = 0x2000, scoped, tag = 'input window, operand 0, single buffered']
    #allocation4 [shape = 's32[1]{0}', space=sflag, size = 0x4, scoped, tag = 'scoped memory for tpu_custom_call.1']
    #allocation5 [shape = 's32[1]{0}', space=sflag, size = 0x4, scoped, tag = 'scoped memory for tpu_custom_call.1']
    #allocation6 [shape = 'u8[8192]{0}', space=vmem, size = 0x2000, scoped, tag = 'input window, operand 1, single buffered']
    #allocation7 [shape = 's32[1]{0}', space=sflag, size = 0x4, scoped, tag = 'scoped memory for tpu_custom_call.1']
    #allocation8 [shape = 'u8[8192]{0}', space=vmem, size = 0x2000, scoped, tag = 'input window, operand 4, single buffered']
    #allocation9 [shape = 'u8[8192]{0}', space=vmem, size = 0x2000, scoped, tag = 'input window, operand 8, single buffered']
    #allocation10 [shape = 's32[1]{0}', space=sflag, size = 0x4, scoped, tag = 'scoped memory for tpu_custom_call.1']
    #allocation11 [shape = 'u8[8192]{0}', space=vmem, size = 0x2000, scoped, tag = 'output window, operand 0, single buffered']
    %15 = vsyncpa [#allocation4], 0
    %16 = vsyncpa [#allocation7], 0
    %17 = vsyncpa [#allocation10], 0
    %18 = vsyncpa [#allocation5], 0
    // Predicated region
    $region2: #{tpu_custom_call.1} parent=1 // pred_check
      _
    $region3: #{tpu_custom_call.1} parent=1 // pred_check_branch
      %20 = sbr.rel (0) target = $region5
    $region4: #{tpu_custom_call.1} parent=1 // pred_region
      %s22 = ssub.s32 256, 256
      %23 = vsyncadd [#allocation4], %s22
      %s24 = sshll.u32 [#allocation3], 4
      %s25 = int_to_ptr.vmem [resolvable:$true] %s24
      %30 = dma.hbm_to_vmem [thread:$0]  %s0, 256, %s25, [#allocation4], 128, 128, 8
    $region5: #{tpu_custom_call.1} parent=1 // pred_fallthru
      _
    // Predicated region
    $region6: #{tpu_custom_call.1} parent=1 // pred_check
      _
    $region7: #{tpu_custom_call.1} parent=1 // pred_check_branch
      %32 = sbr.rel (0) target = $region9
    $region8: #{tpu_custom_call.1} parent=1 // pred_region
      %s34 = ssub.s32 256, 256
      %35 = vsyncadd [#allocation7], %s34
      %s36 = sshll.u32 [#allocation6], 4
      %s37 = int_to_ptr.vmem [resolvable:$true] %s36
      %42 = dma.hbm_to_vmem [thread:$0]  %s1, 256, %s37, [#allocation7], 128, 128, 8
    $region9: #{tpu_custom_call.1} parent=1 // pred_fallthru
      _
    // Predicated region
    $region10: #{tpu_custom_call.1} parent=1 // pred_check
      _
    $region11: #{tpu_custom_call.1} parent=1 // pred_check_branch
      %44 = sbr.rel (0) target = $region13
    $region12: #{tpu_custom_call.1} parent=1 // pred_region
      _
    $region13: #{tpu_custom_call.1} parent=1 // pred_fallthru
      _
    // Predicated region
    $region14: #{tpu_custom_call.1} parent=1 // pred_check
      _
    $region15: #{tpu_custom_call.1} parent=1 // pred_check_branch
      %46 = sbr.rel (0) target = $region17
    $region16: #{tpu_custom_call.1} parent=1 // pred_region
      _
    $region17: #{tpu_custom_call.1} parent=1 // pred_fallthru
      _
    // Predicated region
    $region18: #{tpu_custom_call.1} parent=1 // pred_check
      _
    $region19: #{tpu_custom_call.1} parent=1 // pred_check_branch
      %48 = sbr.rel (0) target = $region21
    $region20: #{tpu_custom_call.1} parent=1 // pred_region
      %s50 = ssub.s32 256, 256
      %51 = vsyncadd [#allocation7], %s50
      %s52 = sshll.u32 [#allocation8], 4
      %s53 = int_to_ptr.vmem [resolvable:$true] %s52
      %58 = dma.hbm_to_vmem [thread:$0]  %s4, 256, %s53, [#allocation7], 64, 64, 4
    $region21: #{tpu_custom_call.1} parent=1 // pred_fallthru
      _
    // Predicated region
    $region22: #{tpu_custom_call.1} parent=1 // pred_check
      _
    $region23: #{tpu_custom_call.1} parent=1 // pred_check_branch
      %60 = sbr.rel (0) target = $region25
    $region24: #{tpu_custom_call.1} parent=1 // pred_region
      _
    $region25: #{tpu_custom_call.1} parent=1 // pred_fallthru
      _
    // Predicated region
    $region26: #{tpu_custom_call.1} parent=1 // pred_check
      _
    $region27: #{tpu_custom_call.1} parent=1 // pred_check_branch
      %62 = sbr.rel (0) target = $region29
    $region28: #{tpu_custom_call.1} parent=1 // pred_region
      _
    $region29: #{tpu_custom_call.1} parent=1 // pred_fallthru
      _
    // Predicated region
    $region30: #{tpu_custom_call.1} parent=1 // pred_check
      _
    $region31: #{tpu_custom_call.1} parent=1 // pred_check_branch
      %64 = sbr.rel (0) target = $region33
    $region32: #{tpu_custom_call.1} parent=1 // pred_region
      _
    $region33: #{tpu_custom_call.1} parent=1 // pred_fallthru
      _
    // Predicated region
    $region34: #{tpu_custom_call.1} parent=1 // pred_check
      _
    $region35: #{tpu_custom_call.1} parent=1 // pred_check_branch
      %66 = sbr.rel (0) target = $region37
    $region36: #{tpu_custom_call.1} parent=1 // pred_region
      %s68 = ssub.s32 256, 256
      %69 = vsyncadd [#allocation10], %s68
      %s70 = sshll.u32 [#allocation9], 4
      %s71 = int_to_ptr.vmem [resolvable:$true] %s70
      %76 = dma.hbm_to_vmem [thread:$0]  %s8, 256, %s71, [#allocation10], 64, 64, 4
    $region37: #{tpu_custom_call.1} parent=1 // pred_fallthru
      _
    // Predicated region
    $region38: #{tpu_custom_call.1} parent=1 // pred_check
      _
    $region39: #{tpu_custom_call.1} parent=1 // pred_check_branch
      %78 = sbr.rel (0) target = $region41
    $region40: #{tpu_custom_call.1} parent=1 // pred_region
      _
    $region41: #{tpu_custom_call.1} parent=1 // pred_fallthru
      _
    // Predicated region
    $region42: #{tpu_custom_call.1} parent=1 // pred_check
      _
    $region43: #{tpu_custom_call.1} parent=1 // pred_check_branch
      %80 = sbr.rel (0) target = $region45
    $region44: #{tpu_custom_call.1} parent=1 // pred_region
      %81 = dma.done [#allocation4], 256
    $region45: #{tpu_custom_call.1} parent=1 // pred_fallthru
      _
    // Predicated region
    $region46: #{tpu_custom_call.1} parent=1 // pred_check
      _
    $region47: #{tpu_custom_call.1} parent=1 // pred_check_branch
      %83 = sbr.rel (0) target = $region49
    $region48: #{tpu_custom_call.1} parent=1 // pred_region
      %84 = dma.done [#allocation7], 256
    $region49: #{tpu_custom_call.1} parent=1 // pred_fallthru
      _
    // Predicated region
    $region50: #{tpu_custom_call.1} parent=1 // pred_check
      _
    $region51: #{tpu_custom_call.1} parent=1 // pred_check_branch
      %86 = sbr.rel (0) target = $region53
    $region52: #{tpu_custom_call.1} parent=1 // pred_region
      %87 = dma.done [#allocation7], 256
    $region53: #{tpu_custom_call.1} parent=1 // pred_fallthru
      _
    // Predicated region
    $region54: #{tpu_custom_call.1} parent=1 // pred_check
      _
    $region55: #{tpu_custom_call.1} parent=1 // pred_check_branch
      %89 = sbr.rel (0) target = $region57
    $region56: #{tpu_custom_call.1} parent=1 // pred_region
      %90 = dma.done [#allocation10], 256
    $region57: #{tpu_custom_call.1} parent=1 // pred_fallthru
      _
    %v92 = vld [vmem:[#allocation3] sm:$0xff]
    %v93 = vld [vmem:[#allocation3 + $0x8] sm:$0xff]
    %v94 = vld [vmem:[%s2] sm:$0x1]
    %v95 = vld [vmem:[%s3] sm:$0x1]
    %vm96 = vcmask 261120
    %v97 = vsel %vm96, %v92, 0.0
    %98 = vadd.xlane.f32.xlu0 %v97
    %v99 = vpop.xlane.xlu0 %98
    %v100 = vsel %vm96, %v93, 0.0
    %101 = vadd.xlane.f32.xlu0 %v100
    %v102 = vpop.xlane.xlu0 %101
    %v103 = vrcp.pop 32.0
    %v104 = vmul.f32 %v99, %v103
    %v105 = vmul.f32 %v102, %v103
    %v106 = vsub.f32 %v92, %v104
    %v107 = vsub.f32 %v93, %v105
    %v108 = vmul.f32 %v106, %v106
    %v109 = vmul.f32 %v107, %v107
    %v110 = vsel %vm96, %v108, 0.0
    %111 = vadd.xlane.f32.xlu0 %v110
    %v112 = vpop.xlane.xlu0 %111
    %v113 = vsel %vm96, %v109, 0.0
    %114 = vadd.xlane.f32.xlu0 %v113
    %v115 = vpop.xlane.xlu0 %114
    %v116 = vmul.f32 %v112, %v103
    %v117 = vmul.f32 %v115, %v103
    %v118 = vadd.f32 %v116, 1e-05
    %v119 = vadd.f32 %v117, 1e-05
    %v120 = vrsqrt.pop %v118
    %v121 = vrsqrt.pop %v119
    %v122 = vmul.f32 %v106, %v120
    %v123 = vmul.f32 %v107, %v121
    %v125 = vlaneseq
    %v126 = vshrl.u32 %v125, 7
    %v127 = vsub.s32 0, %v126
    %v128 = vrot.slane %v94, %v127
    %v130 = vmul.f32 %v122, %v128
    %v131 = vmul.f32 %v123, %v128
    %v133 = vlaneseq
    %v134 = vshrl.u32 %v133, 7
    %v135 = vsub.s32 0, %v134
    %v136 = vrot.slane %v95, %v135
    %v138 = vadd.f32 %v130, %v136
    %v139 = vadd.f32 %v131, %v136
    %v140 = vld [vmem:[#allocation6] sm:$0xff]
    %v141 = vld [vmem:[#allocation6 + $0x8] sm:$0xff]
    %v142 = vadd.f32 %v138, %v140
    %v143 = vadd.f32 %v139, %v141
    %v144 = vpack.c.bf16 %v143, %v142
    %v145 = vld [vmem:[#allocation8] sm:$0xf]
    %v146 = vld [vmem:[#allocation8 + $0x4] sm:$0xf]
    %v147 = vld [vmem:[#allocation8 + $0x8] sm:$0xf]
    %v148 = vld [vmem:[#allocation8 + $0xc] sm:$0xf]
    %v149 = vld [vmem:[%s5] sm:$0x1]
    %v151 = vlaneseq
    %v152 = vshrl.u32 %v151, 7
    %v153 = vsub.s32 0, %v152
    %v154 = vrot.slane %v149, %v153
    %v160 = vunpack.c.l.b16 %v145
    %v161 = vunpack.c.l.b16 %v146
    %v162 = vunpack.c.l.b16 %v147
    %v163 = vunpack.c.l.b16 %v148
    %v164 = vpack.c.b16 %v161, %v160
    %v165 = vpack.c.b16 %v163, %v162
    %v169 = vsel %vm96, %v144, 0
    %171 = vmatprep.subr.bf16.mxu0 0
    %172 = vmatpush1.bf16.msra.mxu0 %v164
    %173 = vmatprep.subr.bf16.mxu0 0
    %174 = vmatpush1.bf16.msra.mxu0 %v165
    %175 = vmatprep.subr.bf16.mxu0 0
    %176 = vmatpush1.bf16.msra.mxu0 0
    %177 = vmatprep.subr.bf16.mxu0 0
    %178 = vmatpush1.bf16.msra.mxu0 0
    %179 = vmatprep.subr.bf16.mxu0 0
    %180 = vmatpush1.bf16.msra.mxu0 0
    %181 = vmatprep.subr.bf16.mxu0 0
    %182 = vmatpush1.bf16.msra.mxu0 0
    %183 = vmatprep.subr.bf16.mxu0 0
    %184 = vmatpush1.bf16.msra.mxu0 0
    %185 = vmatprep.subr.bf16.mxu0 0
    %186 = vmatpush1.bf16.msra.mxu0 0
    %187 = vmatprep.subr.bf16.mxu0 0
    %188 = vmatpush1.bf16.msra.mxu0 0
    %189 = vmatprep.subr.bf16.mxu0 0
    %190 = vmatpush1.bf16.msra.mxu0 0
    %191 = vmatprep.subr.bf16.mxu0 0
    %192 = vmatpush1.bf16.msra.mxu0 0
    %193 = vmatprep.subr.bf16.mxu0 0
    %194 = vmatpush1.bf16.msra.mxu0 0
    %195 = vmatprep.subr.bf16.mxu0 0
    %196 = vmatpush1.bf16.msra.mxu0 0
    %197 = vmatprep.subr.bf16.mxu0 0
    %198 = vmatpush1.bf16.msra.mxu0 0
    %199 = vmatprep.subr.bf16.mxu0 0
    %200 = vmatpush1.bf16.msra.mxu0 0
    %201 = vmatprep.subr.bf16.mxu0 0
    %202 = vmatpush1.bf16.msra.mxu0 0
    %203 = vmatprep.mubr.bf16.mxu0 0
    %204 = vmatmul.mubr.bf16.gmra.mrb[0].mxu0 %v169
    %v205 = vpop.f32.mrb[0].mxu0
    %v206 = vadd.f32 %v154, %v205
    %v207 = vpop.f32.mrb[0].mxu0
    %v208 = vpop.f32.mrb[0].mxu0
    %v209 = vadd.f32 %v154, %v208
    %v210 = vpop.f32.mrb[0].mxu0
    %211 = vdwg.mxu0
    %v212 = vmul.f32 %v206, 0.35355338
    %v213 = vmul.f32 %v209, 0.35355338
    %v214 = vpack.c.bf16 %v139, %v138
    %v215 = vld [vmem:[%s6] sm:$0xf]
    %v216 = vld [vmem:[%s6 + $0x4] sm:$0xf]
    %v217 = vld [vmem:[%s6 + $0x8] sm:$0xf]
    %v218 = vld [vmem:[%s6 + $0xc] sm:$0xf]
    %v219 = vld [vmem:[%s7] sm:$0x1]
    %v221 = vlaneseq
    %v222 = vshrl.u32 %v221, 7
    %v223 = vsub.s32 0, %v222
    %v224 = vrot.slane %v219, %v223
    %v230 = vunpack.c.l.b16 %v215
    %v231 = vunpack.c.l.b16 %v216
    %v232 = vunpack.c.l.b16 %v217
    %v233 = vunpack.c.l.b16 %v218
    %v234 = vpack.c.b16 %v231, %v230
    %v235 = vpack.c.b16 %v233, %v232
    %v239 = vsel %vm96, %v214, 0
    %241 = vmatprep.subr.bf16.mxu0 0
    %242 = vmatpush1.bf16.msra.mxu0 %v234
    %243 = vmatprep.subr.bf16.mxu0 0
    %244 = vmatpush1.bf16.msra.mxu0 %v235
    %245 = vmatprep.subr.bf16.mxu0 0
    %246 = vmatpush1.bf16.msra.mxu0 0
    %247 = vmatprep.subr.bf16.mxu0 0
    %248 = vmatpush1.bf16.msra.mxu0 0
    %249 = vmatprep.subr.bf16.mxu0 0
    %250 = vmatpush1.bf16.msra.mxu0 0
    %251 = vmatprep.subr.bf16.mxu0 0
    %252 = vmatpush1.bf16.msra.mxu0 0
    %253 = vmatprep.subr.bf16.mxu0 0
    %254 = vmatpush1.bf16.msra.mxu0 0
    %255 = vmatprep.subr.bf16.mxu0 0
    %256 = vmatpush1.bf16.msra.mxu0 0
    %257 = vmatprep.subr.bf16.mxu0 0
    %258 = vmatpush1.bf16.msra.mxu0 0
    %259 = vmatprep.subr.bf16.mxu0 0
    %260 = vmatpush1.bf16.msra.mxu0 0
    %261 = vmatprep.subr.bf16.mxu0 0
    %262 = vmatpush1.bf16.msra.mxu0 0
    %263 = vmatprep.subr.bf16.mxu0 0
    %264 = vmatpush1.bf16.msra.mxu0 0
    %265 = vmatprep.subr.bf16.mxu0 0
    %266 = vmatpush1.bf16.msra.mxu0 0
    %267 = vmatprep.subr.bf16.mxu0 0
    %268 = vmatpush1.bf16.msra.mxu0 0
    %269 = vmatprep.subr.bf16.mxu0 0
    %270 = vmatpush1.bf16.msra.mxu0 0
    %271 = vmatprep.subr.bf16.mxu0 0
    %272 = vmatpush1.bf16.msra.mxu0 0
    %273 = vmatprep.mubr.bf16.mxu0 0
    %274 = vmatmul.mubr.bf16.gmra.mrb[0].mxu0 %v239
    %v275 = vpop.f32.mrb[0].mxu0
    %v276 = vadd.f32 %v224, %v275
    %v277 = vpop.f32.mrb[0].mxu0
    %v278 = vpop.f32.mrb[0].mxu0
    %v279 = vadd.f32 %v224, %v278
    %v280 = vpop.f32.mrb[0].mxu0
    %281 = vdwg.mxu0
    %v282 = vpack.c.bf16 %v212, %v212
    %v283 = vpack.c.bf16 %v206, %v206
    %285 = vrot.lane.b32.xlu0 %v283, 96
    %v286 = vpop.permute.xlu0 %285
    %vm287 = vcmask 64512
    %v289 = vsel %vm287, %v282, 0
    %v292 = vsel %vm287, %v286, 0
    %294 = vmatprep.subr.bf16.mxu0 0
    %295 = vmatpush1.bf16.xpose.msra.mxu0 %v292
    %296 = vmatprep.subr.bf16.mxu0 0
    %297 = vmatpush1.bf16.xpose.msra.mxu0 0
    %298 = vmatprep.subr.bf16.mxu0 0
    %299 = vmatpush1.bf16.xpose.msra.mxu0 0
    %300 = vmatprep.subr.bf16.mxu0 0
    %301 = vmatpush1.bf16.xpose.msra.mxu0 0
    %302 = vmatprep.subr.bf16.mxu0 0
    %303 = vmatpush1.bf16.xpose.msra.mxu0 0
    %304 = vmatprep.subr.bf16.mxu0 0
    %305 = vmatpush1.bf16.xpose.msra.mxu0 0
    %306 = vmatprep.subr.bf16.mxu0 0
    %307 = vmatpush1.bf16.xpose.msra.mxu0 0
    %308 = vmatprep.subr.bf16.mxu0 0
    %309 = vmatpush1.bf16.xpose.msra.mxu0 0
    %310 = vmatprep.subr.bf16.mxu0 0
    %311 = vmatpush1.bf16.xpose.msra.mxu0 0
    %312 = vmatprep.subr.bf16.mxu0 0
    %313 = vmatpush1.bf16.xpose.msra.mxu0 0
    %314 = vmatprep.subr.bf16.mxu0 0
    %315 = vmatpush1.bf16.xpose.msra.mxu0 0
    %316 = vmatprep.subr.bf16.mxu0 0
    %317 = vmatpush1.bf16.xpose.msra.mxu0 0
    %318 = vmatprep.subr.bf16.mxu0 0
    %319 = vmatpush1.bf16.xpose.msra.mxu0 0
    %320 = vmatprep.subr.bf16.mxu0 0
    %321 = vmatpush1.bf16.xpose.msra.mxu0 0
    %322 = vmatprep.subr.bf16.mxu0 0
    %323 = vmatpush1.bf16.xpose.msra.mxu0 0
    %324 = vmatprep.subr.bf16.mxu0 0
    %325 = vmatpush1.bf16.xpose.msra.mxu0 0
    %326 = vmatprep.mubr.bf16.mxu0 0
    %327 = vmatmul.mubr.bf16.gmra.mrb[0].mxu0 %v289
    %v328 = vpop.f32.mrb[0].mxu0
    %v329 = vadd.f32 0.0, %v328
    %v330 = vpop.f32.mrb[0].mxu0
    %v331 = vpop.f32.mrb[0].mxu0
    %v332 = vpop.f32.mrb[0].mxu0
    %333 = vdwg.mxu0
    %v334 = vsel %vm287, %v329, -inf
    %335 = vmax.xlane.f32.xlu0 %v334
    %v336 = vpop.xlane.xlu0 %335
    %v337 = vsub.f32 %v329, %v336
    %v338 = vmul.f32 %v337, 1.442695
    %v339 = vpow.pop %v338
    %v340 = vsel %vm287, %v339, 0.0
    %341 = vadd.xlane.f32.xlu0 %v340
    %v342 = vpop.xlane.xlu0 %341
    %v343 = vrcp.pop %v342
    %v344 = vmul.f32 %v339, %v343
    %v345 = vpack.c.bf16 %v344, %v344
    %v346 = vpack.c.bf16 %v276, %v276
    %v348 = vsel %vm287, %v345, 0
    %vm350 = vcmask 1043456
    %v352 = vsel %vm350, %v346, 0
    %354 = vmatprep.subr.bf16.mxu0 0
    %355 = vmatpush1.bf16.msra.mxu0 %v352
    %356 = vmatprep.subr.bf16.mxu0 0
    %357 = vmatpush1.bf16.msra.mxu0 0
    %358 = vmatprep.subr.bf16.mxu0 0
    %359 = vmatpush1.bf16.msra.mxu0 0
    %360 = vmatprep.subr.bf16.mxu0 0
    %361 = vmatpush1.bf16.msra.mxu0 0
    %362 = vmatprep.subr.bf16.mxu0 0
    %363 = vmatpush1.bf16.msra.mxu0 0
    %364 = vmatprep.subr.bf16.mxu0 0
    %365 = vmatpush1.bf16.msra.mxu0 0
    %366 = vmatprep.subr.bf16.mxu0 0
    %367 = vmatpush1.bf16.msra.mxu0 0
    %368 = vmatprep.subr.bf16.mxu0 0
    %369 = vmatpush1.bf16.msra.mxu0 0
    %370 = vmatprep.subr.bf16.mxu0 0
    %371 = vmatpush1.bf16.msra.mxu0 0
    %372 = vmatprep.subr.bf16.mxu0 0
    %373 = vmatpush1.bf16.msra.mxu0 0
    %374 = vmatprep.subr.bf16.mxu0 0
    %375 = vmatpush1.bf16.msra.mxu0 0
    %376 = vmatprep.subr.bf16.mxu0 0
    %377 = vmatpush1.bf16.msra.mxu0 0
    %378 = vmatprep.subr.bf16.mxu0 0
    %379 = vmatpush1.bf16.msra.mxu0 0
    %380 = vmatprep.subr.bf16.mxu0 0
    %381 = vmatpush1.bf16.msra.mxu0 0
    %382 = vmatprep.subr.bf16.mxu0 0
    %383 = vmatpush1.bf16.msra.mxu0 0
    %384 = vmatprep.subr.bf16.mxu0 0
    %385 = vmatpush1.bf16.msra.mxu0 0
    %386 = vmatprep.mubr.bf16.mxu0 0
    %387 = vmatmul.mubr.bf16.gmra.mrb[0].mxu0 %v348
    %v388 = vpop.f32.mrb[0].mxu0
    %v389 = vadd.f32 0.0, %v388
    %v390 = vpop.f32.mrb[0].mxu0
    %v391 = vpop.f32.mrb[0].mxu0
    %v392 = vpop.f32.mrb[0].mxu0
    %393 = vdwg.mxu0
    %394 = vst.msk [vmem:[#allocation2] sm:$0xff] %vm287, %v389
    %396 = vrot.lane.b32.xlu0 %v282, 120
    %v397 = vpop.permute.xlu0 %396
    %398 = vrot.lane.b32.xlu0 %v283, 88
    %v399 = vpop.permute.xlu0 %398
    %v401 = vsel %vm287, %v397, 0
    %v404 = vsel %vm287, %v399, 0
    %406 = vmatprep.subr.bf16.mxu0 0
    %407 = vmatpush1.bf16.xpose.msra.mxu0 %v404
    %408 = vmatprep.subr.bf16.mxu0 0
    %409 = vmatpush1.bf16.xpose.msra.mxu0 0
    %410 = vmatprep.subr.bf16.mxu0 0
    %411 = vmatpush1.bf16.xpose.msra.mxu0 0
    %412 = vmatprep.subr.bf16.mxu0 0
    %413 = vmatpush1.bf16.xpose.msra.mxu0 0
    %414 = vmatprep.subr.bf16.mxu0 0
    %415 = vmatpush1.bf16.xpose.msra.mxu0 0
    %416 = vmatprep.subr.bf16.mxu0 0
    %417 = vmatpush1.bf16.xpose.msra.mxu0 0
    %418 = vmatprep.subr.bf16.mxu0 0
    %419 = vmatpush1.bf16.xpose.msra.mxu0 0
    %420 = vmatprep.subr.bf16.mxu0 0
    %421 = vmatpush1.bf16.xpose.msra.mxu0 0
    %422 = vmatprep.subr.bf16.mxu0 0
    %423 = vmatpush1.bf16.xpose.msra.mxu0 0
    %424 = vmatprep.subr.bf16.mxu0 0
    %425 = vmatpush1.bf16.xpose.msra.mxu0 0
    %426 = vmatprep.subr.bf16.mxu0 0
    %427 = vmatpush1.bf16.xpose.msra.mxu0 0
    %428 = vmatprep.subr.bf16.mxu0 0
    %429 = vmatpush1.bf16.xpose.msra.mxu0 0
    %430 = vmatprep.subr.bf16.mxu0 0
    %431 = vmatpush1.bf16.xpose.msra.mxu0 0
    %432 = vmatprep.subr.bf16.mxu0 0
    %433 = vmatpush1.bf16.xpose.msra.mxu0 0
    %434 = vmatprep.subr.bf16.mxu0 0
    %435 = vmatpush1.bf16.xpose.msra.mxu0 0
    %436 = vmatprep.subr.bf16.mxu0 0
    %437 = vmatpush1.bf16.xpose.msra.mxu0 0
    %438 = vmatprep.mubr.bf16.mxu0 0
    %439 = vmatmul.mubr.bf16.gmra.mrb[0].mxu0 %v401
    %v440 = vpop.f32.mrb[0].mxu0
    %v441 = vadd.f32 0.0, %v440
    %v442 = vpop.f32.mrb[0].mxu0
    %v443 = vpop.f32.mrb[0].mxu0
    %v444 = vpop.f32.mrb[0].mxu0
    %445 = vdwg.mxu0
    %v446 = vsel %vm287, %v441, -inf
    %447 = vmax.xlane.f32.xlu0 %v446
    %v448 = vpop.xlane.xlu0 %447
    %v449 = vsub.f32 %v441, %v448
    %v450 = vmul.f32 %v449, 1.442695
    %v451 = vpow.pop %v450
    %v452 = vsel %vm287, %v451, 0.0
    %453 = vadd.xlane.f32.xlu0 %v452
    %v454 = vpop.xlane.xlu0 %453
    %v455 = vrcp.pop %v454
    %v456 = vmul.f32 %v451, %v455
    %v457 = vpack.c.bf16 %v456, %v456
    %459 = vrot.lane.b32.xlu0 %v346, 120
    %v460 = vpop.permute.xlu0 %459
    %v462 = vsel %vm287, %v457, 0
    %v465 = vsel %vm350, %v460, 0
    %467 = vmatprep.subr.bf16.mxu0 0
    %468 = vmatpush1.bf16.msra.mxu0 %v465
    %469 = vmatprep.subr.bf16.mxu0 0
    %470 = vmatpush1.bf16.msra.mxu0 0
    %471 = vmatprep.subr.bf16.mxu0 0
    %472 = vmatpush1.bf16.msra.mxu0 0
    %473 = vmatprep.subr.bf16.mxu0 0
    %474 = vmatpush1.bf16.msra.mxu0 0
    %475 = vmatprep.subr.bf16.mxu0 0
    %476 = vmatpush1.bf16.msra.mxu0 0
    %477 = vmatprep.subr.bf16.mxu0 0
    %478 = vmatpush1.bf16.msra.mxu0 0
    %479 = vmatprep.subr.bf16.mxu0 0
    %480 = vmatpush1.bf16.msra.mxu0 0
    %481 = vmatprep.subr.bf16.mxu0 0
    %482 = vmatpush1.bf16.msra.mxu0 0
    %483 = vmatprep.subr.bf16.mxu0 0
    %484 = vmatpush1.bf16.msra.mxu0 0
    %485 = vmatprep.subr.bf16.mxu0 0
    %486 = vmatpush1.bf16.msra.mxu0 0
    %487 = vmatprep.subr.bf16.mxu0 0
    %488 = vmatpush1.bf16.msra.mxu0 0
    %489 = vmatprep.subr.bf16.mxu0 0
    %490 = vmatpush1.bf16.msra.mxu0 0
    %491 = vmatprep.subr.bf16.mxu0 0
    %492 = vmatpush1.bf16.msra.mxu0 0
    %493 = vmatprep.subr.bf16.mxu0 0
    %494 = vmatpush1.bf16.msra.mxu0 0
    %495 = vmatprep.subr.bf16.mxu0 0
    %496 = vmatpush1.bf16.msra.mxu0 0
    %497 = vmatprep.subr.bf16.mxu0 0
    %498 = vmatpush1.bf16.msra.mxu0 0
    %499 = vmatprep.mubr.bf16.mxu0 0
    %500 = vmatmul.mubr.bf16.gmra.mrb[0].mxu0 %v462
    %v501 = vpop.f32.mrb[0].mxu0
    %v502 = vadd.f32 0.0, %v501
    %v503 = vpop.f32.mrb[0].mxu0
    %v504 = vpop.f32.mrb[0].mxu0
    %v505 = vpop.f32.mrb[0].mxu0
    %506 = vdwg.mxu0
    %508 = vrot.lane.b32.xlu0 %v502, 8
    %v509 = vpop.permute.xlu0 %508
    %vm511 = vcmask 130112
    %512 = vst.msk [vmem:[#allocation2] sm:$0xff] %vm511, %v509
    %513 = vrot.lane.b32.xlu0 %v282, 112
    %v514 = vpop.permute.xlu0 %513
    %515 = vrot.lane.b32.xlu0 %v283, 80
    %v516 = vpop.permute.xlu0 %515
    %v518 = vsel %vm287, %v514, 0
    %v521 = vsel %vm287, %v516, 0
    %523 = vmatprep.subr.bf16.mxu0 0
    %524 = vmatpush1.bf16.xpose.msra.mxu0 %v521
    %525 = vmatprep.subr.bf16.mxu0 0
    %526 = vmatpush1.bf16.xpose.msra.mxu0 0
    %527 = vmatprep.subr.bf16.mxu0 0
    %528 = vmatpush1.bf16.xpose.msra.mxu0 0
    %529 = vmatprep.subr.bf16.mxu0 0
    %530 = vmatpush1.bf16.xpose.msra.mxu0 0
    %531 = vmatprep.subr.bf16.mxu0 0
    %532 = vmatpush1.bf16.xpose.msra.mxu0 0
    %533 = vmatprep.subr.bf16.mxu0 0
    %534 = vmatpush1.bf16.xpose.msra.mxu0 0
    %535 = vmatprep.subr.bf16.mxu0 0
    %536 = vmatpush1.bf16.xpose.msra.mxu0 0
    %537 = vmatprep.subr.bf16.mxu0 0
    %538 = vmatpush1.bf16.xpose.msra.mxu0 0
    %539 = vmatprep.subr.bf16.mxu0 0
    %540 = vmatpush1.bf16.xpose.msra.mxu0 0
    %541 = vmatprep.subr.bf16.mxu0 0
    %542 = vmatpush1.bf16.xpose.msra.mxu0 0
    %543 = vmatprep.subr.bf16.mxu0 0
    %544 = vmatpush1.bf16.xpose.msra.mxu0 0
    %545 = vmatprep.subr.bf16.mxu0 0
    %546 = vmatpush1.bf16.xpose.msra.mxu0 0
    %547 = vmatprep.subr.bf16.mxu0 0
    %548 = vmatpush1.bf16.xpose.msra.mxu0 0
    %549 = vmatprep.subr.bf16.mxu0 0
    %550 = vmatpush1.bf16.xpose.msra.mxu0 0
    %551 = vmatprep.subr.bf16.mxu0 0
    %552 = vmatpush1.bf16.xpose.msra.mxu0 0
    %553 = vmatprep.subr.bf16.mxu0 0
    %554 = vmatpush1.bf16.xpose.msra.mxu0 0
    %555 = vmatprep.mubr.bf16.mxu0 0
    %556 = vmatmul.mubr.bf16.gmra.mrb[0].mxu0 %v518
    %v557 = vpop.f32.mrb[0].mxu0
    %v558 = vadd.f32 0.0, %v557
    %v559 = vpop.f32.mrb[0].mxu0
    %v560 = vpop.f32.mrb[0].mxu0
    %v561 = vpop.f32.mrb[0].mxu0
    %562 = vdwg.mxu0
    %v563 = vsel %vm287, %v558, -inf
    %564 = vmax.xlane.f32.xlu0 %v563
    %v565 = vpop.xlane.xlu0 %564
    %v566 = vsub.f32 %v558, %v565
    %v567 = vmul.f32 %v566, 1.442695
    %v568 = vpow.pop %v567
    %v569 = vsel %vm287, %v568, 0.0
    %570 = vadd.xlane.f32.xlu0 %v569
    %v571 = vpop.xlane.xlu0 %570
    %v572 = vrcp.pop %v571
    %v573 = vmul.f32 %v568, %v572
    %v574 = vpack.c.bf16 %v573, %v573
    %575 = vrot.lane.b32.xlu0 %v346, 112
    %v576 = vpop.permute.xlu0 %575
    %v578 = vsel %vm287, %v574, 0
    %v581 = vsel %vm350, %v576, 0
    %583 = vmatprep.subr.bf16.mxu0 0
    %584 = vmatpush1.bf16.msra.mxu0 %v581
    %585 = vmatprep.subr.bf16.mxu0 0
    %586 = vmatpush1.bf16.msra.mxu0 0
    %587 = vmatprep.subr.bf16.mxu0 0
    %588 = vmatpush1.bf16.msra.mxu0 0
    %589 = vmatprep.subr.bf16.mxu0 0
    %590 = vmatpush1.bf16.msra.mxu0 0
    %591 = vmatprep.subr.bf16.mxu0 0
    %592 = vmatpush1.bf16.msra.mxu0 0
    %593 = vmatprep.subr.bf16.mxu0 0
    %594 = vmatpush1.bf16.msra.mxu0 0
    %595 = vmatprep.subr.bf16.mxu0 0
    %596 = vmatpush1.bf16.msra.mxu0 0
    %597 = vmatprep.subr.bf16.mxu0 0
    %598 = vmatpush1.bf16.msra.mxu0 0
    %599 = vmatprep.subr.bf16.mxu0 0
    %600 = vmatpush1.bf16.msra.mxu0 0
    %601 = vmatprep.subr.bf16.mxu0 0
    %602 = vmatpush1.bf16.msra.mxu0 0
    %603 = vmatprep.subr.bf16.mxu0 0
    %604 = vmatpush1.bf16.msra.mxu0 0
    %605 = vmatprep.subr.bf16.mxu0 0
    %606 = vmatpush1.bf16.msra.mxu0 0
    %607 = vmatprep.subr.bf16.mxu0 0
    %608 = vmatpush1.bf16.msra.mxu0 0
    %609 = vmatprep.subr.bf16.mxu0 0
    %610 = vmatpush1.bf16.msra.mxu0 0
    %611 = vmatprep.subr.bf16.mxu0 0
    %612 = vmatpush1.bf16.msra.mxu0 0
    %613 = vmatprep.subr.bf16.mxu0 0
    %614 = vmatpush1.bf16.msra.mxu0 0
    %615 = vmatprep.mubr.bf16.mxu0 0
    %616 = vmatmul.mubr.bf16.gmra.mrb[0].mxu0 %v578
    %v617 = vpop.f32.mrb[0].mxu0
    %v618 = vadd.f32 0.0, %v617
    %v619 = vpop.f32.mrb[0].mxu0
    %v620 = vpop.f32.mrb[0].mxu0
    %v621 = vpop.f32.mrb[0].mxu0
    %622 = vdwg.mxu0
    %624 = vrot.lane.b32.xlu0 %v618, 16
    %v625 = vpop.permute.xlu0 %624
    %vm627 = vcmask 195712
    %628 = vst.msk [vmem:[#allocation2] sm:$0xff] %vm627, %v625
    %629 = vrot.lane.b32.xlu0 %v282, 104
    %v630 = vpop.permute.xlu0 %629
    %631 = vrot.lane.b32.xlu0 %v283, 72
    %v632 = vpop.permute.xlu0 %631
    %v634 = vsel %vm287, %v630, 0
    %v637 = vsel %vm287, %v632, 0
    %639 = vmatprep.subr.bf16.mxu0 0
    %640 = vmatpush1.bf16.xpose.msra.mxu0 %v637
    %641 = vmatprep.subr.bf16.mxu0 0
    %642 = vmatpush1.bf16.xpose.msra.mxu0 0
    %643 = vmatprep.subr.bf16.mxu0 0
    %644 = vmatpush1.bf16.xpose.msra.mxu0 0
    %645 = vmatprep.subr.bf16.mxu0 0
    %646 = vmatpush1.bf16.xpose.msra.mxu0 0
    %647 = vmatprep.subr.bf16.mxu0 0
    %648 = vmatpush1.bf16.xpose.msra.mxu0 0
    %649 = vmatprep.subr.bf16.mxu0 0
    %650 = vmatpush1.bf16.xpose.msra.mxu0 0
    %651 = vmatprep.subr.bf16.mxu0 0
    %652 = vmatpush1.bf16.xpose.msra.mxu0 0
    %653 = vmatprep.subr.bf16.mxu0 0
    %654 = vmatpush1.bf16.xpose.msra.mxu0 0
    %655 = vmatprep.subr.bf16.mxu0 0
    %656 = vmatpush1.bf16.xpose.msra.mxu0 0
    %657 = vmatprep.subr.bf16.mxu0 0
    %658 = vmatpush1.bf16.xpose.msra.mxu0 0
    %659 = vmatprep.subr.bf16.mxu0 0
    %660 = vmatpush1.bf16.xpose.msra.mxu0 0
    %661 = vmatprep.subr.bf16.mxu0 0
    %662 = vmatpush1.bf16.xpose.msra.mxu0 0
    %663 = vmatprep.subr.bf16.mxu0 0
    %664 = vmatpush1.bf16.xpose.msra.mxu0 0
    %665 = vmatprep.subr.bf16.mxu0 0
    %666 = vmatpush1.bf16.xpose.msra.mxu0 0
    %667 = vmatprep.subr.bf16.mxu0 0
    %668 = vmatpush1.bf16.xpose.msra.mxu0 0
    %669 = vmatprep.subr.bf16.mxu0 0
    %670 = vmatpush1.bf16.xpose.msra.mxu0 0
    %671 = vmatprep.mubr.bf16.mxu0 0
    %672 = vmatmul.mubr.bf16.gmra.mrb[0].mxu0 %v634
    %v673 = vpop.f32.mrb[0].mxu0
    %v674 = vadd.f32 0.0, %v673
    %v675 = vpop.f32.mrb[0].mxu0
    %v676 = vpop.f32.mrb[0].mxu0
    %v677 = vpop.f32.mrb[0].mxu0
    %678 = vdwg.mxu0
    %v679 = vsel %vm287, %v674, -inf
    %680 = vmax.xlane.f32.xlu0 %v679
    %v681 = vpop.xlane.xlu0 %680
    %v682 = vsub.f32 %v674, %v681
    %v683 = vmul.f32 %v682, 1.442695
    %v684 = vpow.pop %v683
    %v685 = vsel %vm287, %v684, 0.0
    %686 = vadd.xlane.f32.xlu0 %v685
    %v687 = vpop.xlane.xlu0 %686
    %v688 = vrcp.pop %v687
    %v689 = vmul.f32 %v684, %v688
    %v690 = vpack.c.bf16 %v689, %v689
    %691 = vrot.lane.b32.xlu0 %v346, 104
    %v692 = vpop.permute.xlu0 %691
    %v694 = vsel %vm287, %v690, 0
    %v697 = vsel %vm350, %v692, 0
    %699 = vmatprep.subr.bf16.mxu0 0
    %700 = vmatpush1.bf16.msra.mxu0 %v697
    %701 = vmatprep.subr.bf16.mxu0 0
    %702 = vmatpush1.bf16.msra.mxu0 0
    %703 = vmatprep.subr.bf16.mxu0 0
    %704 = vmatpush1.bf16.msra.mxu0 0
    %705 = vmatprep.subr.bf16.mxu0 0
    %706 = vmatpush1.bf16.msra.mxu0 0
    %707 = vmatprep.subr.bf16.mxu0 0
    %708 = vmatpush1.bf16.msra.mxu0 0
    %709 = vmatprep.subr.bf16.mxu0 0
    %710 = vmatpush1.bf16.msra.mxu0 0
    %711 = vmatprep.subr.bf16.mxu0 0
    %712 = vmatpush1.bf16.msra.mxu0 0
    %713 = vmatprep.subr.bf16.mxu0 0
    %714 = vmatpush1.bf16.msra.mxu0 0
    %715 = vmatprep.subr.bf16.mxu0 0
    %716 = vmatpush1.bf16.msra.mxu0 0
    %717 = vmatprep.subr.bf16.mxu0 0
    %718 = vmatpush1.bf16.msra.mxu0 0
    %719 = vmatprep.subr.bf16.mxu0 0
    %720 = vmatpush1.bf16.msra.mxu0 0
    %721 = vmatprep.subr.bf16.mxu0 0
    %722 = vmatpush1.bf16.msra.mxu0 0
    %723 = vmatprep.subr.bf16.mxu0 0
    %724 = vmatpush1.bf16.msra.mxu0 0
    %725 = vmatprep.subr.bf16.mxu0 0
    %726 = vmatpush1.bf16.msra.mxu0 0
    %727 = vmatprep.subr.bf16.mxu0 0
    %728 = vmatpush1.bf16.msra.mxu0 0
    %729 = vmatprep.subr.bf16.mxu0 0
    %730 = vmatpush1.bf16.msra.mxu0 0
    %731 = vmatprep.mubr.bf16.mxu0 0
    %732 = vmatmul.mubr.bf16.gmra.mrb[0].mxu0 %v694
    %v733 = vpop.f32.mrb[0].mxu0
    %v734 = vadd.f32 0.0, %v733
    %v735 = vpop.f32.mrb[0].mxu0
    %v736 = vpop.f32.mrb[0].mxu0
    %v737 = vpop.f32.mrb[0].mxu0
    %738 = vdwg.mxu0
    %740 = vrot.lane.b32.xlu0 %v734, 24
    %v741 = vpop.permute.xlu0 %740
    %vm743 = vcmask 261312
    %744 = vst.msk [vmem:[#allocation2] sm:$0xff] %vm743, %v741
    %v745 = vpack.c.bf16 %v213, %v213
    %v746 = vpack.c.bf16 %v209, %v209
    %748 = vrot.lane.b32.xlu0 %v746, 96
    %v749 = vpop.permute.xlu0 %748
    %v751 = vsel %vm287, %v745, 0
    %v754 = vsel %vm287, %v749, 0
    %756 = vmatprep.subr.bf16.mxu0 0
    %757 = vmatpush1.bf16.xpose.msra.mxu0 %v754
    %758 = vmatprep.subr.bf16.mxu0 0
    %759 = vmatpush1.bf16.xpose.msra.mxu0 0
    %760 = vmatprep.subr.bf16.mxu0 0
    %761 = vmatpush1.bf16.xpose.msra.mxu0 0
    %762 = vmatprep.subr.bf16.mxu0 0
    %763 = vmatpush1.bf16.xpose.msra.mxu0 0
    %764 = vmatprep.subr.bf16.mxu0 0
    %765 = vmatpush1.bf16.xpose.msra.mxu0 0
    %766 = vmatprep.subr.bf16.mxu0 0
    %767 = vmatpush1.bf16.xpose.msra.mxu0 0
    %768 = vmatprep.subr.bf16.mxu0 0
    %769 = vmatpush1.bf16.xpose.msra.mxu0 0
    %770 = vmatprep.subr.bf16.mxu0 0
    %771 = vmatpush1.bf16.xpose.msra.mxu0 0
    %772 = vmatprep.subr.bf16.mxu0 0
    %773 = vmatpush1.bf16.xpose.msra.mxu0 0
    %774 = vmatprep.subr.bf16.mxu0 0
    %775 = vmatpush1.bf16.xpose.msra.mxu0 0
    %776 = vmatprep.subr.bf16.mxu0 0
    %777 = vmatpush1.bf16.xpose.msra.mxu0 0
    %778 = vmatprep.subr.bf16.mxu0 0
    %779 = vmatpush1.bf16.xpose.msra.mxu0 0
    %780 = vmatprep.subr.bf16.mxu0 0
    %781 = vmatpush1.bf16.xpose.msra.mxu0 0
    %782 = vmatprep.subr.bf16.mxu0 0
    %783 = vmatpush1.bf16.xpose.msra.mxu0 0
    %784 = vmatprep.subr.bf16.mxu0 0
    %785 = vmatpush1.bf16.xpose.msra.mxu0 0
    %786 = vmatprep.subr.bf16.mxu0 0
    %787 = vmatpush1.bf16.xpose.msra.mxu0 0
    %788 = vmatprep.mubr.bf16.mxu0 0
    %789 = vmatmul.mubr.bf16.gmra.mrb[0].mxu0 %v751
    %v790 = vpop.f32.mrb[0].mxu0
    %v791 = vadd.f32 0.0, %v790
    %v792 = vpop.f32.mrb[0].mxu0
    %v793 = vpop.f32.mrb[0].mxu0
    %v794 = vpop.f32.mrb[0].mxu0
    %795 = vdwg.mxu0
    %v796 = vsel %vm287, %v791, -inf
    %797 = vmax.xlane.f32.xlu0 %v796
    %v798 = vpop.xlane.xlu0 %797
    %v799 = vsub.f32 %v791, %v798
    %v800 = vmul.f32 %v799, 1.442695
    %v801 = vpow.pop %v800
    %v802 = vsel %vm287, %v801, 0.0
    %803 = vadd.xlane.f32.xlu0 %v802
    %v804 = vpop.xlane.xlu0 %803
    %v805 = vrcp.pop %v804
    %v806 = vmul.f32 %v801, %v805
    %v807 = vpack.c.bf16 %v806, %v806
    %v808 = vpack.c.bf16 %v279, %v279
    %v810 = vsel %vm287, %v807, 0
    %v813 = vsel %vm350, %v808, 0
    %815 = vmatprep.subr.bf16.mxu0 0
    %816 = vmatpush1.bf16.msra.mxu0 %v813
    %817 = vmatprep.subr.bf16.mxu0 0
    %818 = vmatpush1.bf16.msra.mxu0 0
    %819 = vmatprep.subr.bf16.mxu0 0
    %820 = vmatpush1.bf16.msra.mxu0 0
    %821 = vmatprep.subr.bf16.mxu0 0
    %822 = vmatpush1.bf16.msra.mxu0 0
    %823 = vmatprep.subr.bf16.mxu0 0
    %824 = vmatpush1.bf16.msra.mxu0 0
    %825 = vmatprep.subr.bf16.mxu0 0
    %826 = vmatpush1.bf16.msra.mxu0 0
    %827 = vmatprep.subr.bf16.mxu0 0
    %828 = vmatpush1.bf16.msra.mxu0 0
    %829 = vmatprep.subr.bf16.mxu0 0
    %830 = vmatpush1.bf16.msra.mxu0 0
    %831 = vmatprep.subr.bf16.mxu0 0
    %832 = vmatpush1.bf16.msra.mxu0 0
    %833 = vmatprep.subr.bf16.mxu0 0
    %834 = vmatpush1.bf16.msra.mxu0 0
    %835 = vmatprep.subr.bf16.mxu0 0
    %836 = vmatpush1.bf16.msra.mxu0 0
    %837 = vmatprep.subr.bf16.mxu0 0
    %838 = vmatpush1.bf16.msra.mxu0 0
    %839 = vmatprep.subr.bf16.mxu0 0
    %840 = vmatpush1.bf16.msra.mxu0 0
    %841 = vmatprep.subr.bf16.mxu0 0
    %842 = vmatpush1.bf16.msra.mxu0 0
    %843 = vmatprep.subr.bf16.mxu0 0
    %844 = vmatpush1.bf16.msra.mxu0 0
    %845 = vmatprep.subr.bf16.mxu0 0
    %846 = vmatpush1.bf16.msra.mxu0 0
    %847 = vmatprep.mubr.bf16.mxu0 0
    %848 = vmatmul.mubr.bf16.gmra.mrb[0].mxu0 %v810
    %v849 = vpop.f32.mrb[0].mxu0
    %v850 = vadd.f32 0.0, %v849
    %v851 = vpop.f32.mrb[0].mxu0
    %v852 = vpop.f32.mrb[0].mxu0
    %v853 = vpop.f32.mrb[0].mxu0
    %854 = vdwg.mxu0
    %855 = vst.msk [vmem:[#allocation2 + $0x8] sm:$0xff] %vm287, %v850
    %857 = vrot.lane.b32.xlu0 %v745, 120
    %v858 = vpop.permute.xlu0 %857
    %859 = vrot.lane.b32.xlu0 %v746, 88
    %v860 = vpop.permute.xlu0 %859
    %v862 = vsel %vm287, %v858, 0
    %v865 = vsel %vm287, %v860, 0
    %867 = vmatprep.subr.bf16.mxu0 0
    %868 = vmatpush1.bf16.xpose.msra.mxu0 %v865
    %869 = vmatprep.subr.bf16.mxu0 0
    %870 = vmatpush1.bf16.xpose.msra.mxu0 0
    %871 = vmatprep.subr.bf16.mxu0 0
    %872 = vmatpush1.bf16.xpose.msra.mxu0 0
    %873 = vmatprep.subr.bf16.mxu0 0
    %874 = vmatpush1.bf16.xpose.msra.mxu0 0
    %875 = vmatprep.subr.bf16.mxu0 0
    %876 = vmatpush1.bf16.xpose.msra.mxu0 0
    %877 = vmatprep.subr.bf16.mxu0 0
    %878 = vmatpush1.bf16.xpose.msra.mxu0 0
    %879 = vmatprep.subr.bf16.mxu0 0
    %880 = vmatpush1.bf16.xpose.msra.mxu0 0
    %881 = vmatprep.subr.bf16.mxu0 0
    %882 = vmatpush1.bf16.xpose.msra.mxu0 0
    %883 = vmatprep.subr.bf16.mxu0 0
    %884 = vmatpush1.bf16.xpose.msra.mxu0 0
    %885 = vmatprep.subr.bf16.mxu0 0
    %886 = vmatpush1.bf16.xpose.msra.mxu0 0
    %887 = vmatprep.subr.bf16.mxu0 0
    %888 = vmatpush1.bf16.xpose.msra.mxu0 0
    %889 = vmatprep.subr.bf16.mxu0 0
    %890 = vmatpush1.bf16.xpose.msra.mxu0 0
    %891 = vmatprep.subr.bf16.mxu0 0
    %892 = vmatpush1.bf16.xpose.msra.mxu0 0
    %893 = vmatprep.subr.bf16.mxu0 0
    %894 = vmatpush1.bf16.xpose.msra.mxu0 0
    %895 = vmatprep.subr.bf16.mxu0 0
    %896 = vmatpush1.bf16.xpose.msra.mxu0 0
    %897 = vmatprep.subr.bf16.mxu0 0
    %898 = vmatpush1.bf16.xpose.msra.mxu0 0
    %899 = vmatprep.mubr.bf16.mxu0 0
    %900 = vmatmul.mubr.bf16.gmra.mrb[0].mxu0 %v862
    %v901 = vpop.f32.mrb[0].mxu0
    %v902 = vadd.f32 0.0, %v901
    %v903 = vpop.f32.mrb[0].mxu0
    %v904 = vpop.f32.mrb[0].mxu0
    %v905 = vpop.f32.mrb[0].mxu0
    %906 = vdwg.mxu0
    %v907 = vsel %vm287, %v902, -inf
    %908 = vmax.xlane.f32.xlu0 %v907
    %v909 = vpop.xlane.xlu0 %908
    %v910 = vsub.f32 %v902, %v909
    %v911 = vmul.f32 %v910, 1.442695
    %v912 = vpow.pop %v911
    %v913 = vsel %vm287, %v912, 0.0
    %914 = vadd.xlane.f32.xlu0 %v913
    %v915 = vpop.xlane.xlu0 %914
    %v916 = vrcp.pop %v915
    %v917 = vmul.f32 %v912, %v916
    %v918 = vpack.c.bf16 %v917, %v917
    %920 = vrot.lane.b32.xlu0 %v808, 120
    %v921 = vpop.permute.xlu0 %920
    %v923 = vsel %vm287, %v918, 0
    %v926 = vsel %vm350, %v921, 0
    %928 = vmatprep.subr.bf16.mxu0 0
    %929 = vmatpush1.bf16.msra.mxu0 %v926
    %930 = vmatprep.subr.bf16.mxu0 0
    %931 = vmatpush1.bf16.msra.mxu0 0
    %932 = vmatprep.subr.bf16.mxu0 0
    %933 = vmatpush1.bf16.msra.mxu0 0
    %934 = vmatprep.subr.bf16.mxu0 0
    %935 = vmatpush1.bf16.msra.mxu0 0
    %936 = vmatprep.subr.bf16.mxu0 0
    %937 = vmatpush1.bf16.msra.mxu0 0
    %938 = vmatprep.subr.bf16.mxu0 0
    %939 = vmatpush1.bf16.msra.mxu0 0
    %940 = vmatprep.subr.bf16.mxu0 0
    %941 = vmatpush1.bf16.msra.mxu0 0
    %942 = vmatprep.subr.bf16.mxu0 0
    %943 = vmatpush1.bf16.msra.mxu0 0
    %944 = vmatprep.subr.bf16.mxu0 0
    %945 = vmatpush1.bf16.msra.mxu0 0
    %946 = vmatprep.subr.bf16.mxu0 0
    %947 = vmatpush1.bf16.msra.mxu0 0
    %948 = vmatprep.subr.bf16.mxu0 0
    %949 = vmatpush1.bf16.msra.mxu0 0
    %950 = vmatprep.subr.bf16.mxu0 0
    %951 = vmatpush1.bf16.msra.mxu0 0
    %952 = vmatprep.subr.bf16.mxu0 0
    %953 = vmatpush1.bf16.msra.mxu0 0
    %954 = vmatprep.subr.bf16.mxu0 0
    %955 = vmatpush1.bf16.msra.mxu0 0
    %956 = vmatprep.subr.bf16.mxu0 0
    %957 = vmatpush1.bf16.msra.mxu0 0
    %958 = vmatprep.subr.bf16.mxu0 0
    %959 = vmatpush1.bf16.msra.mxu0 0
    %960 = vmatprep.mubr.bf16.mxu0 0
    %961 = vmatmul.mubr.bf16.gmra.mrb[0].mxu0 %v923
    %v962 = vpop.f32.mrb[0].mxu0
    %v963 = vadd.f32 0.0, %v962
    %v964 = vpop.f32.mrb[0].mxu0
    %v965 = vpop.f32.mrb[0].mxu0
    %v966 = vpop.f32.mrb[0].mxu0
    %967 = vdwg.mxu0
    %969 = vrot.lane.b32.xlu0 %v963, 8
    %v970 = vpop.permute.xlu0 %969
    %972 = vst.msk [vmem:[#allocation2 + $0x8] sm:$0xff] %vm511, %v970
    %973 = vrot.lane.b32.xlu0 %v745, 112
    %v974 = vpop.permute.xlu0 %973
    %975 = vrot.lane.b32.xlu0 %v746, 80
    %v976 = vpop.permute.xlu0 %975
    %v978 = vsel %vm287, %v974, 0
    %v981 = vsel %vm287, %v976, 0
    %983 = vmatprep.subr.bf16.mxu0 0
    %984 = vmatpush1.bf16.xpose.msra.mxu0 %v981
    %985 = vmatprep.subr.bf16.mxu0 0
    %986 = vmatpush1.bf16.xpose.msra.mxu0 0
    %987 = vmatprep.subr.bf16.mxu0 0
    %988 = vmatpush1.bf16.xpose.msra.mxu0 0
    %989 = vmatprep.subr.bf16.mxu0 0
    %990 = vmatpush1.bf16.xpose.msra.mxu0 0
    %991 = vmatprep.subr.bf16.mxu0 0
    %992 = vmatpush1.bf16.xpose.msra.mxu0 0
    %993 = vmatprep.subr.bf16.mxu0 0
    %994 = vmatpush1.bf16.xpose.msra.mxu0 0
    %995 = vmatprep.subr.bf16.mxu0 0
    %996 = vmatpush1.bf16.xpose.msra.mxu0 0
    %997 = vmatprep.subr.bf16.mxu0 0
    %998 = vmatpush1.bf16.xpose.msra.mxu0 0
    %999 = vmatprep.subr.bf16.mxu0 0
    %1000 = vmatpush1.bf16.xpose.msra.mxu0 0
    %1001 = vmatprep.subr.bf16.mxu0 0
    %1002 = vmatpush1.bf16.xpose.msra.mxu0 0
    %1003 = vmatprep.subr.bf16.mxu0 0
    %1004 = vmatpush1.bf16.xpose.msra.mxu0 0
    %1005 = vmatprep.subr.bf16.mxu0 0
    %1006 = vmatpush1.bf16.xpose.msra.mxu0 0
    %1007 = vmatprep.subr.bf16.mxu0 0
    %1008 = vmatpush1.bf16.xpose.msra.mxu0 0
    %1009 = vmatprep.subr.bf16.mxu0 0
    %1010 = vmatpush1.bf16.xpose.msra.mxu0 0
    %1011 = vmatprep.subr.bf16.mxu0 0
    %1012 = vmatpush1.bf16.xpose.msra.mxu0 0
    %1013 = vmatprep.subr.bf16.mxu0 0
    %1014 = vmatpush1.bf16.xpose.msra.mxu0 0
    %1015 = vmatprep.mubr.bf16.mxu0 0
    %1016 = vmatmul.mubr.bf16.gmra.mrb[0].mxu0 %v978
    %v1017 = vpop.f32.mrb[0].mxu0
    %v1018 = vadd.f32 0.0, %v1017
    %v1019 = vpop.f32.mrb[0].mxu0
    %v1020 = vpop.f32.mrb[0].mxu0
    %v1021 = vpop.f32.mrb[0].mxu0
    %1022 = vdwg.mxu0
    %v1023 = vsel %vm287, %v1018, -inf
    %1024 = vmax.xlane.f32.xlu0 %v1023
    %v1025 = vpop.xlane.xlu0 %1024
    %v1026 = vsub.f32 %v1018, %v1025
    %v1027 = vmul.f32 %v1026, 1.442695
    %v1028 = vpow.pop %v1027
    %v1029 = vsel %vm287, %v1028, 0.0
    %1030 = vadd.xlane.f32.xlu0 %v1029
    %v1031 = vpop.xlane.xlu0 %1030
    %v1032 = vrcp.pop %v1031
    %v1033 = vmul.f32 %v1028, %v1032
    %v1034 = vpack.c.bf16 %v1033, %v1033
    %1035 = vrot.lane.b32.xlu0 %v808, 112
    %v1036 = vpop.permute.xlu0 %1035
    %v1038 = vsel %vm287, %v1034, 0
    %v1041 = vsel %vm350, %v1036, 0
    %1043 = vmatprep.subr.bf16.mxu0 0
    %1044 = vmatpush1.bf16.msra.mxu0 %v1041
    %1045 = vmatprep.subr.bf16.mxu0 0
    %1046 = vmatpush1.bf16.msra.mxu0 0
    %1047 = vmatprep.subr.bf16.mxu0 0
    %1048 = vmatpush1.bf16.msra.mxu0 0
    %1049 = vmatprep.subr.bf16.mxu0 0
    %1050 = vmatpush1.bf16.msra.mxu0 0
    %1051 = vmatprep.subr.bf16.mxu0 0
    %1052 = vmatpush1.bf16.msra.mxu0 0
    %1053 = vmatprep.subr.bf16.mxu0 0
    %1054 = vmatpush1.bf16.msra.mxu0 0
    %1055 = vmatprep.subr.bf16.mxu0 0
    %1056 = vmatpush1.bf16.msra.mxu0 0
    %1057 = vmatprep.subr.bf16.mxu0 0
    %1058 = vmatpush1.bf16.msra.mxu0 0
    %1059 = vmatprep.subr.bf16.mxu0 0
    %1060 = vmatpush1.bf16.msra.mxu0 0
    %1061 = vmatprep.subr.bf16.mxu0 0
    %1062 = vmatpush1.bf16.msra.mxu0 0
    %1063 = vmatprep.subr.bf16.mxu0 0
    %1064 = vmatpush1.bf16.msra.mxu0 0
    %1065 = vmatprep.subr.bf16.mxu0 0
    %1066 = vmatpush1.bf16.msra.mxu0 0
    %1067 = vmatprep.subr.bf16.mxu0 0
    %1068 = vmatpush1.bf16.msra.mxu0 0
    %1069 = vmatprep.subr.bf16.mxu0 0
    %1070 = vmatpush1.bf16.msra.mxu0 0
    %1071 = vmatprep.subr.bf16.mxu0 0
    %1072 = vmatpush1.bf16.msra.mxu0 0
    %1073 = vmatprep.subr.bf16.mxu0 0
    %1074 = vmatpush1.bf16.msra.mxu0 0
    %1075 = vmatprep.mubr.bf16.mxu0 0
    %1076 = vmatmul.mubr.bf16.gmra.mrb[0].mxu0 %v1038
    %v1077 = vpop.f32.mrb[0].mxu0
    %v1078 = vadd.f32 0.0, %v1077
    %v1079 = vpop.f32.mrb[0].mxu0
    %v1080 = vpop.f32.mrb[0].mxu0
    %v1081 = vpop.f32.mrb[0].mxu0
    %1082 = vdwg.mxu0
    %1084 = vrot.lane.b32.xlu0 %v1078, 16
    %v1085 = vpop.permute.xlu0 %1084
    %1087 = vst.msk [vmem:[#allocation2 + $0x8] sm:$0xff] %vm627, %v1085
    %1088 = vrot.lane.b32.xlu0 %v745, 104
    %v1089 = vpop.permute.xlu0 %1088
    %1090 = vrot.lane.b32.xlu0 %v746, 72
    %v1091 = vpop.permute.xlu0 %1090
    %v1093 = vsel %vm287, %v1089, 0
    %v1096 = vsel %vm287, %v1091, 0
    %1098 = vmatprep.subr.bf16.mxu0 0
    %1099 = vmatpush1.bf16.xpose.msra.mxu0 %v1096
    %1100 = vmatprep.subr.bf16.mxu0 0
    %1101 = vmatpush1.bf16.xpose.msra.mxu0 0
    %1102 = vmatprep.subr.bf16.mxu0 0
    %1103 = vmatpush1.bf16.xpose.msra.mxu0 0
    %1104 = vmatprep.subr.bf16.mxu0 0
    %1105 = vmatpush1.bf16.xpose.msra.mxu0 0
    %1106 = vmatprep.subr.bf16.mxu0 0
    %1107 = vmatpush1.bf16.xpose.msra.mxu0 0
    %1108 = vmatprep.subr.bf16.mxu0 0
    %1109 = vmatpush1.bf16.xpose.msra.mxu0 0
    %1110 = vmatprep.subr.bf16.mxu0 0
    %1111 = vmatpush1.bf16.xpose.msra.mxu0 0
    %1112 = vmatprep.subr.bf16.mxu0 0
    %1113 = vmatpush1.bf16.xpose.msra.mxu0 0
    %1114 = vmatprep.subr.bf16.mxu0 0
    %1115 = vmatpush1.bf16.xpose.msra.mxu0 0
    %1116 = vmatprep.subr.bf16.mxu0 0
    %1117 = vmatpush1.bf16.xpose.msra.mxu0 0
    %1118 = vmatprep.subr.bf16.mxu0 0
    %1119 = vmatpush1.bf16.xpose.msra.mxu0 0
    %1120 = vmatprep.subr.bf16.mxu0 0
    %1121 = vmatpush1.bf16.xpose.msra.mxu0 0
    %1122 = vmatprep.subr.bf16.mxu0 0
    %1123 = vmatpush1.bf16.xpose.msra.mxu0 0
    %1124 = vmatprep.subr.bf16.mxu0 0
    %1125 = vmatpush1.bf16.xpose.msra.mxu0 0
    %1126 = vmatprep.subr.bf16.mxu0 0
    %1127 = vmatpush1.bf16.xpose.msra.mxu0 0
    %1128 = vmatprep.subr.bf16.mxu0 0
    %1129 = vmatpush1.bf16.xpose.msra.mxu0 0
    %1130 = vmatprep.mubr.bf16.mxu0 0
    %1131 = vmatmul.mubr.bf16.gmra.mrb[0].mxu0 %v1093
    %v1132 = vpop.f32.mrb[0].mxu0
    %v1133 = vadd.f32 0.0, %v1132
    %v1134 = vpop.f32.mrb[0].mxu0
    %v1135 = vpop.f32.mrb[0].mxu0
    %v1136 = vpop.f32.mrb[0].mxu0
    %1137 = vdwg.mxu0
    %v1138 = vsel %vm287, %v1133, -inf
    %1139 = vmax.xlane.f32.xlu0 %v1138
    %v1140 = vpop.xlane.xlu0 %1139
    %v1141 = vsub.f32 %v1133, %v1140
    %v1142 = vmul.f32 %v1141, 1.442695
    %v1143 = vpow.pop %v1142
    %v1144 = vsel %vm287, %v1143, 0.0
    %1145 = vadd.xlane.f32.xlu0 %v1144
    %v1146 = vpop.xlane.xlu0 %1145
    %v1147 = vrcp.pop %v1146
    %v1148 = vmul.f32 %v1143, %v1147
    %v1149 = vpack.c.bf16 %v1148, %v1148
    %1150 = vrot.lane.b32.xlu0 %v808, 104
    %v1151 = vpop.permute.xlu0 %1150
    %v1153 = vsel %vm287, %v1149, 0
    %v1156 = vsel %vm350, %v1151, 0
    %1158 = vmatprep.subr.bf16.mxu0 0
    %1159 = vmatpush1.bf16.msra.mxu0 %v1156
    %1160 = vmatprep.subr.bf16.mxu0 0
    %1161 = vmatpush1.bf16.msra.mxu0 0
    %1162 = vmatprep.subr.bf16.mxu0 0
    %1163 = vmatpush1.bf16.msra.mxu0 0
    %1164 = vmatprep.subr.bf16.mxu0 0
    %1165 = vmatpush1.bf16.msra.mxu0 0
    %1166 = vmatprep.subr.bf16.mxu0 0
    %1167 = vmatpush1.bf16.msra.mxu0 0
    %1168 = vmatprep.subr.bf16.mxu0 0
    %1169 = vmatpush1.bf16.msra.mxu0 0
    %1170 = vmatprep.subr.bf16.mxu0 0
    %1171 = vmatpush1.bf16.msra.mxu0 0
    %1172 = vmatprep.subr.bf16.mxu0 0
    %1173 = vmatpush1.bf16.msra.mxu0 0
    %1174 = vmatprep.subr.bf16.mxu0 0
    %1175 = vmatpush1.bf16.msra.mxu0 0
    %1176 = vmatprep.subr.bf16.mxu0 0
    %1177 = vmatpush1.bf16.msra.mxu0 0
    %1178 = vmatprep.subr.bf16.mxu0 0
    %1179 = vmatpush1.bf16.msra.mxu0 0
    %1180 = vmatprep.subr.bf16.mxu0 0
    %1181 = vmatpush1.bf16.msra.mxu0 0
    %1182 = vmatprep.subr.bf16.mxu0 0
    %1183 = vmatpush1.bf16.msra.mxu0 0
    %1184 = vmatprep.subr.bf16.mxu0 0
    %1185 = vmatpush1.bf16.msra.mxu0 0
    %1186 = vmatprep.subr.bf16.mxu0 0
    %1187 = vmatpush1.bf16.msra.mxu0 0
    %1188 = vmatprep.subr.bf16.mxu0 0
    %1189 = vmatpush1.bf16.msra.mxu0 0
    %1190 = vmatprep.mubr.bf16.mxu0 0
    %1191 = vmatmul.mubr.bf16.gmra.mrb[0].mxu0 %v1153
    %v1192 = vpop.f32.mrb[0].mxu0
    %v1193 = vadd.f32 0.0, %v1192
    %v1194 = vpop.f32.mrb[0].mxu0
    %v1195 = vpop.f32.mrb[0].mxu0
    %v1196 = vpop.f32.mrb[0].mxu0
    %1197 = vdwg.mxu0
    %1199 = vrot.lane.b32.xlu0 %v1193, 24
    %v1200 = vpop.permute.xlu0 %1199
    %1202 = vst.msk [vmem:[#allocation2 + $0x8] sm:$0xff] %vm743, %v1200
    %v1203 = vld [vmem:[#allocation2] sm:$0xff]
    %v1204 = vld [vmem:[#allocation2 + $0x8] sm:$0xff]
    %v1205 = vpack.c.bf16 %v1204, %v1203
    %v1206 = vld [vmem:[#allocation9] sm:$0xf]
    %v1207 = vld [vmem:[#allocation9 + $0x4] sm:$0xf]
    %v1208 = vld [vmem:[#allocation9 + $0x8] sm:$0xf]
    %v1209 = vld [vmem:[#allocation9 + $0xc] sm:$0xf]
    %v1210 = vld [vmem:[%s9] sm:$0x1]
    %v1212 = vlaneseq
    %v1213 = vshrl.u32 %v1212, 7
    %v1214 = vsub.s32 0, %v1213
    %v1215 = vrot.slane %v1210, %v1214
    %v1221 = vunpack.c.l.b16 %v1206
    %v1222 = vunpack.c.l.b16 %v1207
    %v1223 = vunpack.c.l.b16 %v1208
    %v1224 = vunpack.c.l.b16 %v1209
    %v1225 = vpack.c.b16 %v1222, %v1221
    %v1226 = vpack.c.b16 %v1224, %v1223
    %v1230 = vsel %vm96, %v1205, 0
    %1232 = vmatprep.subr.bf16.mxu0 0
    %1233 = vmatpush1.bf16.msra.mxu0 %v1225
    %1234 = vmatprep.subr.bf16.mxu0 0
    %1235 = vmatpush1.bf16.msra.mxu0 %v1226
    %1236 = vmatprep.subr.bf16.mxu0 0
    %1237 = vmatpush1.bf16.msra.mxu0 0
    %1238 = vmatprep.subr.bf16.mxu0 0
    %1239 = vmatpush1.bf16.msra.mxu0 0
    %1240 = vmatprep.subr.bf16.mxu0 0
    %1241 = vmatpush1.bf16.msra.mxu0 0
    %1242 = vmatprep.subr.bf16.mxu0 0
    %1243 = vmatpush1.bf16.msra.mxu0 0
    %1244 = vmatprep.subr.bf16.mxu0 0
    %1245 = vmatpush1.bf16.msra.mxu0 0
    %1246 = vmatprep.subr.bf16.mxu0 0
    %1247 = vmatpush1.bf16.msra.mxu0 0
    %1248 = vmatprep.subr.bf16.mxu0 0
    %1249 = vmatpush1.bf16.msra.mxu0 0
    %1250 = vmatprep.subr.bf16.mxu0 0
    %1251 = vmatpush1.bf16.msra.mxu0 0
    %1252 = vmatprep.subr.bf16.mxu0 0
    %1253 = vmatpush1.bf16.msra.mxu0 0
    %1254 = vmatprep.subr.bf16.mxu0 0
    %1255 = vmatpush1.bf16.msra.mxu0 0
    %1256 = vmatprep.subr.bf16.mxu0 0
    %1257 = vmatpush1.bf16.msra.mxu0 0
    %1258 = vmatprep.subr.bf16.mxu0 0
    %1259 = vmatpush1.bf16.msra.mxu0 0
    %1260 = vmatprep.subr.bf16.mxu0 0
    %1261 = vmatpush1.bf16.msra.mxu0 0
    %1262 = vmatprep.subr.bf16.mxu0 0
    %1263 = vmatpush1.bf16.msra.mxu0 0
    %1264 = vmatprep.mubr.bf16.mxu0 0
    %1265 = vmatmul.mubr.bf16.gmra.mrb[0].mxu0 %v1230
    %v1266 = vpop.f32.mrb[0].mxu0
    %v1267 = vadd.f32 %v1215, %v1266
    %v1268 = vpop.f32.mrb[0].mxu0
    %v1269 = vpop.f32.mrb[0].mxu0
    %v1270 = vadd.f32 %v1215, %v1269
    %v1271 = vpop.f32.mrb[0].mxu0
    %1272 = vdwg.mxu0
    %v1273 = vadd.f32 %v1267, %v92
    %v1274 = vadd.f32 %v1270, %v93
    %1275 = vst.msk [vmem:[#allocation11] sm:$0xff] %vm96, %v1273
    %1276 = vst.msk [vmem:[#allocation11 + $0x8] sm:$0xff] %vm96, %v1274
    // Predicated region
    $region58: #{tpu_custom_call.1} parent=1 // pred_check
      _
    $region59: #{tpu_custom_call.1} parent=1 // pred_check_branch
      %1278 = sbr.rel (0) target = $region61
    $region60: #{tpu_custom_call.1} parent=1 // pred_region
      %s1280 = ssub.s32 256, 256
      %1281 = vsyncadd [#allocation5], %s1280
      %s1282 = sshll.u32 [#allocation11], 4
      %s1283 = int_to_ptr.vmem [resolvable:$true] %s1282
      %1288 = dma.vmem_to_hbm [thread:$0]  %s1283, 256, %s10, [#allocation5], 128, 128, 8
    $region61: #{tpu_custom_call.1} parent=1 // pred_fallthru
      _
    // Predicated region
    $region62: #{tpu_custom_call.1} parent=1 // pred_check
      _
    $region63: #{tpu_custom_call.1} parent=1 // pred_check_branch
      %1290 = sbr.rel (0) target = $region65
    $region64: #{tpu_custom_call.1} parent=1 // pred_region
      %1291 = dma.done [#allocation5], 256
    $region65: #{tpu_custom_call.1} parent=1 // pred_fallthru
      _
    %1292 = vsyncpa [#allocation4], 1
    %1293 = vsyncpa [#allocation7], 1
    %1294 = vsyncpa [#allocation10], 1
    %1295 = vsyncpa [#allocation5], 1

</llo_original>
